<compile_context>
chip_gen: v5e
topology: v5e:2x2
jax: 0.10.0
libtpu: 0.0.40
codegen_flags: <defaults>
</compile_context>

<pallas_src>
import functools
import math

import jax
import jax.numpy as jnp
from jax import lax
from jax.experimental import pallas as pl
from jax.experimental.pallas import tpu as pltpu

_MASK_FILL = -1e30  # large negative instead of -inf: exact for any row with at
                    # least one valid edge, and NaN-free for padded rows.


def _round_up(x, m):
    return (x + m - 1) // m * m


def _pad2d(x, rows, cols):
    r, c = x.shape
    return jnp.pad(x, ((0, rows - r), (0, cols - c)))


def _leaky_relu(x, slope=0.01):
    return jnp.where(x >= 0, x, slope * x)


def _mhea_kernel(scale,
                 qin_ref, kin_ref, vin_ref, mask_ref,
                 wq_ref, bq_ref, wk_ref, bk_ref, wv_ref, bv_ref,
                 wg_ref, bg_ref,
                 out_ref):
    h = pl.program_id(1)

    qin = qin_ref[...]                     # (tile_nv, Dq)   -- also the gate input
    kin = kin_ref[...]                     # (Ne,      Dq)
    vin = vin_ref[...]                     # (Ne,      Dv)

    # Per-head Q/K/V projections (MXU) + LeakyReLU (VPU).
    q = _leaky_relu(
        jnp.dot(qin, wq_ref[...], preferred_element_type=jnp.float32) + bq_ref[...])
    k = _leaky_relu(
        jnp.dot(kin, wk_ref[...], preferred_element_type=jnp.float32) + bk_ref[...])
    v = _leaky_relu(
        jnp.dot(vin, wv_ref[...], preferred_element_type=jnp.float32) + bv_ref[...])

    # Scaled dot-product attention over edges; contract the d_attn axis directly
    # (no explicit transpose through the XLU).
    scores = lax.dot_general(q, k, (((1,), (1,)), ((), ())),
                             preferred_element_type=jnp.float32) * scale
    scores = jnp.where(mask_ref[...] > 0, scores, _MASK_FILL)
    m = jnp.max(scores, axis=1, keepdims=True)
    p = jnp.exp(scores - m)
    attn = p / jnp.sum(p, axis=1, keepdims=True)

    head = jnp.dot(attn, v, preferred_element_type=jnp.float32)   # (tile_nv, Da)

    # Per-head scalar gate per node: LeakyReLU(qin . wg_h + bg_h).
    gate = _leaky_relu(
        jnp.sum(qin * wg_ref[...], axis=1, keepdims=True) + bg_ref[...])  # (tile_nv, 1)

    # Head axis is the innermost (reduction) grid axis: the output block stays
    # resident; zero it on the first head and accumulate the gated heads.
    @pl.when(h == 0)
    def _():
        out_ref[...] = jnp.zeros_like(out_ref)

    out_ref[...] += head * gate


def multihead_edge_attention(nodes, edges, edge_index, u, batch, params,
                             *, nodewise=True, row_tile=256):
    """Pallas forward pass of luz.MultiheadEdgeAttention.

    params (stacked per head, weights stored input-major, i.e. torch weight.T):
      wq, wk : (H, d_v+d_u, d_attn)   bq, bk : (H, d_attn)
      wv     : (H, d_e+d_u, d_attn)   bv     : (H, d_attn)
      wg     : (H, d_v+d_u)           bg     : (H,)
    """
    n_v, d_v = nodes.shape
    n_e, d_e = edges.shape
    d_u = u.shape[1]
    num_heads, _, d_attn = params["wq"].shape

    s = edge_index[0]
    r = edge_index[1]

    # ---- index plumbing / mask construction (wrapper side) -----------------
    q_in = jnp.concatenate([nodes, u[batch]], axis=1)          # (N_v, Dq)
    k_in = jnp.concatenate([nodes[s], u[batch[s]]], axis=1)    # (N_e, Dq)
    v_in = jnp.concatenate([edges, u[batch[s]]], axis=1)       # (N_e, Dv)

    if nodewise:
        # TODO(synk): assumes luz.nodewise_mask lets node i attend to edge e iff
        # i is the receiver of e (edge_index[1][e] == i).
        mask = (jnp.arange(n_v)[:, None] == r[None, :]).astype(jnp.float32)
    else:
        mask = (batch[:, None] == batch[s][None, :]).astype(jnp.float32)

    d_q = d_v + d_u
    d_ev = d_e + d_u

    # ---- pad to TPU-friendly shapes (numerically exact) --------------------
    nvp8 = _round_up(n_v, 8)
    tile_nv = min(row_tile, nvp8)
    n_v_p = _round_up(n_v, tile_nv)
    n_e_p = _round_up(n_e, 128)
    d_q_p = _round_up(d_q, 128)
    d_ev_p = _round_up(d_ev, 128)
    d_a_p = _round_up(d_attn, 128)

    f32 = jnp.float32
    q_in_p = _pad2d(q_in.astype(f32), n_v_p, d_q_p)
    k_in_p = _pad2d(k_in.astype(f32), n_e_p, d_q_p)
    v_in_p = _pad2d(v_in.astype(f32), n_e_p, d_ev_p)
    mask_p = _pad2d(mask, n_v_p, n_e_p)

    def pad_w(w, din_p, dout_p):
        _, din, dout = w.shape
        return jnp.pad(w.astype(f32), ((0, 0), (0, din_p - din), (0, dout_p - dout)))

    def pad_b(b, dout_p):
        _, dout = b.shape
        return jnp.pad(b.astype(f32), ((0, 0), (0, dout_p - dout)))[:, None, :]

    wq_p = pad_w(params["wq"], d_q_p, d_a_p)
    wk_p = pad_w(params["wk"], d_q_p, d_a_p)
    wv_p = pad_w(params["wv"], d_ev_p, d_a_p)
    bq_p = pad_b(params["bq"], d_a_p)
    bk_p = pad_b(params["bk"], d_a_p)
    bv_p = pad_b(params["bv"], d_a_p)
    wg_p = jnp.pad(params["wg"].astype(f32), ((0, 0), (0, d_q_p - d_q)))[:, None, :]
    bg_p = params["bg"].astype(f32).reshape(num_heads, 1, 1)

    scale = 1.0 / math.sqrt(d_attn)
    n_row_tiles = n_v_p // tile_nv
    grid = (n_row_tiles, num_heads)

    flops = int(2 * num_heads * (
        n_v_p * d_q_p * d_a_p            # q proj
        + n_e_p * d_q_p * d_a_p          # k proj
        + n_e_p * d_ev_p * d_a_p         # v proj
        + 2 * n_v_p * n_e_p * d_a_p      # scores + attn @ v
        + n_v_p * d_q_p))                # gate
    bytes_accessed = int(4 * (
        q_in_p.size + k_in_p.size + v_in_p.size + mask_p.size
        + wq_p.size + wk_p.size + wv_p.size + wg_p.size
        + bq_p.size + bk_p.size + bv_p.size + bg_p.size
        + n_v_p * d_a_p))

    out_p = pl.pallas_call(
        functools.partial(_mhea_kernel, scale),
        out_shape=jax.ShapeDtypeStruct((n_v_p, d_a_p), jnp.float32),
        grid=grid,
        in_specs=[
            pl.BlockSpec((tile_nv, d_q_p), lambda i, h: (i, 0)),          # q_in / gate in
            pl.BlockSpec((n_e_p, d_q_p), lambda i, h: (0, 0)),            # k_in
            pl.BlockSpec((n_e_p, d_ev_p), lambda i, h: (0, 0)),           # v_in
            pl.BlockSpec((tile_nv, n_e_p), lambda i, h: (i, 0)),          # mask
            pl.BlockSpec((None, d_q_p, d_a_p), lambda i, h: (h, 0, 0)),   # wq
            pl.BlockSpec((None, 1, d_a_p), lambda i, h: (h, 0, 0)),       # bq
            pl.BlockSpec((None, d_q_p, d_a_p), lambda i, h: (h, 0, 0)),   # wk
            pl.BlockSpec((None, 1, d_a_p), lambda i, h: (h, 0, 0)),       # bk
            pl.BlockSpec((None, d_ev_p, d_a_p), lambda i, h: (h, 0, 0)),  # wv
            pl.BlockSpec((None, 1, d_a_p), lambda i, h: (h, 0, 0)),       # bv
            pl.BlockSpec((None, 1, d_q_p), lambda i, h: (h, 0, 0)),       # wg
            pl.BlockSpec((None, 1, 1), lambda i, h: (h, 0, 0)),           # bg
        ],
        out_specs=pl.BlockSpec((tile_nv, d_a_p), lambda i, h: (i, 0)),
        compiler_params=pltpu.CompilerParams(
            dimension_semantics=("parallel", "arbitrary")),
        cost_estimate=pl.CostEstimate(
            flops=flops,
            transcendentals=int(num_heads * n_v_p * n_e_p),
            bytes_accessed=bytes_accessed),
    )(q_in_p, k_in_p, v_in_p, mask_p,
      wq_p, bq_p, wk_p, bk_p, wv_p, bv_p, wg_p, bg_p)

    return out_p[:n_v, :d_attn]


if __name__ == "__main__":
    # Same f32 matmul algorithm inside and outside the kernel for a tight check.
    jax.config.update("jax_default_matmul_precision", "highest")

    key = jax.random.PRNGKey(0)
    keys = jax.random.split(key, 16)

    # Small problem consistent with the module.
    num_heads = 2
    d_v, d_e, d_u, d_attn = 8, 6, 4, 32
    n_graphs, nodes_per_graph = 2, 8
    n_v = n_graphs * nodes_per_graph

    nodes = jax.random.normal(keys[0], (n_v, d_v), dtype=jnp.float32)
    u = jax.random.normal(keys[1], (n_graphs, d_u), dtype=jnp.float32)
    batch = jnp.repeat(jnp.arange(n_graphs), nodes_per_graph)

    # Edges: one intra-graph ring (every node receives >= 1 edge) + random
    # intra-graph extras.
    ring_r = jnp.arange(n_v)
    ring_s = (ring_r + 1) % nodes_per_graph + (ring_r // nodes_per_graph) * nodes_per_graph
    n_extra = 24
    g = jax.random.randint(keys[2], (n_extra,), 0, n_graphs)
    extra_s = jax.random.randint(keys[3], (n_extra,), 0, nodes_per_graph) + g * nodes_per_graph
    extra_r = jax.random.randint(keys[4], (n_extra,), 0, nodes_per_graph) + g * nodes_per_graph
    s = jnp.concatenate([ring_s, extra_s])
    r = jnp.concatenate([ring_r, extra_r])
    edge_index = jnp.stack([s, r])
    n_e = edge_index.shape[1]
    edges = jax.random.normal(keys[5], (n_e, d_e), dtype=jnp.float32)

    d_q, d_ev = d_v + d_u, d_e + d_u
    w = 0.3
    params = {
        "wq": w * jax.random.normal(keys[6], (num_heads, d_q, d_attn), jnp.float32),
        "bq": w * jax.random.normal(keys[7], (num_heads, d_attn), jnp.float32),
        "wk": w * jax.random.normal(keys[8], (num_heads, d_q, d_attn), jnp.float32),
        "bk": w * jax.random.normal(keys[9], (num_heads, d_attn), jnp.float32),
        "wv": w * jax.random.normal(keys[10], (num_heads, d_ev, d_attn), jnp.float32),
        "bv": w * jax.random.normal(keys[11], (num_heads, d_attn), jnp.float32),
        "wg": w * jax.random.normal(keys[12], (num_heads, d_q), jnp.float32),
        "bg": w * jax.random.normal(keys[13], (num_heads,), jnp.float32),
    }

    out = multihead_edge_attention(nodes, edges, edge_index, u, batch, params,
                                   nodewise=True)
    out = jax.block_until_ready(out)

    # Pure-JAX reference mirroring the torch module's math.
    def reference():
        x = jnp.concatenate([nodes, u[batch]], axis=1)
        k_in = jnp.concatenate([nodes[s], u[batch[s]]], axis=1)
        v_in = jnp.concatenate([edges, u[batch[s]]], axis=1)
        mask = (jnp.arange(n_v)[:, None] == r[None, :]).astype(jnp.float32)
        heads, gates = [], []
        for h in range(num_heads):
            q = _leaky_relu(x @ params["wq"][h] + params["bq"][h])
            k = _leaky_relu(k_in @ params["wk"][h] + params["bk"][h])
            v = _leaky_relu(v_in @ params["wv"][h] + params["bv"][h])
            sc = (q @ k.T) / jnp.sqrt(jnp.float32(d_attn))
            sc = jnp.where(mask > 0, sc, _MASK_FILL)
            sc = sc - jnp.max(sc, axis=1, keepdims=True)
            p = jnp.exp(sc)
            attn = p / jnp.sum(p, axis=1, keepdims=True)
            heads.append(attn @ v)
            gates.append(_leaky_relu(x @ params["wg"][h] + params["bg"][h]))
        return jnp.einsum("hnk,hn->nk", jnp.stack(heads), jnp.stack(gates))

    ref = jax.block_until_ready(reference())

    assert out.shape == (n_v, d_attn), out.shape
    err = float(jnp.max(jnp.abs(out - ref)))
    assert err < 1e-3, f"max abs err {err}"

    print("KERNEL_OK")
</pallas_src>

<mosaic_0001>
module attributes {stable_mosaic.version = 11 : i64} {
  func.func @_mhea_kernel(%arg0: i32, %arg1: i32, %arg2: memref<16x128xf32, #tpu.memory_space<vmem>>, %arg3: memref<128x128xf32, #tpu.memory_space<vmem>>, %arg4: memref<128x128xf32, #tpu.memory_space<vmem>>, %arg5: memref<16x128xf32, #tpu.memory_space<vmem>>, %arg6: memref<1x128x128xf32, #tpu.memory_space<vmem>>, %arg7: memref<1x1x128xf32, #tpu.memory_space<vmem>>, %arg8: memref<1x128x128xf32, #tpu.memory_space<vmem>>, %arg9: memref<1x1x128xf32, #tpu.memory_space<vmem>>, %arg10: memref<1x128x128xf32, #tpu.memory_space<vmem>>, %arg11: memref<1x1x128xf32, #tpu.memory_space<vmem>>, %arg12: memref<1x1x128xf32, #tpu.memory_space<vmem>>, %arg13: memref<1x1x1xf32, #tpu.memory_space<vmem>>, %arg14: memref<16x128xf32, #tpu.memory_space<vmem>>) attributes {dimension_semantics = [#tpu.dimension_semantics<parallel>, #tpu.dimension_semantics<arbitrary>], iteration_bounds = array<i64: 1, 2>, scalar_prefetch = 0 : i64, scratch_operands = 0 : i64, tpu.core_type = #tpu.core_type<tc>, window_params = [{transform_indices = @transform_0, window_bounds = array<i64: 16, 128>}, {pipeline_mode = #tpu.pipeline_mode<synchronous>, transform_indices = @transform_1, window_bounds = array<i64: 128, 128>}, {pipeline_mode = #tpu.pipeline_mode<synchronous>, transform_indices = @transform_2, window_bounds = array<i64: 128, 128>}, {transform_indices = @transform_3, window_bounds = array<i64: 16, 128>}, {transform_indices = @transform_4, window_bounds = array<i64: 1, 128, 128>}, {transform_indices = @transform_5, window_bounds = array<i64: 1, 1, 128>}, {transform_indices = @transform_6, window_bounds = array<i64: 1, 128, 128>}, {transform_indices = @transform_7, window_bounds = array<i64: 1, 1, 128>}, {transform_indices = @transform_8, window_bounds = array<i64: 1, 128, 128>}, {transform_indices = @transform_9, window_bounds = array<i64: 1, 1, 128>}, {transform_indices = @transform_10, window_bounds = array<i64: 1, 1, 128>}, {transform_indices = @transform_11, window_bounds = array<i64: 1, 1, 1>}, {transform_indices = @transform_12, window_bounds = array<i64: 16, 128>}]} {
    %c0 = arith.constant 0 : index
    %c0_0 = arith.constant 0 : index
    %0 = vector.load %arg2[%c0, %c0_0] : memref<16x128xf32, #tpu.memory_space<vmem>>, vector<16x128xf32>
    %c0_1 = arith.constant 0 : index
    %c0_2 = arith.constant 0 : index
    %1 = vector.load %arg3[%c0_1, %c0_2] : memref<128x128xf32, #tpu.memory_space<vmem>>, vector<128x128xf32>
    %c0_3 = arith.constant 0 : index
    %c0_4 = arith.constant 0 : index
    %2 = vector.load %arg4[%c0_3, %c0_4] : memref<128x128xf32, #tpu.memory_space<vmem>>, vector<128x128xf32>
    %c0_5 = arith.constant 0 : index
    %c0_6 = arith.constant 0 : index
    %c0_7 = arith.constant 0 : index
    %3 = vector.load %arg6[%c0_5, %c0_6, %c0_7] : memref<1x128x128xf32, #tpu.memory_space<vmem>>, vector<1x128x128xf32>
    %4 = vector.shape_cast %3 : vector<1x128x128xf32> to vector<128x128xf32>
    %cst = arith.constant dense<0.000000e+00> : vector<16x128xf32>
    %5 = tpu.matmul %0, %4, %cst {dimension_numbers = #tpu.dot_dimension_numbers<[1], [0], [0], [1], [0, 0, 1, 1], [], []>, precision = #tpu.contract_precision<fp32>} : vector<16x128xf32>, vector<128x128xf32>, vector<16x128xf32> -> vector<16x128xf32>
    %c0_8 = arith.constant 0 : index
    %c0_9 = arith.constant 0 : index
    %c0_10 = arith.constant 0 : index
    %6 = vector.load %arg7[%c0_8, %c0_9, %c0_10] : memref<1x1x128xf32, #tpu.memory_space<vmem>>, vector<1x1x128xf32>
    %7 = vector.shape_cast %6 : vector<1x1x128xf32> to vector<1x128xf32>
    %8 = vector.broadcast %7 : vector<1x128xf32> to vector<16x128xf32>
    %9 = arith.addf %5, %8 : vector<16x128xf32>
    %cst_11 = arith.constant 0.000000e+00 : f32
    %10 = vector.broadcast %cst_11 : f32 to vector<16x128xf32>
    %11 = arith.cmpf oge, %9, %10 : vector<16x128xf32>
    %cst_12 = arith.constant 0.00999999977 : f32
    %12 = vector.broadcast %cst_12 : f32 to vector<16x128xf32>
    %13 = arith.mulf %12, %9 : vector<16x128xf32>
    %14 = arith.select %11, %9, %13 : vector<16x128xi1>, vector<16x128xf32>
    %c0_13 = arith.constant 0 : index
    %c0_14 = arith.constant 0 : index
    %c0_15 = arith.constant 0 : index
    %15 = vector.load %arg8[%c0_13, %c0_14, %c0_15] : memref<1x128x128xf32, #tpu.memory_space<vmem>>, vector<1x128x128xf32>
    %16 = vector.shape_cast %15 : vector<1x128x128xf32> to vector<128x128xf32>
    %cst_16 = arith.constant dense<0.000000e+00> : vector<128x128xf32>
    %17 = tpu.matmul %1, %16, %cst_16 {dimension_numbers = #tpu.dot_dimension_numbers<[1], [0], [0], [1], [0, 0, 1, 1], [], []>, precision = #tpu.contract_precision<fp32>} : vector<128x128xf32>, vector<128x128xf32>, vector<128x128xf32> -> vector<128x128xf32>
    %c0_17 = arith.constant 0 : index
    %c0_18 = arith.constant 0 : index
    %c0_19 = arith.constant 0 : index
    %18 = vector.load %arg9[%c0_17, %c0_18, %c0_19] : memref<1x1x128xf32, #tpu.memory_space<vmem>>, vector<1x1x128xf32>
    %19 = vector.shape_cast %18 : vector<1x1x128xf32> to vector<1x128xf32>
    %20 = vector.broadcast %19 : vector<1x128xf32> to vector<128x128xf32>
    %21 = arith.addf %17, %20 : vector<128x128xf32>
    %cst_20 = arith.constant 0.000000e+00 : f32
    %22 = vector.broadcast %cst_20 : f32 to vector<128x128xf32>
    %23 = arith.cmpf oge, %21, %22 : vector<128x128xf32>
    %cst_21 = arith.constant 0.00999999977 : f32
    %24 = vector.broadcast %cst_21 : f32 to vector<128x128xf32>
    %25 = arith.mulf %24, %21 : vector<128x128xf32>
    %26 = arith.select %23, %21, %25 : vector<128x128xi1>, vector<128x128xf32>
    %c0_22 = arith.constant 0 : index
    %c0_23 = arith.constant 0 : index
    %c0_24 = arith.constant 0 : index
    %27 = vector.load %arg10[%c0_22, %c0_23, %c0_24] : memref<1x128x128xf32, #tpu.memory_space<vmem>>, vector<1x128x128xf32>
    %28 = vector.shape_cast %27 : vector<1x128x128xf32> to vector<128x128xf32>
    %cst_25 = arith.constant dense<0.000000e+00> : vector<128x128xf32>
    %29 = tpu.matmul %2, %28, %cst_25 {dimension_numbers = #tpu.dot_dimension_numbers<[1], [0], [0], [1], [0, 0, 1, 1], [], []>, precision = #tpu.contract_precision<fp32>} : vector<128x128xf32>, vector<128x128xf32>, vector<128x128xf32> -> vector<128x128xf32>
    %c0_26 = arith.constant 0 : index
    %c0_27 = arith.constant 0 : index
    %c0_28 = arith.constant 0 : index
    %30 = vector.load %arg11[%c0_26, %c0_27, %c0_28] : memref<1x1x128xf32, #tpu.memory_space<vmem>>, vector<1x1x128xf32>
    %31 = vector.shape_cast %30 : vector<1x1x128xf32> to vector<1x128xf32>
    %32 = vector.broadcast %31 : vector<1x128xf32> to vector<128x128xf32>
    %33 = arith.addf %29, %32 : vector<128x128xf32>
    %cst_29 = arith.constant 0.000000e+00 : f32
    %34 = vector.broadcast %cst_29 : f32 to vector<128x128xf32>
    %35 = arith.cmpf oge, %33, %34 : vector<128x128xf32>
    %cst_30 = arith.constant 0.00999999977 : f32
    %36 = vector.broadcast %cst_30 : f32 to vector<128x128xf32>
    %37 = arith.mulf %36, %33 : vector<128x128xf32>
    %38 = arith.select %35, %33, %37 : vector<128x128xi1>, vector<128x128xf32>
    %cst_31 = arith.constant dense<0.000000e+00> : vector<16x128xf32>
    %39 = tpu.matmul %14, %26, %cst_31 {dimension_numbers = #tpu.dot_dimension_numbers<[1], [1], [0], [0], [0, 0, 1, 0], [], []>, precision = #tpu.contract_precision<fp32>} : vector<16x128xf32>, vector<128x128xf32>, vector<16x128xf32> -> vector<16x128xf32>
    %cst_32 = arith.constant 0.176776692 : f32
    %40 = vector.broadcast %cst_32 : f32 to vector<16x128xf32>
    %41 = arith.mulf %39, %40 : vector<16x128xf32>
    %c0_33 = arith.constant 0 : index
    %c0_34 = arith.constant 0 : index
    %42 = vector.load %arg5[%c0_33, %c0_34] : memref<16x128xf32, #tpu.memory_space<vmem>>, vector<16x128xf32>
    %cst_35 = arith.constant 0.000000e+00 : f32
    %43 = vector.broadcast %cst_35 : f32 to vector<16x128xf32>
    %44 = arith.cmpf ogt, %42, %43 : vector<16x128xf32>
    %cst_36 = arith.constant -1.000000e+30 : f32
    %45 = vector.broadcast %cst_36 : f32 to vector<16x128xf32>
    %46 = arith.select %44, %41, %45 : vector<16x128xi1>, vector<16x128xf32>
    %cst_37 = arith.constant dense<0xFF800000> : vector<16xf32>
    %47 = vector.multi_reduction <maximumf>, %46, %cst_37 [1] : vector<16x128xf32> to vector<16xf32>
    %48 = vector.shape_cast %47 : vector<16xf32> to vector<16x1xf32>
    %49 = vector.broadcast %48 : vector<16x1xf32> to vector<16x128xf32>
    %50 = arith.subf %46, %49 : vector<16x128xf32>
    %51 = math.exp %50 : vector<16x128xf32>
    %cst_38 = arith.constant dense<0.000000e+00> : vector<16xf32>
    %52 = vector.multi_reduction <add>, %51, %cst_38 [1] : vector<16x128xf32> to vector<16xf32>
    %53 = vector.shape_cast %52 : vector<16xf32> to vector<16x1xf32>
    %54 = vector.broadcast %53 : vector<16x1xf32> to vector<16x128xf32>
    %55 = arith.divf %51, %54 : vector<16x128xf32>
    %cst_39 = arith.constant dense<0.000000e+00> : vector<16x128xf32>
    %56 = tpu.matmul %55, %38, %cst_39 {dimension_numbers = #tpu.dot_dimension_numbers<[1], [0], [0], [1], [0, 0, 1, 1], [], []>, precision = #tpu.contract_precision<fp32>} : vector<16x128xf32>, vector<128x128xf32>, vector<16x128xf32> -> vector<16x128xf32>
    %c0_40 = arith.constant 0 : index
    %c0_41 = arith.constant 0 : index
    %c0_42 = arith.constant 0 : index
    %57 = vector.load %arg12[%c0_40, %c0_41, %c0_42] : memref<1x1x128xf32, #tpu.memory_space<vmem>>, vector<1x1x128xf32>
    %58 = vector.shape_cast %57 : vector<1x1x128xf32> to vector<1x128xf32>
    %59 = vector.broadcast %58 : vector<1x128xf32> to vector<16x128xf32>
    %60 = arith.mulf %0, %59 : vector<16x128xf32>
    %cst_43 = arith.constant dense<0.000000e+00> : vector<16xf32>
    %61 = vector.multi_reduction <add>, %60, %cst_43 [1] : vector<16x128xf32> to vector<16xf32>
    %62 = vector.shape_cast %61 : vector<16xf32> to vector<16x1xf32>
    %c0_44 = arith.constant 0 : index
    %c0_45 = arith.constant 0 : index
    %c0_46 = arith.constant 0 : index
    %63 = vector.load %arg13[%c0_44, %c0_45, %c0_46] : memref<1x1x1xf32, #tpu.memory_space<vmem>>, vector<1x1x1xf32>
    %64 = vector.shape_cast %63 : vector<1x1x1xf32> to vector<1x1xf32>
    %65 = vector.broadcast %64 : vector<1x1xf32> to vector<16x1xf32>
    %66 = arith.addf %62, %65 : vector<16x1xf32>
    %cst_47 = arith.constant 0.000000e+00 : f32
    %67 = vector.broadcast %cst_47 : f32 to vector<16x1xf32>
    %68 = arith.cmpf oge, %66, %67 : vector<16x1xf32>
    %cst_48 = arith.constant 0.00999999977 : f32
    %69 = vector.broadcast %cst_48 : f32 to vector<16x1xf32>
    %70 = arith.mulf %69, %66 : vector<16x1xf32>
    %71 = arith.select %68, %66, %70 : vector<16x1xi1>, vector<16x1xf32>
    %c0_i32 = arith.constant 0 : i32
    %72 = arith.cmpi eq, %arg1, %c0_i32 : i32
    %73 = arith.extui %72 : i1 to i32
    %c0_i32_49 = arith.constant 0 : i32
    %74 = arith.cmpi ne, %73, %c0_i32_49 : i32
    scf.if %74 {
      %cst_54 = arith.constant 0.000000e+00 : f32
      %80 = vector.broadcast %cst_54 : f32 to vector<16x128xf32>
      %c0_55 = arith.constant 0 : index
      %c0_56 = arith.constant 0 : index
      %81 = vector.load %arg14[%c0_55, %c0_56] : memref<16x128xf32, #tpu.memory_space<vmem>>, vector<16x128xf32>
      tpu.vector_store %arg14[%c0_55, %c0_56], %80 {strides = array<i32>} : memref<16x128xf32, #tpu.memory_space<vmem>>, vector<16x128xf32>,
    } else {
    }
    %c0_50 = arith.constant 0 : index
    %c0_51 = arith.constant 0 : index
    %75 = vector.load %arg14[%c0_50, %c0_51] : memref<16x128xf32, #tpu.memory_space<vmem>>, vector<16x128xf32>
    %76 = vector.broadcast %71 : vector<16x1xf32> to vector<16x128xf32>
    %77 = arith.mulf %56, %76 : vector<16x128xf32>
    %78 = arith.addf %75, %77 : vector<16x128xf32>
    %c0_52 = arith.constant 0 : index
    %c0_53 = arith.constant 0 : index
    %79 = vector.load %arg14[%c0_52, %c0_53] : memref<16x128xf32, #tpu.memory_space<vmem>>, vector<16x128xf32>
    tpu.vector_store %arg14[%c0_52, %c0_53], %78 {strides = array<i32>} : memref<16x128xf32, #tpu.memory_space<vmem>>, vector<16x128xf32>,
    return
  }
  func.func @transform_0(%arg0: i32, %arg1: i32) -> (i32, i32) {
    %c0_i32 = arith.constant 0 : i32
    %c0_i32_0 = arith.constant 0 : i32
    return %arg0, %c0_i32 : i32, i32
  }
  func.func @transform_1(%arg0: i32, %arg1: i32) -> (i32, i32) {
    %c0_i32 = arith.constant 0 : i32
    %c0_i32_0 = arith.constant 0 : i32
    %c0_i32_1 = arith.constant 0 : i32
    return %c0_i32, %c0_i32_0 : i32, i32
  }
  func.func @transform_2(%arg0: i32, %arg1: i32) -> (i32, i32) {
    %c0_i32 = arith.constant 0 : i32
    %c0_i32_0 = arith.constant 0 : i32
    %c0_i32_1 = arith.constant 0 : i32
    return %c0_i32, %c0_i32_0 : i32, i32
  }
  func.func @transform_3(%arg0: i32, %arg1: i32) -> (i32, i32) {
    %c0_i32 = arith.constant 0 : i32
    %c0_i32_0 = arith.constant 0 : i32
    return %arg0, %c0_i32 : i32, i32
  }
  func.func @transform_4(%arg0: i32, %arg1: i32) -> (i32, i32, i32) {
    %c0_i32 = arith.constant 0 : i32
    %c0_i32_0 = arith.constant 0 : i32
    %c0_i32_1 = arith.constant 0 : i32
    return %arg1, %c0_i32, %c0_i32_0 : i32, i32, i32
  }
  func.func @transform_5(%arg0: i32, %arg1: i32) -> (i32, i32, i32) {
    %c0_i32 = arith.constant 0 : i32
    %c0_i32_0 = arith.constant 0 : i32
    %c0_i32_1 = arith.constant 0 : i32
    return %arg1, %c0_i32, %c0_i32_0 : i32, i32, i32
  }
  func.func @transform_6(%arg0: i32, %arg1: i32) -> (i32, i32, i32) {
    %c0_i32 = arith.constant 0 : i32
    %c0_i32_0 = arith.constant 0 : i32
    %c0_i32_1 = arith.constant 0 : i32
    return %arg1, %c0_i32, %c0_i32_0 : i32, i32, i32
  }
  func.func @transform_7(%arg0: i32, %arg1: i32) -> (i32, i32, i32) {
    %c0_i32 = arith.constant 0 : i32
    %c0_i32_0 = arith.constant 0 : i32
    %c0_i32_1 = arith.constant 0 : i32
    return %arg1, %c0_i32, %c0_i32_0 : i32, i32, i32
  }
  func.func @transform_8(%arg0: i32, %arg1: i32) -> (i32, i32, i32) {
    %c0_i32 = arith.constant 0 : i32
    %c0_i32_0 = arith.constant 0 : i32
    %c0_i32_1 = arith.constant 0 : i32
    return %arg1, %c0_i32, %c0_i32_0 : i32, i32, i32
  }
  func.func @transform_9(%arg0: i32, %arg1: i32) -> (i32, i32, i32) {
    %c0_i32 = arith.constant 0 : i32
    %c0_i32_0 = arith.constant 0 : i32
    %c0_i32_1 = arith.constant 0 : i32
    return %arg1, %c0_i32, %c0_i32_0 : i32, i32, i32
  }
  func.func @transform_10(%arg0: i32, %arg1: i32) -> (i32, i32, i32) {
    %c0_i32 = arith.constant 0 : i32
    %c0_i32_0 = arith.constant 0 : i32
    %c0_i32_1 = arith.constant 0 : i32
    return %arg1, %c0_i32, %c0_i32_0 : i32, i32, i32
  }
  func.func @transform_11(%arg0: i32, %arg1: i32) -> (i32, i32, i32) {
    %c0_i32 = arith.constant 0 : i32
    %c0_i32_0 = arith.constant 0 : i32
    %c0_i32_1 = arith.constant 0 : i32
    return %arg1, %c0_i32, %c0_i32_0 : i32, i32, i32
  }
  func.func @transform_12(%arg0: i32, %arg1: i32) -> (i32, i32) {
    %c0_i32 = arith.constant 0 : i32
    %c0_i32_0 = arith.constant 0 : i32
    return %arg0, %c0_i32 : i32, i32
  }
}

</mosaic_0001>

<llo_original>
// kernel: tpu_custom_call.1
$region0: #{tpu_custom_call.1}
  #allocation0 [shape = 'u32[]', space=smem, size = 0x4, offset = 0x4, fixed_abs, tag = 'smem constant byte address 0x4 - core index']
  #allocation1 [shape = 'u32[72,128]{1,0:T(1,128)}', space=vmem, size = 0x9000, scoped, tag = 'internal scratch']
  %s0 = inlined_call_operand.hbm [shape: f32[16,128], index: 0, kind: input, shape index: {}]
  %s1 = inlined_call_operand.hbm [shape: f32[128,128], index: 1, kind: input, shape index: {}]
  %s2 = inlined_call_operand.hbm [shape: f32[128,128], index: 2, kind: input, shape index: {}]
  %s3 = inlined_call_operand.hbm [shape: f32[16,128], index: 3, kind: input, shape index: {}]
  %s4 = inlined_call_operand.hbm [shape: f32[2,128,128], index: 4, kind: input, shape index: {}]
  %s5 = inlined_call_operand.vmem [shape: f32[2,1,128], index: 5, kind: input, shape index: {}]
  %s6 = inlined_call_operand.hbm [shape: f32[2,128,128], index: 6, kind: input, shape index: {}]
  %s7 = inlined_call_operand.vmem [shape: f32[2,1,128], index: 7, kind: input, shape index: {}]
  %s8 = inlined_call_operand.hbm [shape: f32[2,128,128], index: 8, kind: input, shape index: {}]
  %s9 = inlined_call_operand.vmem [shape: f32[2,1,128], index: 9, kind: input, shape index: {}]
  %s10 = inlined_call_operand.vmem [shape: f32[2,1,128], index: 10, kind: input, shape index: {}]
  %s11 = inlined_call_operand.vmem [shape: f32[2,1,1], index: 11, kind: input, shape index: {}]
  %s12 = inlined_call_operand.hbm [shape: f32[16,128], index: 12, kind: output, shape index: {}]
  %s13 = sld [smem:[#allocation0]]
  $region113: #{tpu_custom_call.1} parent=0
    _
  %s15 = ssub.s32 1, %s13
  %s16 = scalar_select 0, %s15, %s13
  $region1: #{tpu_custom_call.1} parent=0
    #allocation2 [shape = 'u8[8192]{0}', space=vmem, size = 0x2000, scoped, tag = 'input window, operand 0, single buffered']
    #allocation3 [shape = 's32[2]{0}', space=sflag, size = 0x8, scoped, tag = 'scoped memory for tpu_custom_call.1']
    #allocation4 [shape = 's32[2]{0}', space=sflag, size = 0x8, scoped, tag = 'scoped memory for tpu_custom_call.1']
    #allocation5 [shape = 'u8[65536]{0}', space=vmem, size = 0x10000, scoped, tag = 'input window, operand 1, single buffered']
    #allocation6 [shape = 's32[1]{0}', space=sflag, size = 0x4, scoped, tag = 'scoped memory for tpu_custom_call.1']
    #allocation7 [shape = 'u8[65536]{0}', space=vmem, size = 0x10000, scoped, tag = 'input window, operand 2, single buffered']
    #allocation8 [shape = 'u8[8192]{0}', space=vmem, size = 0x2000, scoped, tag = 'input window, operand 3, single buffered']
    #allocation9 [shape = 's32[1]{0}', space=sflag, size = 0x4, scoped, tag = 'scoped memory for tpu_custom_call.1']
    #allocation10 [shape = 'u8[131072]{0}', space=vmem, size = 0x20000, scoped, tag = 'input window, operand 4']
    #allocation11 [shape = 'u8[131072]{0}', space=vmem, size = 0x20000, scoped, tag = 'input window, operand 6']
    #allocation12 [shape = 'u8[131072]{0}', space=vmem, size = 0x20000, scoped, tag = 'input window, operand 8']
    #allocation13 [shape = 'u8[8192]{0}', space=vmem, size = 0x2000, scoped, tag = 'output window, operand 0, single buffered']
    %17 = vsyncpa [#allocation3], 0
    %18 = vsyncpa [#allocation6], 0
    %19 = vsyncpa [#allocation9], 0
    %20 = vsyncpa [#allocation4], 0
    loop: start=0, step=1, limit=4
    $region2: #{tpu_custom_call.1} parent=1 // loop_pre_header
      _
    $region3: #{tpu_custom_call.1} parent=1 // loop_header
      %s22 = sphi 0, %s26
      %p23 = scmp.ge.s32.totalorder %s22, 4
      %s29 = sphi 0, %s41
      %s30 = sphi 0, %s37
      %s31 = sphi 0, %s29
      %s32 = sphi 0, %s30
      %s33 = sphi 0, %s31
      %s34 = sphi 0, %s32
      %s44 = sphi 0, %s46
      %s47 = sphi 0, %s44
      %s48 = sphi 0, %s47
      %s64 = sphi 0, %s48
      %s68 = sphi 0, %s68
      %s70 = sphi 0, %s68
      %s71 = sphi 0, %s70
      %s85 = sphi 0, %s71
      %s89 = sphi 0, %s89
      %s91 = sphi 0, %s89
      %s92 = sphi 0, %s91
      %s106 = sphi 0, %s92
      %s112 = sphi 0, %s114
      %s115 = sphi 0, %s112
      %s116 = sphi 0, %s115
      %s132 = sphi 0, %s116
      %s138 = sphi 0, %s140
      %s141 = sphi 0, %s138
      %s142 = sphi 0, %s141
      %s158 = sphi 0, %s142
      %s164 = sphi 0, %s166
      %s167 = sphi 0, %s164
      %s168 = sphi 0, %s167
      %s184 = sphi 0, %s168
      %s190 = sphi 0, %s192
      %s193 = sphi 0, %s190
      %s194 = sphi 0, %s193
      %s210 = sphi 0, %s194
      %s216 = sphi 0, %s218
      %s219 = sphi 0, %s216
      %s220 = sphi 0, %s219
      %s236 = sphi 0, %s220
      %s242 = sphi 0, %s244
      %s245 = sphi 0, %s242
      %s246 = sphi 0, %s245
      %s262 = sphi 0, %s246
      %s268 = sphi 0, %s270
      %s271 = sphi 0, %s268
      %s272 = sphi 0, %s271
      %s288 = sphi 0, %s272
      %s294 = sphi 0, %s296
      %s297 = sphi 0, %s294
      %s298 = sphi 0, %s297
      %s314 = sphi 0, %s298
      %s320 = sphi 0, %s322
      %s323 = sphi 0, %s320
      %s324 = sphi 0, %s323
      %s340 = sphi 0, %s324
      %s346 = sphi 0, %s348
      %s349 = sphi 0, %s346
      %s350 = sphi 0, %s349
      %s366 = sphi 0, %s350
    $region4: #{tpu_custom_call.1} parent=1 // loop_header_branch
      %25 = sbr.rel (%p23) target = $region8
    $region5: #{tpu_custom_call.1} parent=1 // loop_body
      %s27 = ssub.s32 %s22, 1
      %s28 = ssub.s32 %s22, 2
      %s35 = sadd.s32 1, %s30
      %p36 = scmp.ge.s32.totalorder %s35, 2
      %s37 = scalar_select %p36, 0, %s35
      %s38 = sadd.s32 1, %s29
      %s39 = scalar_select %p36, %s38, %s29
      %p40 = scmp.ge.s32.totalorder %s39, 1
      %s41 = scalar_select %p40, 0, %s39
      %s42 = ssub.s32 %s29, %s41
      %p43 = scmp.eq.s32.totalorder %s42, 0
      %s45 = sadd.s32 %s44, 1
      %s46 = scalar_select %p43, %s44, %s45
      %p49 = pneg %p43
      %p50 = scmp.eq.s32.totalorder %s22, 1
      %p51 = por %p49, %p50
      %p52 = scmp.ne.s32.totalorder %s44, %s47
      %p53 = scmp.eq.s32.totalorder %s22, 0
      %p54 = por %p52, %p53
      %p55 = scmp.ne.s32.totalorder %s44, %s47
      %p56 = scmp.eq.s32.totalorder %s27, 1
      %p57 = por %p55, %p56
      %p58 = scmp.ne.s32.totalorder %s47, %s48
      %p59 = scmp.eq.s32.totalorder %s27, 0
      %p60 = por %p58, %p59
      %p61 = scmp.ne.s32.totalorder %s47, %s48
      %p62 = scmp.eq.s32.totalorder %s28, 1
      %p63 = por %p61, %p62
      %p65 = scmp.ne.s32.totalorder %s48, %s64
      %p66 = scmp.eq.s32.totalorder %s28, 0
      %p67 = por %p65, %p66
      %s69 = sadd.s32 %s68, 1
      %p72 = scmp.eq.s32.totalorder %s22, 1
      %p73 = scmp.ne.s32.totalorder %s68, %s70
      %p74 = scmp.eq.s32.totalorder %s22, 0
      %p75 = por %p73, %p74
      %p76 = scmp.ne.s32.totalorder %s68, %s70
      %p77 = scmp.eq.s32.totalorder %s27, 1
      %p78 = por %p76, %p77
      %p79 = scmp.ne.s32.totalorder %s70, %s71
      %p80 = scmp.eq.s32.totalorder %s27, 0
      %p81 = por %p79, %p80
      %p82 = scmp.ne.s32.totalorder %s70, %s71
      %p83 = scmp.eq.s32.totalorder %s28, 1
      %p84 = por %p82, %p83
      %p86 = scmp.ne.s32.totalorder %s71, %s85
      %p87 = scmp.eq.s32.totalorder %s28, 0
      %p88 = por %p86, %p87
      %s90 = sadd.s32 %s89, 1
      %p93 = scmp.eq.s32.totalorder %s22, 1
      %p94 = scmp.ne.s32.totalorder %s89, %s91
      %p95 = scmp.eq.s32.totalorder %s22, 0
      %p96 = por %p94, %p95
      %p97 = scmp.ne.s32.totalorder %s89, %s91
      %p98 = scmp.eq.s32.totalorder %s27, 1
      %p99 = por %p97, %p98
      %p100 = scmp.ne.s32.totalorder %s91, %s92
      %p101 = scmp.eq.s32.totalorder %s27, 0
      %p102 = por %p100, %p101
      %p103 = scmp.ne.s32.totalorder %s91, %s92
      %p104 = scmp.eq.s32.totalorder %s28, 1
      %p105 = por %p103, %p104
      %p107 = scmp.ne.s32.totalorder %s92, %s106
      %p108 = scmp.eq.s32.totalorder %s28, 0
      %p109 = por %p107, %p108
      %s110 = ssub.s32 %s29, %s41
      %p111 = scmp.eq.s32.totalorder %s110, 0
      %s113 = sadd.s32 %s112, 1
      %s114 = scalar_select %p111, %s112, %s113
      %p117 = pneg %p111
      %p118 = scmp.eq.s32.totalorder %s22, 1
      %p119 = por %p117, %p118
      %p120 = scmp.ne.s32.totalorder %s112, %s115
      %p121 = scmp.eq.s32.totalorder %s22, 0
      %p122 = por %p120, %p121
      %p123 = scmp.ne.s32.totalorder %s112, %s115
      %p124 = scmp.eq.s32.totalorder %s27, 1
      %p125 = por %p123, %p124
      %p126 = scmp.ne.s32.totalorder %s115, %s116
      %p127 = scmp.eq.s32.totalorder %s27, 0
      %p128 = por %p126, %p127
      %p129 = scmp.ne.s32.totalorder %s115, %s116
      %p130 = scmp.eq.s32.totalorder %s28, 1
      %p131 = por %p129, %p130
      %p133 = scmp.ne.s32.totalorder %s116, %s132
      %p134 = scmp.eq.s32.totalorder %s28, 0
      %p135 = por %p133, %p134
      %s136 = ssub.s32 %s30, %s37
      %p137 = scmp.eq.s32.totalorder %s136, 0
      %s139 = sadd.s32 %s138, 1
      %s140 = scalar_select %p137, %s138, %s139
      %p143 = pneg %p137
      %p144 = scmp.eq.s32.totalorder %s22, 1
      %p145 = por %p143, %p144
      %p146 = scmp.ne.s32.totalorder %s138, %s141
      %p147 = scmp.eq.s32.totalorder %s22, 0
      %p148 = por %p146, %p147
      %p149 = scmp.ne.s32.totalorder %s138, %s141
      %p150 = scmp.eq.s32.totalorder %s27, 1
      %p151 = por %p149, %p150
      %p152 = scmp.ne.s32.totalorder %s141, %s142
      %p153 = scmp.eq.s32.totalorder %s27, 0
      %p154 = por %p152, %p153
      %p155 = scmp.ne.s32.totalorder %s141, %s142
      %p156 = scmp.eq.s32.totalorder %s28, 1
      %p157 = por %p155, %p156
      %p159 = scmp.ne.s32.totalorder %s142, %s158
      %p160 = scmp.eq.s32.totalorder %s28, 0
      %p161 = por %p159, %p160
      %s162 = ssub.s32 %s30, %s37
      %p163 = scmp.eq.s32.totalorder %s162, 0
      %s165 = sadd.s32 %s164, 1
      %s166 = scalar_select %p163, %s164, %s165
      %p169 = pneg %p163
      %p170 = scmp.eq.s32.totalorder %s22, 1
      %p171 = por %p169, %p170
      %p172 = scmp.ne.s32.totalorder %s164, %s167
      %p173 = scmp.eq.s32.totalorder %s22, 0
      %p174 = por %p172, %p173
      %p175 = scmp.ne.s32.totalorder %s164, %s167
      %p176 = scmp.eq.s32.totalorder %s27, 1
      %p177 = por %p175, %p176
      %p178 = scmp.ne.s32.totalorder %s167, %s168
      %p179 = scmp.eq.s32.totalorder %s27, 0
      %p180 = por %p178, %p179
      %p181 = scmp.ne.s32.totalorder %s167, %s168
      %p182 = scmp.eq.s32.totalorder %s28, 1
      %p183 = por %p181, %p182
      %p185 = scmp.ne.s32.totalorder %s168, %s184
      %p186 = scmp.eq.s32.totalorder %s28, 0
      %p187 = por %p185, %p186
      %s188 = ssub.s32 %s30, %s37
      %p189 = scmp.eq.s32.totalorder %s188, 0
      %s191 = sadd.s32 %s190, 1
      %s192 = scalar_select %p189, %s190, %s191
      %p195 = pneg %p189
      %p196 = scmp.eq.s32.totalorder %s22, 1
      %p197 = por %p195, %p196
      %p198 = scmp.ne.s32.totalorder %s190, %s193
      %p199 = scmp.eq.s32.totalorder %s22, 0
      %p200 = por %p198, %p199
      %p201 = scmp.ne.s32.totalorder %s190, %s193
      %p202 = scmp.eq.s32.totalorder %s27, 1
      %p203 = por %p201, %p202
      %p204 = scmp.ne.s32.totalorder %s193, %s194
      %p205 = scmp.eq.s32.totalorder %s27, 0
      %p206 = por %p204, %p205
      %p207 = scmp.ne.s32.totalorder %s193, %s194
      %p208 = scmp.eq.s32.totalorder %s28, 1
      %p209 = por %p207, %p208
      %p211 = scmp.ne.s32.totalorder %s194, %s210
      %p212 = scmp.eq.s32.totalorder %s28, 0
      %p213 = por %p211, %p212
      %s214 = ssub.s32 %s30, %s37
      %p215 = scmp.eq.s32.totalorder %s214, 0
      %s217 = sadd.s32 %s216, 1
      %s218 = scalar_select %p215, %s216, %s217
      %p221 = pneg %p215
      %p222 = scmp.eq.s32.totalorder %s22, 1
      %p223 = por %p221, %p222
      %p224 = scmp.ne.s32.totalorder %s216, %s219
      %p225 = scmp.eq.s32.totalorder %s22, 0
      %p226 = por %p224, %p225
      %p227 = scmp.ne.s32.totalorder %s216, %s219
      %p228 = scmp.eq.s32.totalorder %s27, 1
      %p229 = por %p227, %p228
      %p230 = scmp.ne.s32.totalorder %s219, %s220
      %p231 = scmp.eq.s32.totalorder %s27, 0
      %p232 = por %p230, %p231
      %p233 = scmp.ne.s32.totalorder %s219, %s220
      %p234 = scmp.eq.s32.totalorder %s28, 1
      %p235 = por %p233, %p234
      %p237 = scmp.ne.s32.totalorder %s220, %s236
      %p238 = scmp.eq.s32.totalorder %s28, 0
      %p239 = por %p237, %p238
      %s240 = ssub.s32 %s30, %s37
      %p241 = scmp.eq.s32.totalorder %s240, 0
      %s243 = sadd.s32 %s242, 1
      %s244 = scalar_select %p241, %s242, %s243
      %p247 = pneg %p241
      %p248 = scmp.eq.s32.totalorder %s22, 1
      %p249 = por %p247, %p248
      %p250 = scmp.ne.s32.totalorder %s242, %s245
      %p251 = scmp.eq.s32.totalorder %s22, 0
      %p252 = por %p250, %p251
      %p253 = scmp.ne.s32.totalorder %s242, %s245
      %p254 = scmp.eq.s32.totalorder %s27, 1
      %p255 = por %p253, %p254
      %p256 = scmp.ne.s32.totalorder %s245, %s246
      %p257 = scmp.eq.s32.totalorder %s27, 0
      %p258 = por %p256, %p257
      %p259 = scmp.ne.s32.totalorder %s245, %s246
      %p260 = scmp.eq.s32.totalorder %s28, 1
      %p261 = por %p259, %p260
      %p263 = scmp.ne.s32.totalorder %s246, %s262
      %p264 = scmp.eq.s32.totalorder %s28, 0
      %p265 = por %p263, %p264
      %s266 = ssub.s32 %s30, %s37
      %p267 = scmp.eq.s32.totalorder %s266, 0
      %s269 = sadd.s32 %s268, 1
      %s270 = scalar_select %p267, %s268, %s269
      %p273 = pneg %p267
      %p274 = scmp.eq.s32.totalorder %s22, 1
      %p275 = por %p273, %p274
      %p276 = scmp.ne.s32.totalorder %s268, %s271
      %p277 = scmp.eq.s32.totalorder %s22, 0
      %p278 = por %p276, %p277
      %p279 = scmp.ne.s32.totalorder %s268, %s271
      %p280 = scmp.eq.s32.totalorder %s27, 1
      %p281 = por %p279, %p280
      %p282 = scmp.ne.s32.totalorder %s271, %s272
      %p283 = scmp.eq.s32.totalorder %s27, 0
      %p284 = por %p282, %p283
      %p285 = scmp.ne.s32.totalorder %s271, %s272
      %p286 = scmp.eq.s32.totalorder %s28, 1
      %p287 = por %p285, %p286
      %p289 = scmp.ne.s32.totalorder %s272, %s288
      %p290 = scmp.eq.s32.totalorder %s28, 0
      %p291 = por %p289, %p290
      %s292 = ssub.s32 %s30, %s37
      %p293 = scmp.eq.s32.totalorder %s292, 0
      %s295 = sadd.s32 %s294, 1
      %s296 = scalar_select %p293, %s294, %s295
      %p299 = pneg %p293
      %p300 = scmp.eq.s32.totalorder %s22, 1
      %p301 = por %p299, %p300
      %p302 = scmp.ne.s32.totalorder %s294, %s297
      %p303 = scmp.eq.s32.totalorder %s22, 0
      %p304 = por %p302, %p303
      %p305 = scmp.ne.s32.totalorder %s294, %s297
      %p306 = scmp.eq.s32.totalorder %s27, 1
      %p307 = por %p305, %p306
      %p308 = scmp.ne.s32.totalorder %s297, %s298
      %p309 = scmp.eq.s32.totalorder %s27, 0
      %p310 = por %p308, %p309
      %p311 = scmp.ne.s32.totalorder %s297, %s298
      %p312 = scmp.eq.s32.totalorder %s28, 1
      %p313 = por %p311, %p312
      %p315 = scmp.ne.s32.totalorder %s298, %s314
      %p316 = scmp.eq.s32.totalorder %s28, 0
      %p317 = por %p315, %p316
      %s318 = ssub.s32 %s30, %s37
      %p319 = scmp.eq.s32.totalorder %s318, 0
      %s321 = sadd.s32 %s320, 1
      %s322 = scalar_select %p319, %s320, %s321
      %p325 = pneg %p319
      %p326 = scmp.eq.s32.totalorder %s22, 1
      %p327 = por %p325, %p326
      %p328 = scmp.ne.s32.totalorder %s320, %s323
      %p329 = scmp.eq.s32.totalorder %s22, 0
      %p330 = por %p328, %p329
      %p331 = scmp.ne.s32.totalorder %s320, %s323
      %p332 = scmp.eq.s32.totalorder %s27, 1
      %p333 = por %p331, %p332
      %p334 = scmp.ne.s32.totalorder %s323, %s324
      %p335 = scmp.eq.s32.totalorder %s27, 0
      %p336 = por %p334, %p335
      %p337 = scmp.ne.s32.totalorder %s323, %s324
      %p338 = scmp.eq.s32.totalorder %s28, 1
      %p339 = por %p337, %p338
      %p341 = scmp.ne.s32.totalorder %s324, %s340
      %p342 = scmp.eq.s32.totalorder %s28, 0
      %p343 = por %p341, %p342
      %s344 = ssub.s32 %s29, %s41
      %p345 = scmp.eq.s32.totalorder %s344, 0
      %s347 = sadd.s32 %s346, 1
      %s348 = scalar_select %p345, %s346, %s347
      %p351 = pneg %p345
      %p352 = scmp.eq.s32.totalorder %s22, 1
      %p353 = por %p351, %p352
      %p354 = scmp.ne.s32.totalorder %s346, %s349
      %p355 = scmp.eq.s32.totalorder %s22, 0
      %p356 = por %p354, %p355
      %p357 = scmp.ne.s32.totalorder %s346, %s349
      %p358 = scmp.eq.s32.totalorder %s27, 1
      %p359 = por %p357, %p358
      %p360 = scmp.ne.s32.totalorder %s349, %s350
      %p361 = scmp.eq.s32.totalorder %s27, 0
      %p362 = por %p360, %p361
      %p363 = scmp.ne.s32.totalorder %s349, %s350
      %p364 = scmp.eq.s32.totalorder %s28, 1
      %p365 = por %p363, %p364
      %p367 = scmp.ne.s32.totalorder %s350, %s366
      %p368 = scmp.eq.s32.totalorder %s28, 0
      %p369 = por %p367, %p368
      %p370 = scmp.le.s32.totalorder 1, %s22
      %p371 = scmp.lt.s32.totalorder %s22, 3
      %p372 = pnand %p370, %p371
      %p373 = pneg %p372
      // Predicated region
      $region9: #{tpu_custom_call.1} parent=5 // pred_check
        _
      $region10: #{tpu_custom_call.1} parent=5 // pred_check_branch
        %375 = sbr.rel (%p372) target = $region12
      $region11: #{tpu_custom_call.1} parent=5 // pred_region
        %s376 = ssub.s32 %s22, 1
        // Predicated region
        $region13: #{tpu_custom_call.1} parent=11 // pred_check
          %p377 = pneg %p60
        $region14: #{tpu_custom_call.1} parent=11 // pred_check_branch
          %379 = sbr.rel (%p377) target = $region16
        $region15: #{tpu_custom_call.1} parent=11 // pred_region
          %s380 = smul.u32 2, %s31
          %382 = vsyncadd [#allocation3], 0
          %s383 = smul.addr %s380, 8
          %s384 = scalar_lea.hbm %s0, %s383
          %s385 = sshll.u32 %s384, 4
          %s386 = int_to_ptr.hbm [resolvable:$true] %s385
          %s387 = sshll.u32 [#allocation2], 4
          %s388 = int_to_ptr.vmem [resolvable:$true] %s387
          %393 = dma.hbm_to_vmem [thread:$0]  %s386, 256, %s388, [#allocation3], 128, 128, 8
        $region16: #{tpu_custom_call.1} parent=11 // pred_fallthru
          _
        // Predicated region
        $region17: #{tpu_custom_call.1} parent=11 // pred_check
          %p394 = pneg %p81
        $region18: #{tpu_custom_call.1} parent=11 // pred_check_branch
          %396 = sbr.rel (%p394) target = $region20
        $region19: #{tpu_custom_call.1} parent=11 // pred_region
          %398 = vsyncadd [#allocation6], 0
          %s399 = sshll.u32 %s1, 4
          %s400 = int_to_ptr.hbm [resolvable:$true] %s399
          %s401 = sshll.u32 [#allocation5], 4
          %s402 = int_to_ptr.vmem [resolvable:$true] %s401
          %407 = dma.hbm_to_vmem [thread:$0]  %s400, 2048, %s402, [#allocation6], 128, 128, 8
        $region20: #{tpu_custom_call.1} parent=11 // pred_fallthru
          _
        // Predicated region
        $region21: #{tpu_custom_call.1} parent=11 // pred_check
          %p408 = pneg %p102
        $region22: #{tpu_custom_call.1} parent=11 // pred_check_branch
          %410 = sbr.rel (%p408) target = $region24
        $region23: #{tpu_custom_call.1} parent=11 // pred_region
          %412 = vsyncadd [#allocation6], 0
          %s413 = sshll.u32 %s2, 4
          %s414 = int_to_ptr.hbm [resolvable:$true] %s413
          %s415 = sshll.u32 [#allocation7], 4
          %s416 = int_to_ptr.vmem [resolvable:$true] %s415
          %421 = dma.hbm_to_vmem [thread:$0]  %s414, 2048, %s416, [#allocation6], 128, 128, 8
        $region24: #{tpu_custom_call.1} parent=11 // pred_fallthru
          _
        // Predicated region
        $region25: #{tpu_custom_call.1} parent=11 // pred_check
          %p422 = pneg %p128
        $region26: #{tpu_custom_call.1} parent=11 // pred_check_branch
          %424 = sbr.rel (%p422) target = $region28
        $region27: #{tpu_custom_call.1} parent=11 // pred_region
          %s425 = smul.u32 2, %s31
          %427 = vsyncadd [#allocation9], 0
          %s428 = smul.addr %s425, 8
          %s429 = scalar_lea.hbm %s3, %s428
          %s430 = sshll.u32 %s429, 4
          %s431 = int_to_ptr.hbm [resolvable:$true] %s430
          %s432 = sshll.u32 [#allocation8], 4
          %s433 = int_to_ptr.vmem [resolvable:$true] %s432
          %438 = dma.hbm_to_vmem [thread:$0]  %s431, 256, %s433, [#allocation9], 128, 128, 8
        $region28: #{tpu_custom_call.1} parent=11 // pred_fallthru
          _
      $region12: #{tpu_custom_call.1} parent=5 // pred_fallthru
        _
      %p439 = scmp.lt.s32.totalorder %s22, 2
      // Predicated region
      $region29: #{tpu_custom_call.1} parent=5 // pred_check
        %p440 = pneg %p439
      $region30: #{tpu_custom_call.1} parent=5 // pred_check_branch
        %442 = sbr.rel (%p440) target = $region32
      $region31: #{tpu_custom_call.1} parent=5 // pred_region
        // Predicated region
        $region33: #{tpu_custom_call.1} parent=31 // pred_check
          %p443 = pneg %p148
        $region34: #{tpu_custom_call.1} parent=31 // pred_check_branch
          %445 = sbr.rel (%p443) target = $region36
        $region35: #{tpu_custom_call.1} parent=31 // pred_region
          %s446 = sand.u32 %s22, 1
          %s447 = scalar_lea.sflag [#allocation3], %s446
          %s448 = sand.u32 %s138, 1
          %s449 = smul.addr %s448, 128
          %s450 = scalar_lea.vmem [#allocation10], %s449
          %452 = vsyncadd %s447, 0
          %s453 = smul.addr %s30, 16
          %s454 = smul.addr %s453, 8
          %s455 = scalar_lea.hbm %s4, %s454
          %s456 = sshll.u32 %s455, 4
          %s457 = int_to_ptr.hbm [resolvable:$true] %s456
          %s458 = sshll.u32 %s450, 4
          %s459 = int_to_ptr.vmem [resolvable:$true] %s458
          %464 = dma.hbm_to_vmem [thread:$0]  %s457, 2048, %s459, %s447, 128, 128, 8
        $region36: #{tpu_custom_call.1} parent=31 // pred_fallthru
          _
        // Predicated region
        $region37: #{tpu_custom_call.1} parent=31 // pred_check
          %p465 = pneg %p174
        $region38: #{tpu_custom_call.1} parent=31 // pred_check_branch
          %467 = sbr.rel (%p465) target = $region40
        $region39: #{tpu_custom_call.1} parent=31 // pred_region
          %p468 = scmp.lt.s32.totalorder %s30, 1
          %s469 = scalar_select %p468, %s30, 1
          %s470 = scalar_lea.vmem %s5, %s469
        $region40: #{tpu_custom_call.1} parent=31 // pred_fallthru
          _
        // Predicated region
        $region41: #{tpu_custom_call.1} parent=31 // pred_check
          %p471 = pneg %p200
        $region42: #{tpu_custom_call.1} parent=31 // pred_check_branch
          %473 = sbr.rel (%p471) target = $region44
        $region43: #{tpu_custom_call.1} parent=31 // pred_region
          %s474 = sand.u32 %s22, 1
          %s475 = scalar_lea.sflag [#allocation3], %s474
          %s476 = sand.u32 %s190, 1
          %s477 = smul.addr %s476, 128
          %s478 = scalar_lea.vmem [#allocation11], %s477
          %480 = vsyncadd %s475, 0
          %s481 = smul.addr %s30, 16
          %s482 = smul.addr %s481, 8
          %s483 = scalar_lea.hbm %s6, %s482
          %s484 = sshll.u32 %s483, 4
          %s485 = int_to_ptr.hbm [resolvable:$true] %s484
          %s486 = sshll.u32 %s478, 4
          %s487 = int_to_ptr.vmem [resolvable:$true] %s486
          %492 = dma.hbm_to_vmem [thread:$0]  %s485, 2048, %s487, %s475, 128, 128, 8
        $region44: #{tpu_custom_call.1} parent=31 // pred_fallthru
          _
        // Predicated region
        $region45: #{tpu_custom_call.1} parent=31 // pred_check
          %p493 = pneg %p226
        $region46: #{tpu_custom_call.1} parent=31 // pred_check_branch
          %495 = sbr.rel (%p493) target = $region48
        $region47: #{tpu_custom_call.1} parent=31 // pred_region
          %p496 = scmp.lt.s32.totalorder %s30, 1
          %s497 = scalar_select %p496, %s30, 1
          %s498 = scalar_lea.vmem %s7, %s497
        $region48: #{tpu_custom_call.1} parent=31 // pred_fallthru
          _
        // Predicated region
        $region49: #{tpu_custom_call.1} parent=31 // pred_check
          %p499 = pneg %p252
        $region50: #{tpu_custom_call.1} parent=31 // pred_check_branch
          %501 = sbr.rel (%p499) target = $region52
        $region51: #{tpu_custom_call.1} parent=31 // pred_region
          %s502 = sand.u32 %s22, 1
          %s503 = scalar_lea.sflag [#allocation3], %s502
          %s504 = sand.u32 %s242, 1
          %s505 = smul.addr %s504, 128
          %s506 = scalar_lea.vmem [#allocation12], %s505
          %508 = vsyncadd %s503, 0
          %s509 = smul.addr %s30, 16
          %s510 = smul.addr %s509, 8
          %s511 = scalar_lea.hbm %s8, %s510
          %s512 = sshll.u32 %s511, 4
          %s513 = int_to_ptr.hbm [resolvable:$true] %s512
          %s514 = sshll.u32 %s506, 4
          %s515 = int_to_ptr.vmem [resolvable:$true] %s514
          %520 = dma.hbm_to_vmem [thread:$0]  %s513, 2048, %s515, %s503, 128, 128, 8
        $region52: #{tpu_custom_call.1} parent=31 // pred_fallthru
          _
        // Predicated region
        $region53: #{tpu_custom_call.1} parent=31 // pred_check
          %p521 = pneg %p278
        $region54: #{tpu_custom_call.1} parent=31 // pred_check_branch
          %523 = sbr.rel (%p521) target = $region56
        $region55: #{tpu_custom_call.1} parent=31 // pred_region
          %p524 = scmp.lt.s32.totalorder %s30, 1
          %s525 = scalar_select %p524, %s30, 1
          %s526 = scalar_lea.vmem %s9, %s525
        $region56: #{tpu_custom_call.1} parent=31 // pred_fallthru
          _
        // Predicated region
        $region57: #{tpu_custom_call.1} parent=31 // pred_check
          %p527 = pneg %p304
        $region58: #{tpu_custom_call.1} parent=31 // pred_check_branch
          %529 = sbr.rel (%p527) target = $region60
        $region59: #{tpu_custom_call.1} parent=31 // pred_region
          %p530 = scmp.lt.s32.totalorder %s30, 1
          %s531 = scalar_select %p530, %s30, 1
          %s532 = scalar_lea.vmem %s10, %s531
        $region60: #{tpu_custom_call.1} parent=31 // pred_fallthru
          _
        // Predicated region
        $region61: #{tpu_custom_call.1} parent=31 // pred_check
          %p533 = pneg %p330
        $region62: #{tpu_custom_call.1} parent=31 // pred_check_branch
          %535 = sbr.rel (%p533) target = $region64
        $region63: #{tpu_custom_call.1} parent=31 // pred_region
          %p536 = scmp.lt.s32.totalorder %s30, 1
          %s537 = scalar_select %p536, %s30, 1
          %s538 = scalar_lea.vmem %s11, %s537
        $region64: #{tpu_custom_call.1} parent=31 // pred_fallthru
          _
      $region32: #{tpu_custom_call.1} parent=5 // pred_fallthru
        _
      %p539 = scmp.le.s32.totalorder 1, %s22
      %p540 = scmp.lt.s32.totalorder %s22, 3
      %p541 = pnand %p539, %p540
      %p542 = pneg %p541
      // Predicated region
      $region65: #{tpu_custom_call.1} parent=5 // pred_check
        _
      $region66: #{tpu_custom_call.1} parent=5 // pred_check_branch
        %544 = sbr.rel (%p541) target = $region68
      $region67: #{tpu_custom_call.1} parent=5 // pred_region
        %s545 = ssub.s32 %s22, 1
        // Predicated region
        $region69: #{tpu_custom_call.1} parent=67 // pred_check
          %p546 = pneg %p60
        $region70: #{tpu_custom_call.1} parent=67 // pred_check_branch
          %548 = sbr.rel (%p546) target = $region72
        $region71: #{tpu_custom_call.1} parent=67 // pred_region
          %550 = dma.done [#allocation3], 256
        $region72: #{tpu_custom_call.1} parent=67 // pred_fallthru
          _
        // Predicated region
        $region73: #{tpu_custom_call.1} parent=67 // pred_check
          %p551 = pneg %p81
        $region74: #{tpu_custom_call.1} parent=67 // pred_check_branch
          %553 = sbr.rel (%p551) target = $region76
        $region75: #{tpu_custom_call.1} parent=67 // pred_region
          %555 = dma.done [#allocation6], 2048
        $region76: #{tpu_custom_call.1} parent=67 // pred_fallthru
          _
        // Predicated region
        $region77: #{tpu_custom_call.1} parent=67 // pred_check
          %p556 = pneg %p102
        $region78: #{tpu_custom_call.1} parent=67 // pred_check_branch
          %558 = sbr.rel (%p556) target = $region80
        $region79: #{tpu_custom_call.1} parent=67 // pred_region
          %560 = dma.done [#allocation6], 2048
        $region80: #{tpu_custom_call.1} parent=67 // pred_fallthru
          _
        // Predicated region
        $region81: #{tpu_custom_call.1} parent=67 // pred_check
          %p561 = pneg %p128
        $region82: #{tpu_custom_call.1} parent=67 // pred_check_branch
          %563 = sbr.rel (%p561) target = $region84
        $region83: #{tpu_custom_call.1} parent=67 // pred_region
          %565 = dma.done [#allocation9], 256
        $region84: #{tpu_custom_call.1} parent=67 // pred_fallthru
          _
        %s566 = sand.u32 %s27, 1
        %s567 = scalar_lea.sflag [#allocation3], %s566
        %s568 = sand.u32 %s141, 1
        %s569 = smul.addr %s568, 128
        %s570 = scalar_lea.vmem [#allocation10], %s569
        // Predicated region
        $region85: #{tpu_custom_call.1} parent=67 // pred_check
          %p571 = pneg %p154
        $region86: #{tpu_custom_call.1} parent=67 // pred_check_branch
          %573 = sbr.rel (%p571) target = $region88
        $region87: #{tpu_custom_call.1} parent=67 // pred_region
          %575 = dma.done %s567, 2048
        $region88: #{tpu_custom_call.1} parent=67 // pred_fallthru
          _
        %s576 = sand.u32 %s27, 1
        %s577 = scalar_lea.sflag [#allocation3], %s576
        %s578 = sand.u32 %s193, 1
        %s579 = smul.addr %s578, 128
        %s580 = scalar_lea.vmem [#allocation11], %s579
        // Predicated region
        $region89: #{tpu_custom_call.1} parent=67 // pred_check
          %p581 = pneg %p206
        $region90: #{tpu_custom_call.1} parent=67 // pred_check_branch
          %583 = sbr.rel (%p581) target = $region92
        $region91: #{tpu_custom_call.1} parent=67 // pred_region
          %585 = dma.done %s577, 2048
        $region92: #{tpu_custom_call.1} parent=67 // pred_fallthru
          _
        %s586 = sand.u32 %s27, 1
        %s587 = scalar_lea.sflag [#allocation3], %s586
        %s588 = sand.u32 %s245, 1
        %s589 = smul.addr %s588, 128
        %s590 = scalar_lea.vmem [#allocation12], %s589
        // Predicated region
        $region93: #{tpu_custom_call.1} parent=67 // pred_check
          %p591 = pneg %p258
        $region94: #{tpu_custom_call.1} parent=67 // pred_check_branch
          %593 = sbr.rel (%p591) target = $region96
        $region95: #{tpu_custom_call.1} parent=67 // pred_region
          %595 = dma.done %s587, 2048
        $region96: #{tpu_custom_call.1} parent=67 // pred_fallthru
          _
        %p596 = pneg %p60
        %p597 = pneg %p57
        %p598 = pneg %p81
        %p599 = pneg %p78
        %p600 = pneg %p102
        %p601 = pneg %p99
        %p602 = pneg %p128
        %p603 = pneg %p125
        %s604 = sand.u32 %s27, 1
        %s605 = scalar_lea.sflag [#allocation3], %s604
        %s606 = sand.u32 %s141, 1
        %s607 = smul.addr %s606, 128
        %s608 = scalar_lea.vmem [#allocation10], %s607
        %p609 = pneg %p154
        %p610 = pneg %p151
        %p611 = scmp.lt.s32.totalorder %s32, 1
        %s612 = scalar_select %p611, %s32, 1
        %s613 = scalar_lea.vmem %s5, %s612
        %p614 = pneg %p180
        %p615 = pneg %p177
        %s616 = sand.u32 %s27, 1
        %s617 = scalar_lea.sflag [#allocation3], %s616
        %s618 = sand.u32 %s193, 1
        %s619 = smul.addr %s618, 128
        %s620 = scalar_lea.vmem [#allocation11], %s619
        %p621 = pneg %p206
        %p622 = pneg %p203
        %p623 = scmp.lt.s32.totalorder %s32, 1
        %s624 = scalar_select %p623, %s32, 1
        %s625 = scalar_lea.vmem %s7, %s624
        %p626 = pneg %p232
        %p627 = pneg %p229
        %s628 = sand.u32 %s27, 1
        %s629 = scalar_lea.sflag [#allocation3], %s628
        %s630 = sand.u32 %s245, 1
        %s631 = smul.addr %s630, 128
        %s632 = scalar_lea.vmem [#allocation12], %s631
        %p633 = pneg %p258
        %p634 = pneg %p255
        %p635 = scmp.lt.s32.totalorder %s32, 1
        %s636 = scalar_select %p635, %s32, 1
        %s637 = scalar_lea.vmem %s9, %s636
        %p638 = pneg %p284
        %p639 = pneg %p281
        %p640 = scmp.lt.s32.totalorder %s32, 1
        %s641 = scalar_select %p640, %s32, 1
        %s642 = scalar_lea.vmem %s10, %s641
        %p643 = pneg %p310
        %p644 = pneg %p307
        %p645 = scmp.lt.s32.totalorder %s32, 1
        %s646 = scalar_select %p645, %s32, 1
        %s647 = scalar_lea.vmem %s11, %s646
        %p648 = pneg %p336
        %p649 = pneg %p333
        %p650 = pneg %p362
        %p651 = pneg %p359
        %s652 = smul.u32 2, %s31
        %s653 = smul.u32 2, %s31
        %p654 = scmp.lt.s32.totalorder %s32, 1
        %s655 = scalar_select %p654, %s32, 1
        %s656 = scalar_lea.vmem %s5, %s655
        %p657 = scmp.lt.s32.totalorder %s32, 1
        %s658 = scalar_select %p657, %s32, 1
        %s659 = scalar_lea.vmem %s7, %s658
        %p660 = scmp.lt.s32.totalorder %s32, 1
        %s661 = scalar_select %p660, %s32, 1
        %s662 = scalar_lea.vmem %s9, %s661
        %p663 = scmp.lt.s32.totalorder %s32, 1
        %s664 = scalar_select %p663, %s32, 1
        %s665 = scalar_lea.vmem %s10, %s664
        %p666 = scmp.lt.s32.totalorder %s32, 1
        %s667 = scalar_select %p666, %s32, 1
        %s668 = scalar_lea.vmem %s11, %s667
        %s669 = smul.u32 2, %s31
        %v670 = vld [vmem:[#allocation2] sm:$0xff]
        %v671 = vld [vmem:[#allocation2 + $0x8] sm:$0xff]
        %v672 = vld [vmem:[#allocation5] sm:$0xff]
        %v673 = vld [vmem:[#allocation5 + $0x8] sm:$0xff]
        %v674 = vld [vmem:[#allocation5 + $0x10] sm:$0xff]
        %v675 = vld [vmem:[#allocation5 + $0x18] sm:$0xff]
        %v676 = vld [vmem:[#allocation5 + $0x20] sm:$0xff]
        %v677 = vld [vmem:[#allocation5 + $0x28] sm:$0xff]
        %v678 = vld [vmem:[#allocation5 + $0x30] sm:$0xff]
        %v679 = vld [vmem:[#allocation5 + $0x38] sm:$0xff]
        %v680 = vld [vmem:[#allocation5 + $0x40] sm:$0xff]
        %v681 = vld [vmem:[#allocation5 + $0x48] sm:$0xff]
        %v682 = vld [vmem:[#allocation5 + $0x50] sm:$0xff]
        %v683 = vld [vmem:[#allocation5 + $0x58] sm:$0xff]
        %v684 = vld [vmem:[#allocation5 + $0x60] sm:$0xff]
        %v685 = vld [vmem:[#allocation5 + $0x68] sm:$0xff]
        %v686 = vld [vmem:[#allocation5 + $0x70] sm:$0xff]
        %v687 = vld [vmem:[#allocation5 + $0x78] sm:$0xff]
        %v688 = vld [vmem:[#allocation7] sm:$0xff]
        %v689 = vld [vmem:[#allocation7 + $0x8] sm:$0xff]
        %v690 = vld [vmem:[#allocation7 + $0x10] sm:$0xff]
        %v691 = vld [vmem:[#allocation7 + $0x18] sm:$0xff]
        %v692 = vld [vmem:[#allocation7 + $0x20] sm:$0xff]
        %v693 = vld [vmem:[#allocation7 + $0x28] sm:$0xff]
        %v694 = vld [vmem:[#allocation7 + $0x30] sm:$0xff]
        %v695 = vld [vmem:[#allocation7 + $0x38] sm:$0xff]
        %v696 = vld [vmem:[#allocation7 + $0x40] sm:$0xff]
        %v697 = vld [vmem:[#allocation7 + $0x48] sm:$0xff]
        %v698 = vld [vmem:[#allocation7 + $0x50] sm:$0xff]
        %v699 = vld [vmem:[#allocation7 + $0x58] sm:$0xff]
        %v700 = vld [vmem:[#allocation7 + $0x60] sm:$0xff]
        %v701 = vld [vmem:[#allocation7 + $0x68] sm:$0xff]
        %v702 = vld [vmem:[#allocation7 + $0x70] sm:$0xff]
        %v703 = vld [vmem:[#allocation7 + $0x78] sm:$0xff]
        %v704 = vld [vmem:[%s570] sm:$0xff]
        %v705 = vld [vmem:[%s570 + $0x8] sm:$0xff]
        %v706 = vld [vmem:[%s570 + $0x10] sm:$0xff]
        %v707 = vld [vmem:[%s570 + $0x18] sm:$0xff]
        %v708 = vld [vmem:[%s570 + $0x20] sm:$0xff]
        %v709 = vld [vmem:[%s570 + $0x28] sm:$0xff]
        %v710 = vld [vmem:[%s570 + $0x30] sm:$0xff]
        %v711 = vld [vmem:[%s570 + $0x38] sm:$0xff]
        %v712 = vld [vmem:[%s570 + $0x40] sm:$0xff]
        %v713 = vld [vmem:[%s570 + $0x48] sm:$0xff]
        %v714 = vld [vmem:[%s570 + $0x50] sm:$0xff]
        %v715 = vld [vmem:[%s570 + $0x58] sm:$0xff]
        %v716 = vld [vmem:[%s570 + $0x60] sm:$0xff]
        %v717 = vld [vmem:[%s570 + $0x68] sm:$0xff]
        %v718 = vld [vmem:[%s570 + $0x70] sm:$0xff]
        %v719 = vld [vmem:[%s570 + $0x78] sm:$0xff]
        %v720 = vld [vmem:[%s656] sm:$0x1]
        %v722 = vperm.slane %v720, 0
        %v724 = vand.u32 %v719, 4294901760
        %725 = vmatpush.msra.mxu0 %v724
        %v726 = vand.u32 %v718, 4294901760
        %727 = vmatpush.msra.mxu0 %v726
        %v728 = vand.u32 %v717, 4294901760
        %729 = vmatpush.msra.mxu0 %v728
        %v730 = vand.u32 %v716, 4294901760
        %731 = vmatpush.msra.mxu0 %v730
        %v732 = vand.u32 %v715, 4294901760
        %733 = vmatpush.msra.mxu0 %v732
        %v734 = vand.u32 %v714, 4294901760
        %735 = vmatpush.msra.mxu0 %v734
        %v736 = vand.u32 %v713, 4294901760
        %737 = vmatpush.msra.mxu0 %v736
        %v738 = vand.u32 %v712, 4294901760
        %739 = vmatpush.msra.mxu0 %v738
        %v740 = vand.u32 %v711, 4294901760
        %741 = vmatpush.msra.mxu0 %v740
        %v742 = vand.u32 %v710, 4294901760
        %743 = vmatpush.msra.mxu0 %v742
        %v744 = vand.u32 %v709, 4294901760
        %745 = vmatpush.msra.mxu0 %v744
        %v746 = vand.u32 %v708, 4294901760
        %747 = vmatpush.msra.mxu0 %v746
        %v748 = vand.u32 %v707, 4294901760
        %749 = vmatpush.msra.mxu0 %v748
        %v750 = vand.u32 %v706, 4294901760
        %751 = vmatpush.msra.mxu0 %v750
        %v752 = vand.u32 %v705, 4294901760
        %753 = vmatpush.msra.mxu0 %v752
        %v754 = vand.u32 %v704, 4294901760
        %755 = vmatpush.msra.mxu0 %v754
        %v756 = vand.u32 %v670, 4294901760
        %v757 = vsub.f32 %v670, %v756
        %v758 = vand.u32 %v757, 4294901760
        %v759 = vsub.f32 %v757, %v758
        %v760 = vand.u32 %v759, 4294901760
        %761 = vmatmul.f32.gmra.mxu0 %v760
        %v762 = vpop.f32.mrf.mxu0
        %v763 = vadd.f32 %v722, %v762
        %v764 = vand.u32 %v671, 4294901760
        %v765 = vsub.f32 %v671, %v764
        %v766 = vand.u32 %v765, 4294901760
        %v767 = vsub.f32 %v765, %v766
        %v768 = vand.u32 %v767, 4294901760
        %769 = vmatmul.f32.gmra.mxu0 %v768
        %v770 = vpop.f32.mrf.mxu0
        %v771 = vadd.f32 %v722, %v770
        %772 = vdwg.mxu0
        %v773 = vand.u32 %v719, 4294901760
        %v774 = vsub.f32 %v719, %v773
        %v775 = vand.u32 %v774, 4294901760
        %v776 = vsub.f32 %v774, %v775
        %v777 = vand.u32 %v776, 4294901760
        %778 = vmatpush.msra.mxu0 %v777
        %v779 = vand.u32 %v718, 4294901760
        %v780 = vsub.f32 %v718, %v779
        %v781 = vand.u32 %v780, 4294901760
        %v782 = vsub.f32 %v780, %v781
        %v783 = vand.u32 %v782, 4294901760
        %784 = vmatpush.msra.mxu0 %v783
        %v785 = vand.u32 %v717, 4294901760
        %v786 = vsub.f32 %v717, %v785
        %v787 = vand.u32 %v786, 4294901760
        %v788 = vsub.f32 %v786, %v787
        %v789 = vand.u32 %v788, 4294901760
        %790 = vmatpush.msra.mxu0 %v789
        %v791 = vand.u32 %v716, 4294901760
        %v792 = vsub.f32 %v716, %v791
        %v793 = vand.u32 %v792, 4294901760
        %v794 = vsub.f32 %v792, %v793
        %v795 = vand.u32 %v794, 4294901760
        %796 = vmatpush.msra.mxu0 %v795
        %v797 = vand.u32 %v715, 4294901760
        %v798 = vsub.f32 %v715, %v797
        %v799 = vand.u32 %v798, 4294901760
        %v800 = vsub.f32 %v798, %v799
        %v801 = vand.u32 %v800, 4294901760
        %802 = vmatpush.msra.mxu0 %v801
        %v803 = vand.u32 %v714, 4294901760
        %v804 = vsub.f32 %v714, %v803
        %v805 = vand.u32 %v804, 4294901760
        %v806 = vsub.f32 %v804, %v805
        %v807 = vand.u32 %v806, 4294901760
        %808 = vmatpush.msra.mxu0 %v807
        %v809 = vand.u32 %v713, 4294901760
        %v810 = vsub.f32 %v713, %v809
        %v811 = vand.u32 %v810, 4294901760
        %v812 = vsub.f32 %v810, %v811
        %v813 = vand.u32 %v812, 4294901760
        %814 = vmatpush.msra.mxu0 %v813
        %v815 = vand.u32 %v712, 4294901760
        %v816 = vsub.f32 %v712, %v815
        %v817 = vand.u32 %v816, 4294901760
        %v818 = vsub.f32 %v816, %v817
        %v819 = vand.u32 %v818, 4294901760
        %820 = vmatpush.msra.mxu0 %v819
        %v821 = vand.u32 %v711, 4294901760
        %v822 = vsub.f32 %v711, %v821
        %v823 = vand.u32 %v822, 4294901760
        %v824 = vsub.f32 %v822, %v823
        %v825 = vand.u32 %v824, 4294901760
        %826 = vmatpush.msra.mxu0 %v825
        %v827 = vand.u32 %v710, 4294901760
        %v828 = vsub.f32 %v710, %v827
        %v829 = vand.u32 %v828, 4294901760
        %v830 = vsub.f32 %v828, %v829
        %v831 = vand.u32 %v830, 4294901760
        %832 = vmatpush.msra.mxu0 %v831
        %v833 = vand.u32 %v709, 4294901760
        %v834 = vsub.f32 %v709, %v833
        %v835 = vand.u32 %v834, 4294901760
        %v836 = vsub.f32 %v834, %v835
        %v837 = vand.u32 %v836, 4294901760
        %838 = vmatpush.msra.mxu0 %v837
        %v839 = vand.u32 %v708, 4294901760
        %v840 = vsub.f32 %v708, %v839
        %v841 = vand.u32 %v840, 4294901760
        %v842 = vsub.f32 %v840, %v841
        %v843 = vand.u32 %v842, 4294901760
        %844 = vmatpush.msra.mxu0 %v843
        %v845 = vand.u32 %v707, 4294901760
        %v846 = vsub.f32 %v707, %v845
        %v847 = vand.u32 %v846, 4294901760
        %v848 = vsub.f32 %v846, %v847
        %v849 = vand.u32 %v848, 4294901760
        %850 = vmatpush.msra.mxu0 %v849
        %v851 = vand.u32 %v706, 4294901760
        %v852 = vsub.f32 %v706, %v851
        %v853 = vand.u32 %v852, 4294901760
        %v854 = vsub.f32 %v852, %v853
        %v855 = vand.u32 %v854, 4294901760
        %856 = vmatpush.msra.mxu0 %v855
        %v857 = vand.u32 %v705, 4294901760
        %v858 = vsub.f32 %v705, %v857
        %v859 = vand.u32 %v858, 4294901760
        %v860 = vsub.f32 %v858, %v859
        %v861 = vand.u32 %v860, 4294901760
        %862 = vmatpush.msra.mxu0 %v861
        %v863 = vand.u32 %v704, 4294901760
        %v864 = vsub.f32 %v704, %v863
        %v865 = vand.u32 %v864, 4294901760
        %v866 = vsub.f32 %v864, %v865
        %v867 = vand.u32 %v866, 4294901760
        %868 = vmatpush.msra.mxu0 %v867
        %v869 = vand.u32 %v670, 4294901760
        %870 = vmatmul.f32.gmra.mxu0 %v869
        %v871 = vpop.f32.mrf.mxu0
        %v872 = vadd.f32 %v763, %v871
        %v873 = vand.u32 %v671, 4294901760
        %874 = vmatmul.f32.gmra.mxu0 %v873
        %v875 = vpop.f32.mrf.mxu0
        %v876 = vadd.f32 %v771, %v875
        %877 = vdwg.mxu0
        %v878 = vand.u32 %v719, 4294901760
        %v879 = vsub.f32 %v719, %v878
        %880 = vmatpush.msra.mxu0 %v879
        %v881 = vand.u32 %v718, 4294901760
        %v882 = vsub.f32 %v718, %v881
        %883 = vmatpush.msra.mxu0 %v882
        %v884 = vand.u32 %v717, 4294901760
        %v885 = vsub.f32 %v717, %v884
        %886 = vmatpush.msra.mxu0 %v885
        %v887 = vand.u32 %v716, 4294901760
        %v888 = vsub.f32 %v716, %v887
        %889 = vmatpush.msra.mxu0 %v888
        %v890 = vand.u32 %v715, 4294901760
        %v891 = vsub.f32 %v715, %v890
        %892 = vmatpush.msra.mxu0 %v891
        %v893 = vand.u32 %v714, 4294901760
        %v894 = vsub.f32 %v714, %v893
        %895 = vmatpush.msra.mxu0 %v894
        %v896 = vand.u32 %v713, 4294901760
        %v897 = vsub.f32 %v713, %v896
        %898 = vmatpush.msra.mxu0 %v897
        %v899 = vand.u32 %v712, 4294901760
        %v900 = vsub.f32 %v712, %v899
        %901 = vmatpush.msra.mxu0 %v900
        %v902 = vand.u32 %v711, 4294901760
        %v903 = vsub.f32 %v711, %v902
        %904 = vmatpush.msra.mxu0 %v903
        %v905 = vand.u32 %v710, 4294901760
        %v906 = vsub.f32 %v710, %v905
        %907 = vmatpush.msra.mxu0 %v906
        %v908 = vand.u32 %v709, 4294901760
        %v909 = vsub.f32 %v709, %v908
        %910 = vmatpush.msra.mxu0 %v909
        %v911 = vand.u32 %v708, 4294901760
        %v912 = vsub.f32 %v708, %v911
        %913 = vmatpush.msra.mxu0 %v912
        %v914 = vand.u32 %v707, 4294901760
        %v915 = vsub.f32 %v707, %v914
        %916 = vmatpush.msra.mxu0 %v915
        %v917 = vand.u32 %v706, 4294901760
        %v918 = vsub.f32 %v706, %v917
        %919 = vmatpush.msra.mxu0 %v918
        %v920 = vand.u32 %v705, 4294901760
        %v921 = vsub.f32 %v705, %v920
        %922 = vmatpush.msra.mxu0 %v921
        %v923 = vand.u32 %v704, 4294901760
        %v924 = vsub.f32 %v704, %v923
        %925 = vmatpush.msra.mxu0 %v924
        %v926 = vand.u32 %v670, 4294901760
        %v927 = vsub.f32 %v670, %v926
        %928 = vmatmul.f32.gmra.mxu0 %v927
        %v929 = vpop.f32.mrf.mxu0
        %v930 = vadd.f32 %v872, %v929
        %v931 = vand.u32 %v671, 4294901760
        %v932 = vsub.f32 %v671, %v931
        %933 = vmatmul.f32.gmra.mxu0 %v932
        %v934 = vpop.f32.mrf.mxu0
        %v935 = vadd.f32 %v876, %v934
        %936 = vdwg.mxu0
        %v937 = vand.u32 %v719, 4294901760
        %938 = vmatpush.msra.mxu0 %v937
        %v939 = vand.u32 %v718, 4294901760
        %940 = vmatpush.msra.mxu0 %v939
        %v941 = vand.u32 %v717, 4294901760
        %942 = vmatpush.msra.mxu0 %v941
        %v943 = vand.u32 %v716, 4294901760
        %944 = vmatpush.msra.mxu0 %v943
        %v945 = vand.u32 %v715, 4294901760
        %946 = vmatpush.msra.mxu0 %v945
        %v947 = vand.u32 %v714, 4294901760
        %948 = vmatpush.msra.mxu0 %v947
        %v949 = vand.u32 %v713, 4294901760
        %950 = vmatpush.msra.mxu0 %v949
        %v951 = vand.u32 %v712, 4294901760
        %952 = vmatpush.msra.mxu0 %v951
        %v953 = vand.u32 %v711, 4294901760
        %954 = vmatpush.msra.mxu0 %v953
        %v955 = vand.u32 %v710, 4294901760
        %956 = vmatpush.msra.mxu0 %v955
        %v957 = vand.u32 %v709, 4294901760
        %958 = vmatpush.msra.mxu0 %v957
        %v959 = vand.u32 %v708, 4294901760
        %960 = vmatpush.msra.mxu0 %v959
        %v961 = vand.u32 %v707, 4294901760
        %962 = vmatpush.msra.mxu0 %v961
        %v963 = vand.u32 %v706, 4294901760
        %964 = vmatpush.msra.mxu0 %v963
        %v965 = vand.u32 %v705, 4294901760
        %966 = vmatpush.msra.mxu0 %v965
        %v967 = vand.u32 %v704, 4294901760
        %968 = vmatpush.msra.mxu0 %v967
        %v969 = vand.u32 %v670, 4294901760
        %v970 = vsub.f32 %v670, %v969
        %v971 = vand.u32 %v970, 4294901760
        %972 = vmatmul.f32.gmra.mxu0 %v971
        %v973 = vpop.f32.mrf.mxu0
        %v974 = vadd.f32 %v930, %v973
        %v975 = vand.u32 %v671, 4294901760
        %v976 = vsub.f32 %v671, %v975
        %v977 = vand.u32 %v976, 4294901760
        %978 = vmatmul.f32.gmra.mxu0 %v977
        %v979 = vpop.f32.mrf.mxu0
        %v980 = vadd.f32 %v935, %v979
        %981 = vdwg.mxu0
        %v982 = vand.u32 %v719, 4294901760
        %v983 = vsub.f32 %v719, %v982
        %v984 = vand.u32 %v983, 4294901760
        %985 = vmatpush.msra.mxu0 %v984
        %v986 = vand.u32 %v718, 4294901760
        %v987 = vsub.f32 %v718, %v986
        %v988 = vand.u32 %v987, 4294901760
        %989 = vmatpush.msra.mxu0 %v988
        %v990 = vand.u32 %v717, 4294901760
        %v991 = vsub.f32 %v717, %v990
        %v992 = vand.u32 %v991, 4294901760
        %993 = vmatpush.msra.mxu0 %v992
        %v994 = vand.u32 %v716, 4294901760
        %v995 = vsub.f32 %v716, %v994
        %v996 = vand.u32 %v995, 4294901760
        %997 = vmatpush.msra.mxu0 %v996
        %v998 = vand.u32 %v715, 4294901760
        %v999 = vsub.f32 %v715, %v998
        %v1000 = vand.u32 %v999, 4294901760
        %1001 = vmatpush.msra.mxu0 %v1000
        %v1002 = vand.u32 %v714, 4294901760
        %v1003 = vsub.f32 %v714, %v1002
        %v1004 = vand.u32 %v1003, 4294901760
        %1005 = vmatpush.msra.mxu0 %v1004
        %v1006 = vand.u32 %v713, 4294901760
        %v1007 = vsub.f32 %v713, %v1006
        %v1008 = vand.u32 %v1007, 4294901760
        %1009 = vmatpush.msra.mxu0 %v1008
        %v1010 = vand.u32 %v712, 4294901760
        %v1011 = vsub.f32 %v712, %v1010
        %v1012 = vand.u32 %v1011, 4294901760
        %1013 = vmatpush.msra.mxu0 %v1012
        %v1014 = vand.u32 %v711, 4294901760
        %v1015 = vsub.f32 %v711, %v1014
        %v1016 = vand.u32 %v1015, 4294901760
        %1017 = vmatpush.msra.mxu0 %v1016
        %v1018 = vand.u32 %v710, 4294901760
        %v1019 = vsub.f32 %v710, %v1018
        %v1020 = vand.u32 %v1019, 4294901760
        %1021 = vmatpush.msra.mxu0 %v1020
        %v1022 = vand.u32 %v709, 4294901760
        %v1023 = vsub.f32 %v709, %v1022
        %v1024 = vand.u32 %v1023, 4294901760
        %1025 = vmatpush.msra.mxu0 %v1024
        %v1026 = vand.u32 %v708, 4294901760
        %v1027 = vsub.f32 %v708, %v1026
        %v1028 = vand.u32 %v1027, 4294901760
        %1029 = vmatpush.msra.mxu0 %v1028
        %v1030 = vand.u32 %v707, 4294901760
        %v1031 = vsub.f32 %v707, %v1030
        %v1032 = vand.u32 %v1031, 4294901760
        %1033 = vmatpush.msra.mxu0 %v1032
        %v1034 = vand.u32 %v706, 4294901760
        %v1035 = vsub.f32 %v706, %v1034
        %v1036 = vand.u32 %v1035, 4294901760
        %1037 = vmatpush.msra.mxu0 %v1036
        %v1038 = vand.u32 %v705, 4294901760
        %v1039 = vsub.f32 %v705, %v1038
        %v1040 = vand.u32 %v1039, 4294901760
        %1041 = vmatpush.msra.mxu0 %v1040
        %v1042 = vand.u32 %v704, 4294901760
        %v1043 = vsub.f32 %v704, %v1042
        %v1044 = vand.u32 %v1043, 4294901760
        %1045 = vmatpush.msra.mxu0 %v1044
        %v1046 = vand.u32 %v670, 4294901760
        %1047 = vmatmul.f32.gmra.mxu0 %v1046
        %v1048 = vpop.f32.mrf.mxu0
        %v1049 = vadd.f32 %v974, %v1048
        %v1050 = vand.u32 %v671, 4294901760
        %1051 = vmatmul.f32.gmra.mxu0 %v1050
        %v1052 = vpop.f32.mrf.mxu0
        %v1053 = vadd.f32 %v980, %v1052
        %1054 = vdwg.mxu0
        %v1055 = vand.u32 %v719, 4294901760
        %1056 = vmatpush.msra.mxu0 %v1055
        %v1057 = vand.u32 %v718, 4294901760
        %1058 = vmatpush.msra.mxu0 %v1057
        %v1059 = vand.u32 %v717, 4294901760
        %1060 = vmatpush.msra.mxu0 %v1059
        %v1061 = vand.u32 %v716, 4294901760
        %1062 = vmatpush.msra.mxu0 %v1061
        %v1063 = vand.u32 %v715, 4294901760
        %1064 = vmatpush.msra.mxu0 %v1063
        %v1065 = vand.u32 %v714, 4294901760
        %1066 = vmatpush.msra.mxu0 %v1065
        %v1067 = vand.u32 %v713, 4294901760
        %1068 = vmatpush.msra.mxu0 %v1067
        %v1069 = vand.u32 %v712, 4294901760
        %1070 = vmatpush.msra.mxu0 %v1069
        %v1071 = vand.u32 %v711, 4294901760
        %1072 = vmatpush.msra.mxu0 %v1071
        %v1073 = vand.u32 %v710, 4294901760
        %1074 = vmatpush.msra.mxu0 %v1073
        %v1075 = vand.u32 %v709, 4294901760
        %1076 = vmatpush.msra.mxu0 %v1075
        %v1077 = vand.u32 %v708, 4294901760
        %1078 = vmatpush.msra.mxu0 %v1077
        %v1079 = vand.u32 %v707, 4294901760
        %1080 = vmatpush.msra.mxu0 %v1079
        %v1081 = vand.u32 %v706, 4294901760
        %1082 = vmatpush.msra.mxu0 %v1081
        %v1083 = vand.u32 %v705, 4294901760
        %1084 = vmatpush.msra.mxu0 %v1083
        %v1085 = vand.u32 %v704, 4294901760
        %1086 = vmatpush.msra.mxu0 %v1085
        %v1087 = vand.u32 %v670, 4294901760
        %1088 = vmatmul.f32.gmra.mxu0 %v1087
        %v1089 = vpop.f32.mrf.mxu0
        %v1090 = vadd.f32 %v1049, %v1089
        %v1091 = vand.u32 %v671, 4294901760
        %1092 = vmatmul.f32.gmra.mxu0 %v1091
        %v1093 = vpop.f32.mrf.mxu0
        %v1094 = vadd.f32 %v1053, %v1093
        %1095 = vdwg.mxu0
        %vm1096 = vcmp.ge.f32.partialorder %v1090, 0.0
        %vm1097 = vcmp.ge.f32.partialorder %v1094, 0.0
        %v1098 = vmul.f32 %v1090, 0.01
        %v1099 = vmul.f32 %v1094, 0.01
        %v1100 = vsel %vm1096, %v1090, %v1098
        %v1101 = vsel %vm1097, %v1094, %v1099
        %v1102 = vld [vmem:[%s580] sm:$0xff]
        %v1103 = vld [vmem:[%s580 + $0x8] sm:$0xff]
        %v1104 = vld [vmem:[%s580 + $0x10] sm:$0xff]
        %v1105 = vld [vmem:[%s580 + $0x18] sm:$0xff]
        %v1106 = vld [vmem:[%s580 + $0x20] sm:$0xff]
        %v1107 = vld [vmem:[%s580 + $0x28] sm:$0xff]
        %v1108 = vld [vmem:[%s580 + $0x30] sm:$0xff]
        %v1109 = vld [vmem:[%s580 + $0x38] sm:$0xff]
        %v1110 = vld [vmem:[%s580 + $0x40] sm:$0xff]
        %v1111 = vld [vmem:[%s580 + $0x48] sm:$0xff]
        %v1112 = vld [vmem:[%s580 + $0x50] sm:$0xff]
        %v1113 = vld [vmem:[%s580 + $0x58] sm:$0xff]
        %v1114 = vld [vmem:[%s580 + $0x60] sm:$0xff]
        %v1115 = vld [vmem:[%s580 + $0x68] sm:$0xff]
        %v1116 = vld [vmem:[%s580 + $0x70] sm:$0xff]
        %v1117 = vld [vmem:[%s580 + $0x78] sm:$0xff]
        %v1118 = vld [vmem:[%s659] sm:$0x1]
        %v1120 = vperm.slane %v1118, 0
        %v1122 = vand.u32 %v1117, 4294901760
        %1123 = vmatpush.msra.mxu0 %v1122
        %v1124 = vand.u32 %v1116, 4294901760
        %1125 = vmatpush.msra.mxu0 %v1124
        %v1126 = vand.u32 %v1115, 4294901760
        %1127 = vmatpush.msra.mxu0 %v1126
        %v1128 = vand.u32 %v1114, 4294901760
        %1129 = vmatpush.msra.mxu0 %v1128
        %v1130 = vand.u32 %v1113, 4294901760
        %1131 = vmatpush.msra.mxu0 %v1130
        %v1132 = vand.u32 %v1112, 4294901760
        %1133 = vmatpush.msra.mxu0 %v1132
        %v1134 = vand.u32 %v1111, 4294901760
        %1135 = vmatpush.msra.mxu0 %v1134
        %v1136 = vand.u32 %v1110, 4294901760
        %1137 = vmatpush.msra.mxu0 %v1136
        %v1138 = vand.u32 %v1109, 4294901760
        %1139 = vmatpush.msra.mxu0 %v1138
        %v1140 = vand.u32 %v1108, 4294901760
        %1141 = vmatpush.msra.mxu0 %v1140
        %v1142 = vand.u32 %v1107, 4294901760
        %1143 = vmatpush.msra.mxu0 %v1142
        %v1144 = vand.u32 %v1106, 4294901760
        %1145 = vmatpush.msra.mxu0 %v1144
        %v1146 = vand.u32 %v1105, 4294901760
        %1147 = vmatpush.msra.mxu0 %v1146
        %v1148 = vand.u32 %v1104, 4294901760
        %1149 = vmatpush.msra.mxu0 %v1148
        %v1150 = vand.u32 %v1103, 4294901760
        %1151 = vmatpush.msra.mxu0 %v1150
        %v1152 = vand.u32 %v1102, 4294901760
        %1153 = vmatpush.msra.mxu0 %v1152
        %v1154 = vand.u32 %v672, 4294901760
        %v1155 = vsub.f32 %v672, %v1154
        %v1156 = vand.u32 %v1155, 4294901760
        %v1157 = vsub.f32 %v1155, %v1156
        %v1158 = vand.u32 %v1157, 4294901760
        %1159 = vmatmul.f32.gmra.mxu0 %v1158
        %v1160 = vpop.f32.mrf.mxu0
        %v1161 = vadd.f32 %v1120, %v1160
        %v1162 = vand.u32 %v673, 4294901760
        %v1163 = vsub.f32 %v673, %v1162
        %v1164 = vand.u32 %v1163, 4294901760
        %v1165 = vsub.f32 %v1163, %v1164
        %v1166 = vand.u32 %v1165, 4294901760
        %1167 = vmatmul.f32.gmra.mxu0 %v1166
        %v1168 = vpop.f32.mrf.mxu0
        %v1169 = vadd.f32 %v1120, %v1168
        %v1170 = vand.u32 %v674, 4294901760
        %v1171 = vsub.f32 %v674, %v1170
        %v1172 = vand.u32 %v1171, 4294901760
        %v1173 = vsub.f32 %v1171, %v1172
        %v1174 = vand.u32 %v1173, 4294901760
        %1175 = vmatmul.f32.gmra.mxu0 %v1174
        %v1176 = vpop.f32.mrf.mxu0
        %v1177 = vadd.f32 %v1120, %v1176
        %v1178 = vand.u32 %v675, 4294901760
        %v1179 = vsub.f32 %v675, %v1178
        %v1180 = vand.u32 %v1179, 4294901760
        %v1181 = vsub.f32 %v1179, %v1180
        %v1182 = vand.u32 %v1181, 4294901760
        %1183 = vmatmul.f32.gmra.mxu0 %v1182
        %v1184 = vpop.f32.mrf.mxu0
        %v1185 = vadd.f32 %v1120, %v1184
        %v1186 = vand.u32 %v676, 4294901760
        %v1187 = vsub.f32 %v676, %v1186
        %v1188 = vand.u32 %v1187, 4294901760
        %v1189 = vsub.f32 %v1187, %v1188
        %v1190 = vand.u32 %v1189, 4294901760
        %1191 = vmatmul.f32.gmra.mxu0 %v1190
        %v1192 = vpop.f32.mrf.mxu0
        %v1193 = vadd.f32 %v1120, %v1192
        %v1194 = vand.u32 %v677, 4294901760
        %v1195 = vsub.f32 %v677, %v1194
        %v1196 = vand.u32 %v1195, 4294901760
        %v1197 = vsub.f32 %v1195, %v1196
        %v1198 = vand.u32 %v1197, 4294901760
        %1199 = vmatmul.f32.gmra.mxu0 %v1198
        %v1200 = vpop.f32.mrf.mxu0
        %v1201 = vadd.f32 %v1120, %v1200
        %v1202 = vand.u32 %v678, 4294901760
        %v1203 = vsub.f32 %v678, %v1202
        %v1204 = vand.u32 %v1203, 4294901760
        %v1205 = vsub.f32 %v1203, %v1204
        %v1206 = vand.u32 %v1205, 4294901760
        %1207 = vmatmul.f32.gmra.mxu0 %v1206
        %v1208 = vpop.f32.mrf.mxu0
        %v1209 = vadd.f32 %v1120, %v1208
        %v1210 = vand.u32 %v679, 4294901760
        %v1211 = vsub.f32 %v679, %v1210
        %v1212 = vand.u32 %v1211, 4294901760
        %v1213 = vsub.f32 %v1211, %v1212
        %v1214 = vand.u32 %v1213, 4294901760
        %1215 = vmatmul.f32.gmra.mxu0 %v1214
        %v1216 = vpop.f32.mrf.mxu0
        %v1217 = vadd.f32 %v1120, %v1216
        %v1218 = vand.u32 %v680, 4294901760
        %v1219 = vsub.f32 %v680, %v1218
        %v1220 = vand.u32 %v1219, 4294901760
        %v1221 = vsub.f32 %v1219, %v1220
        %v1222 = vand.u32 %v1221, 4294901760
        %1223 = vmatmul.f32.gmra.mxu0 %v1222
        %v1224 = vpop.f32.mrf.mxu0
        %v1225 = vadd.f32 %v1120, %v1224
        %v1226 = vand.u32 %v681, 4294901760
        %v1227 = vsub.f32 %v681, %v1226
        %v1228 = vand.u32 %v1227, 4294901760
        %v1229 = vsub.f32 %v1227, %v1228
        %v1230 = vand.u32 %v1229, 4294901760
        %1231 = vmatmul.f32.gmra.mxu0 %v1230
        %v1232 = vpop.f32.mrf.mxu0
        %v1233 = vadd.f32 %v1120, %v1232
        %v1234 = vand.u32 %v682, 4294901760
        %v1235 = vsub.f32 %v682, %v1234
        %v1236 = vand.u32 %v1235, 4294901760
        %v1237 = vsub.f32 %v1235, %v1236
        %v1238 = vand.u32 %v1237, 4294901760
        %1239 = vmatmul.f32.gmra.mxu0 %v1238
        %v1240 = vpop.f32.mrf.mxu0
        %v1241 = vadd.f32 %v1120, %v1240
        %v1242 = vand.u32 %v683, 4294901760
        %v1243 = vsub.f32 %v683, %v1242
        %v1244 = vand.u32 %v1243, 4294901760
        %v1245 = vsub.f32 %v1243, %v1244
        %v1246 = vand.u32 %v1245, 4294901760
        %1247 = vmatmul.f32.gmra.mxu0 %v1246
        %v1248 = vpop.f32.mrf.mxu0
        %v1249 = vadd.f32 %v1120, %v1248
        %v1250 = vand.u32 %v684, 4294901760
        %v1251 = vsub.f32 %v684, %v1250
        %v1252 = vand.u32 %v1251, 4294901760
        %v1253 = vsub.f32 %v1251, %v1252
        %v1254 = vand.u32 %v1253, 4294901760
        %1255 = vmatmul.f32.gmra.mxu0 %v1254
        %v1256 = vpop.f32.mrf.mxu0
        %v1257 = vadd.f32 %v1120, %v1256
        %v1258 = vand.u32 %v685, 4294901760
        %v1259 = vsub.f32 %v685, %v1258
        %v1260 = vand.u32 %v1259, 4294901760
        %v1261 = vsub.f32 %v1259, %v1260
        %v1262 = vand.u32 %v1261, 4294901760
        %1263 = vmatmul.f32.gmra.mxu0 %v1262
        %v1264 = vpop.f32.mrf.mxu0
        %v1265 = vadd.f32 %v1120, %v1264
        %v1266 = vand.u32 %v686, 4294901760
        %v1267 = vsub.f32 %v686, %v1266
        %v1268 = vand.u32 %v1267, 4294901760
        %v1269 = vsub.f32 %v1267, %v1268
        %v1270 = vand.u32 %v1269, 4294901760
        %1271 = vmatmul.f32.gmra.mxu0 %v1270
        %v1272 = vpop.f32.mrf.mxu0
        %v1273 = vadd.f32 %v1120, %v1272
        %v1274 = vand.u32 %v687, 4294901760
        %v1275 = vsub.f32 %v687, %v1274
        %v1276 = vand.u32 %v1275, 4294901760
        %v1277 = vsub.f32 %v1275, %v1276
        %v1278 = vand.u32 %v1277, 4294901760
        %1279 = vmatmul.f32.gmra.mxu0 %v1278
        %v1280 = vpop.f32.mrf.mxu0
        %v1281 = vadd.f32 %v1120, %v1280
        %1282 = vdwg.mxu0
        %v1283 = vand.u32 %v1117, 4294901760
        %v1284 = vsub.f32 %v1117, %v1283
        %v1285 = vand.u32 %v1284, 4294901760
        %v1286 = vsub.f32 %v1284, %v1285
        %v1287 = vand.u32 %v1286, 4294901760
        %1288 = vmatpush.msra.mxu0 %v1287
        %v1289 = vand.u32 %v1116, 4294901760
        %v1290 = vsub.f32 %v1116, %v1289
        %v1291 = vand.u32 %v1290, 4294901760
        %v1292 = vsub.f32 %v1290, %v1291
        %v1293 = vand.u32 %v1292, 4294901760
        %1294 = vmatpush.msra.mxu0 %v1293
        %v1295 = vand.u32 %v1115, 4294901760
        %v1296 = vsub.f32 %v1115, %v1295
        %v1297 = vand.u32 %v1296, 4294901760
        %v1298 = vsub.f32 %v1296, %v1297
        %v1299 = vand.u32 %v1298, 4294901760
        %1300 = vmatpush.msra.mxu0 %v1299
        %v1301 = vand.u32 %v1114, 4294901760
        %v1302 = vsub.f32 %v1114, %v1301
        %v1303 = vand.u32 %v1302, 4294901760
        %v1304 = vsub.f32 %v1302, %v1303
        %v1305 = vand.u32 %v1304, 4294901760
        %1306 = vmatpush.msra.mxu0 %v1305
        %v1307 = vand.u32 %v1113, 4294901760
        %v1308 = vsub.f32 %v1113, %v1307
        %v1309 = vand.u32 %v1308, 4294901760
        %v1310 = vsub.f32 %v1308, %v1309
        %v1311 = vand.u32 %v1310, 4294901760
        %1312 = vmatpush.msra.mxu0 %v1311
        %v1313 = vand.u32 %v1112, 4294901760
        %v1314 = vsub.f32 %v1112, %v1313
        %v1315 = vand.u32 %v1314, 4294901760
        %v1316 = vsub.f32 %v1314, %v1315
        %v1317 = vand.u32 %v1316, 4294901760
        %1318 = vmatpush.msra.mxu0 %v1317
        %v1319 = vand.u32 %v1111, 4294901760
        %v1320 = vsub.f32 %v1111, %v1319
        %v1321 = vand.u32 %v1320, 4294901760
        %v1322 = vsub.f32 %v1320, %v1321
        %v1323 = vand.u32 %v1322, 4294901760
        %1324 = vmatpush.msra.mxu0 %v1323
        %v1325 = vand.u32 %v1110, 4294901760
        %v1326 = vsub.f32 %v1110, %v1325
        %v1327 = vand.u32 %v1326, 4294901760
        %v1328 = vsub.f32 %v1326, %v1327
        %v1329 = vand.u32 %v1328, 4294901760
        %1330 = vmatpush.msra.mxu0 %v1329
        %v1331 = vand.u32 %v1109, 4294901760
        %v1332 = vsub.f32 %v1109, %v1331
        %v1333 = vand.u32 %v1332, 4294901760
        %v1334 = vsub.f32 %v1332, %v1333
        %v1335 = vand.u32 %v1334, 4294901760
        %1336 = vmatpush.msra.mxu0 %v1335
        %v1337 = vand.u32 %v1108, 4294901760
        %v1338 = vsub.f32 %v1108, %v1337
        %v1339 = vand.u32 %v1338, 4294901760
        %v1340 = vsub.f32 %v1338, %v1339
        %v1341 = vand.u32 %v1340, 4294901760
        %1342 = vmatpush.msra.mxu0 %v1341
        %v1343 = vand.u32 %v1107, 4294901760
        %v1344 = vsub.f32 %v1107, %v1343
        %v1345 = vand.u32 %v1344, 4294901760
        %v1346 = vsub.f32 %v1344, %v1345
        %v1347 = vand.u32 %v1346, 4294901760
        %1348 = vmatpush.msra.mxu0 %v1347
        %v1349 = vand.u32 %v1106, 4294901760
        %v1350 = vsub.f32 %v1106, %v1349
        %v1351 = vand.u32 %v1350, 4294901760
        %v1352 = vsub.f32 %v1350, %v1351
        %v1353 = vand.u32 %v1352, 4294901760
        %1354 = vmatpush.msra.mxu0 %v1353
        %v1355 = vand.u32 %v1105, 4294901760
        %v1356 = vsub.f32 %v1105, %v1355
        %v1357 = vand.u32 %v1356, 4294901760
        %v1358 = vsub.f32 %v1356, %v1357
        %v1359 = vand.u32 %v1358, 4294901760
        %1360 = vmatpush.msra.mxu0 %v1359
        %v1361 = vand.u32 %v1104, 4294901760
        %v1362 = vsub.f32 %v1104, %v1361
        %v1363 = vand.u32 %v1362, 4294901760
        %v1364 = vsub.f32 %v1362, %v1363
        %v1365 = vand.u32 %v1364, 4294901760
        %1366 = vmatpush.msra.mxu0 %v1365
        %v1367 = vand.u32 %v1103, 4294901760
        %v1368 = vsub.f32 %v1103, %v1367
        %v1369 = vand.u32 %v1368, 4294901760
        %v1370 = vsub.f32 %v1368, %v1369
        %v1371 = vand.u32 %v1370, 4294901760
        %1372 = vmatpush.msra.mxu0 %v1371
        %v1373 = vand.u32 %v1102, 4294901760
        %v1374 = vsub.f32 %v1102, %v1373
        %v1375 = vand.u32 %v1374, 4294901760
        %v1376 = vsub.f32 %v1374, %v1375
        %v1377 = vand.u32 %v1376, 4294901760
        %1378 = vmatpush.msra.mxu0 %v1377
        %v1379 = vand.u32 %v672, 4294901760
        %1380 = vmatmul.f32.gmra.mxu0 %v1379
        %v1381 = vpop.f32.mrf.mxu0
        %v1382 = vadd.f32 %v1161, %v1381
        %v1383 = vand.u32 %v673, 4294901760
        %1384 = vmatmul.f32.gmra.mxu0 %v1383
        %v1385 = vpop.f32.mrf.mxu0
        %v1386 = vadd.f32 %v1169, %v1385
        %v1387 = vand.u32 %v674, 4294901760
        %1388 = vmatmul.f32.gmra.mxu0 %v1387
        %v1389 = vpop.f32.mrf.mxu0
        %v1390 = vadd.f32 %v1177, %v1389
        %v1391 = vand.u32 %v675, 4294901760
        %1392 = vmatmul.f32.gmra.mxu0 %v1391
        %v1393 = vpop.f32.mrf.mxu0
        %v1394 = vadd.f32 %v1185, %v1393
        %v1395 = vand.u32 %v676, 4294901760
        %1396 = vmatmul.f32.gmra.mxu0 %v1395
        %v1397 = vpop.f32.mrf.mxu0
        %v1398 = vadd.f32 %v1193, %v1397
        %v1399 = vand.u32 %v677, 4294901760
        %1400 = vmatmul.f32.gmra.mxu0 %v1399
        %v1401 = vpop.f32.mrf.mxu0
        %v1402 = vadd.f32 %v1201, %v1401
        %v1403 = vand.u32 %v678, 4294901760
        %1404 = vmatmul.f32.gmra.mxu0 %v1403
        %v1405 = vpop.f32.mrf.mxu0
        %v1406 = vadd.f32 %v1209, %v1405
        %v1407 = vand.u32 %v679, 4294901760
        %1408 = vmatmul.f32.gmra.mxu0 %v1407
        %v1409 = vpop.f32.mrf.mxu0
        %v1410 = vadd.f32 %v1217, %v1409
        %v1411 = vand.u32 %v680, 4294901760
        %1412 = vmatmul.f32.gmra.mxu0 %v1411
        %v1413 = vpop.f32.mrf.mxu0
        %v1414 = vadd.f32 %v1225, %v1413
        %v1415 = vand.u32 %v681, 4294901760
        %1416 = vmatmul.f32.gmra.mxu0 %v1415
        %v1417 = vpop.f32.mrf.mxu0
        %v1418 = vadd.f32 %v1233, %v1417
        %v1419 = vand.u32 %v682, 4294901760
        %1420 = vmatmul.f32.gmra.mxu0 %v1419
        %v1421 = vpop.f32.mrf.mxu0
        %v1422 = vadd.f32 %v1241, %v1421
        %v1423 = vand.u32 %v683, 4294901760
        %1424 = vmatmul.f32.gmra.mxu0 %v1423
        %v1425 = vpop.f32.mrf.mxu0
        %v1426 = vadd.f32 %v1249, %v1425
        %v1427 = vand.u32 %v684, 4294901760
        %1428 = vmatmul.f32.gmra.mxu0 %v1427
        %v1429 = vpop.f32.mrf.mxu0
        %v1430 = vadd.f32 %v1257, %v1429
        %v1431 = vand.u32 %v685, 4294901760
        %1432 = vmatmul.f32.gmra.mxu0 %v1431
        %v1433 = vpop.f32.mrf.mxu0
        %v1434 = vadd.f32 %v1265, %v1433
        %v1435 = vand.u32 %v686, 4294901760
        %1436 = vmatmul.f32.gmra.mxu0 %v1435
        %v1437 = vpop.f32.mrf.mxu0
        %v1438 = vadd.f32 %v1273, %v1437
        %v1439 = vand.u32 %v687, 4294901760
        %1440 = vmatmul.f32.gmra.mxu0 %v1439
        %v1441 = vpop.f32.mrf.mxu0
        %v1442 = vadd.f32 %v1281, %v1441
        %1443 = vdwg.mxu0
        %v1444 = vand.u32 %v1117, 4294901760
        %v1445 = vsub.f32 %v1117, %v1444
        %1446 = vmatpush.msra.mxu0 %v1445
        %v1447 = vand.u32 %v1116, 4294901760
        %v1448 = vsub.f32 %v1116, %v1447
        %1449 = vmatpush.msra.mxu0 %v1448
        %v1450 = vand.u32 %v1115, 4294901760
        %v1451 = vsub.f32 %v1115, %v1450
        %1452 = vmatpush.msra.mxu0 %v1451
        %v1453 = vand.u32 %v1114, 4294901760
        %v1454 = vsub.f32 %v1114, %v1453
        %1455 = vmatpush.msra.mxu0 %v1454
        %v1456 = vand.u32 %v1113, 4294901760
        %v1457 = vsub.f32 %v1113, %v1456
        %1458 = vmatpush.msra.mxu0 %v1457
        %v1459 = vand.u32 %v1112, 4294901760
        %v1460 = vsub.f32 %v1112, %v1459
        %1461 = vmatpush.msra.mxu0 %v1460
        %v1462 = vand.u32 %v1111, 4294901760
        %v1463 = vsub.f32 %v1111, %v1462
        %1464 = vmatpush.msra.mxu0 %v1463
        %v1465 = vand.u32 %v1110, 4294901760
        %v1466 = vsub.f32 %v1110, %v1465
        %1467 = vmatpush.msra.mxu0 %v1466
        %v1468 = vand.u32 %v1109, 4294901760
        %v1469 = vsub.f32 %v1109, %v1468
        %1470 = vmatpush.msra.mxu0 %v1469
        %v1471 = vand.u32 %v1108, 4294901760
        %v1472 = vsub.f32 %v1108, %v1471
        %1473 = vmatpush.msra.mxu0 %v1472
        %v1474 = vand.u32 %v1107, 4294901760
        %v1475 = vsub.f32 %v1107, %v1474
        %1476 = vmatpush.msra.mxu0 %v1475
        %v1477 = vand.u32 %v1106, 4294901760
        %v1478 = vsub.f32 %v1106, %v1477
        %1479 = vmatpush.msra.mxu0 %v1478
        %v1480 = vand.u32 %v1105, 4294901760
        %v1481 = vsub.f32 %v1105, %v1480
        %1482 = vmatpush.msra.mxu0 %v1481
        %v1483 = vand.u32 %v1104, 4294901760
        %v1484 = vsub.f32 %v1104, %v1483
        %1485 = vmatpush.msra.mxu0 %v1484
        %v1486 = vand.u32 %v1103, 4294901760
        %v1487 = vsub.f32 %v1103, %v1486
        %1488 = vmatpush.msra.mxu0 %v1487
        %v1489 = vand.u32 %v1102, 4294901760
        %v1490 = vsub.f32 %v1102, %v1489
        %1491 = vmatpush.msra.mxu0 %v1490
        %v1492 = vand.u32 %v672, 4294901760
        %v1493 = vsub.f32 %v672, %v1492
        %1494 = vmatmul.f32.gmra.mxu0 %v1493
        %v1495 = vpop.f32.mrf.mxu0
        %v1496 = vadd.f32 %v1382, %v1495
        %v1497 = vand.u32 %v673, 4294901760
        %v1498 = vsub.f32 %v673, %v1497
        %1499 = vmatmul.f32.gmra.mxu0 %v1498
        %v1500 = vpop.f32.mrf.mxu0
        %v1501 = vadd.f32 %v1386, %v1500
        %v1502 = vand.u32 %v674, 4294901760
        %v1503 = vsub.f32 %v674, %v1502
        %1504 = vmatmul.f32.gmra.mxu0 %v1503
        %v1505 = vpop.f32.mrf.mxu0
        %v1506 = vadd.f32 %v1390, %v1505
        %v1507 = vand.u32 %v675, 4294901760
        %v1508 = vsub.f32 %v675, %v1507
        %1509 = vmatmul.f32.gmra.mxu0 %v1508
        %v1510 = vpop.f32.mrf.mxu0
        %v1511 = vadd.f32 %v1394, %v1510
        %v1512 = vand.u32 %v676, 4294901760
        %v1513 = vsub.f32 %v676, %v1512
        %1514 = vmatmul.f32.gmra.mxu0 %v1513
        %v1515 = vpop.f32.mrf.mxu0
        %v1516 = vadd.f32 %v1398, %v1515
        %v1517 = vand.u32 %v677, 4294901760
        %v1518 = vsub.f32 %v677, %v1517
        %1519 = vmatmul.f32.gmra.mxu0 %v1518
        %v1520 = vpop.f32.mrf.mxu0
        %v1521 = vadd.f32 %v1402, %v1520
        %v1522 = vand.u32 %v678, 4294901760
        %v1523 = vsub.f32 %v678, %v1522
        %1524 = vmatmul.f32.gmra.mxu0 %v1523
        %v1525 = vpop.f32.mrf.mxu0
        %v1526 = vadd.f32 %v1406, %v1525
        %v1527 = vand.u32 %v679, 4294901760
        %v1528 = vsub.f32 %v679, %v1527
        %1529 = vmatmul.f32.gmra.mxu0 %v1528
        %v1530 = vpop.f32.mrf.mxu0
        %v1531 = vadd.f32 %v1410, %v1530
        %v1532 = vand.u32 %v680, 4294901760
        %v1533 = vsub.f32 %v680, %v1532
        %1534 = vmatmul.f32.gmra.mxu0 %v1533
        %v1535 = vpop.f32.mrf.mxu0
        %v1536 = vadd.f32 %v1414, %v1535
        %v1537 = vand.u32 %v681, 4294901760
        %v1538 = vsub.f32 %v681, %v1537
        %1539 = vmatmul.f32.gmra.mxu0 %v1538
        %v1540 = vpop.f32.mrf.mxu0
        %v1541 = vadd.f32 %v1418, %v1540
        %v1542 = vand.u32 %v682, 4294901760
        %v1543 = vsub.f32 %v682, %v1542
        %1544 = vmatmul.f32.gmra.mxu0 %v1543
        %v1545 = vpop.f32.mrf.mxu0
        %v1546 = vadd.f32 %v1422, %v1545
        %v1547 = vand.u32 %v683, 4294901760
        %v1548 = vsub.f32 %v683, %v1547
        %1549 = vmatmul.f32.gmra.mxu0 %v1548
        %v1550 = vpop.f32.mrf.mxu0
        %v1551 = vadd.f32 %v1426, %v1550
        %v1552 = vand.u32 %v684, 4294901760
        %v1553 = vsub.f32 %v684, %v1552
        %1554 = vmatmul.f32.gmra.mxu0 %v1553
        %v1555 = vpop.f32.mrf.mxu0
        %v1556 = vadd.f32 %v1430, %v1555
        %v1557 = vand.u32 %v685, 4294901760
        %v1558 = vsub.f32 %v685, %v1557
        %1559 = vmatmul.f32.gmra.mxu0 %v1558
        %v1560 = vpop.f32.mrf.mxu0
        %v1561 = vadd.f32 %v1434, %v1560
        %v1562 = vand.u32 %v686, 4294901760
        %v1563 = vsub.f32 %v686, %v1562
        %1564 = vmatmul.f32.gmra.mxu0 %v1563
        %v1565 = vpop.f32.mrf.mxu0
        %v1566 = vadd.f32 %v1438, %v1565
        %v1567 = vand.u32 %v687, 4294901760
        %v1568 = vsub.f32 %v687, %v1567
        %1569 = vmatmul.f32.gmra.mxu0 %v1568
        %v1570 = vpop.f32.mrf.mxu0
        %v1571 = vadd.f32 %v1442, %v1570
        %1572 = vdwg.mxu0
        %v1573 = vand.u32 %v1117, 4294901760
        %1574 = vmatpush.msra.mxu0 %v1573
        %v1575 = vand.u32 %v1116, 4294901760
        %1576 = vmatpush.msra.mxu0 %v1575
        %v1577 = vand.u32 %v1115, 4294901760
        %1578 = vmatpush.msra.mxu0 %v1577
        %v1579 = vand.u32 %v1114, 4294901760
        %1580 = vmatpush.msra.mxu0 %v1579
        %v1581 = vand.u32 %v1113, 4294901760
        %1582 = vmatpush.msra.mxu0 %v1581
        %v1583 = vand.u32 %v1112, 4294901760
        %1584 = vmatpush.msra.mxu0 %v1583
        %v1585 = vand.u32 %v1111, 4294901760
        %1586 = vmatpush.msra.mxu0 %v1585
        %v1587 = vand.u32 %v1110, 4294901760
        %1588 = vmatpush.msra.mxu0 %v1587
        %v1589 = vand.u32 %v1109, 4294901760
        %1590 = vmatpush.msra.mxu0 %v1589
        %v1591 = vand.u32 %v1108, 4294901760
        %1592 = vmatpush.msra.mxu0 %v1591
        %v1593 = vand.u32 %v1107, 4294901760
        %1594 = vmatpush.msra.mxu0 %v1593
        %v1595 = vand.u32 %v1106, 4294901760
        %1596 = vmatpush.msra.mxu0 %v1595
        %v1597 = vand.u32 %v1105, 4294901760
        %1598 = vmatpush.msra.mxu0 %v1597
        %v1599 = vand.u32 %v1104, 4294901760
        %1600 = vmatpush.msra.mxu0 %v1599
        %v1601 = vand.u32 %v1103, 4294901760
        %1602 = vmatpush.msra.mxu0 %v1601
        %v1603 = vand.u32 %v1102, 4294901760
        %1604 = vmatpush.msra.mxu0 %v1603
        %v1605 = vand.u32 %v672, 4294901760
        %v1606 = vsub.f32 %v672, %v1605
        %v1607 = vand.u32 %v1606, 4294901760
        %1608 = vmatmul.f32.gmra.mxu0 %v1607
        %v1609 = vpop.f32.mrf.mxu0
        %v1610 = vadd.f32 %v1496, %v1609
        %v1611 = vand.u32 %v673, 4294901760
        %v1612 = vsub.f32 %v673, %v1611
        %v1613 = vand.u32 %v1612, 4294901760
        %1614 = vmatmul.f32.gmra.mxu0 %v1613
        %v1615 = vpop.f32.mrf.mxu0
        %v1616 = vadd.f32 %v1501, %v1615
        %v1617 = vand.u32 %v674, 4294901760
        %v1618 = vsub.f32 %v674, %v1617
        %v1619 = vand.u32 %v1618, 4294901760
        %1620 = vmatmul.f32.gmra.mxu0 %v1619
        %v1621 = vpop.f32.mrf.mxu0
        %v1622 = vadd.f32 %v1506, %v1621
        %v1623 = vand.u32 %v675, 4294901760
        %v1624 = vsub.f32 %v675, %v1623
        %v1625 = vand.u32 %v1624, 4294901760
        %1626 = vmatmul.f32.gmra.mxu0 %v1625
        %v1627 = vpop.f32.mrf.mxu0
        %v1628 = vadd.f32 %v1511, %v1627
        %v1629 = vand.u32 %v676, 4294901760
        %v1630 = vsub.f32 %v676, %v1629
        %v1631 = vand.u32 %v1630, 4294901760
        %1632 = vmatmul.f32.gmra.mxu0 %v1631
        %v1633 = vpop.f32.mrf.mxu0
        %v1634 = vadd.f32 %v1516, %v1633
        %v1635 = vand.u32 %v677, 4294901760
        %v1636 = vsub.f32 %v677, %v1635
        %v1637 = vand.u32 %v1636, 4294901760
        %1638 = vmatmul.f32.gmra.mxu0 %v1637
        %v1639 = vpop.f32.mrf.mxu0
        %v1640 = vadd.f32 %v1521, %v1639
        %v1641 = vand.u32 %v678, 4294901760
        %v1642 = vsub.f32 %v678, %v1641
        %v1643 = vand.u32 %v1642, 4294901760
        %1644 = vmatmul.f32.gmra.mxu0 %v1643
        %v1645 = vpop.f32.mrf.mxu0
        %v1646 = vadd.f32 %v1526, %v1645
        %v1647 = vand.u32 %v679, 4294901760
        %v1648 = vsub.f32 %v679, %v1647
        %v1649 = vand.u32 %v1648, 4294901760
        %1650 = vmatmul.f32.gmra.mxu0 %v1649
        %v1651 = vpop.f32.mrf.mxu0
        %v1652 = vadd.f32 %v1531, %v1651
        %v1653 = vand.u32 %v680, 4294901760
        %v1654 = vsub.f32 %v680, %v1653
        %v1655 = vand.u32 %v1654, 4294901760
        %1656 = vmatmul.f32.gmra.mxu0 %v1655
        %v1657 = vpop.f32.mrf.mxu0
        %v1658 = vadd.f32 %v1536, %v1657
        %v1659 = vand.u32 %v681, 4294901760
        %v1660 = vsub.f32 %v681, %v1659
        %v1661 = vand.u32 %v1660, 4294901760
        %1662 = vmatmul.f32.gmra.mxu0 %v1661
        %v1663 = vpop.f32.mrf.mxu0
        %v1664 = vadd.f32 %v1541, %v1663
        %v1665 = vand.u32 %v682, 4294901760
        %v1666 = vsub.f32 %v682, %v1665
        %v1667 = vand.u32 %v1666, 4294901760
        %1668 = vmatmul.f32.gmra.mxu0 %v1667
        %v1669 = vpop.f32.mrf.mxu0
        %v1670 = vadd.f32 %v1546, %v1669
        %v1671 = vand.u32 %v683, 4294901760
        %v1672 = vsub.f32 %v683, %v1671
        %v1673 = vand.u32 %v1672, 4294901760
        %1674 = vmatmul.f32.gmra.mxu0 %v1673
        %v1675 = vpop.f32.mrf.mxu0
        %v1676 = vadd.f32 %v1551, %v1675
        %v1677 = vand.u32 %v684, 4294901760
        %v1678 = vsub.f32 %v684, %v1677
        %v1679 = vand.u32 %v1678, 4294901760
        %1680 = vmatmul.f32.gmra.mxu0 %v1679
        %v1681 = vpop.f32.mrf.mxu0
        %v1682 = vadd.f32 %v1556, %v1681
        %v1683 = vand.u32 %v685, 4294901760
        %v1684 = vsub.f32 %v685, %v1683
        %v1685 = vand.u32 %v1684, 4294901760
        %1686 = vmatmul.f32.gmra.mxu0 %v1685
        %v1687 = vpop.f32.mrf.mxu0
        %v1688 = vadd.f32 %v1561, %v1687
        %v1689 = vand.u32 %v686, 4294901760
        %v1690 = vsub.f32 %v686, %v1689
        %v1691 = vand.u32 %v1690, 4294901760
        %1692 = vmatmul.f32.gmra.mxu0 %v1691
        %v1693 = vpop.f32.mrf.mxu0
        %v1694 = vadd.f32 %v1566, %v1693
        %v1695 = vand.u32 %v687, 4294901760
        %v1696 = vsub.f32 %v687, %v1695
        %v1697 = vand.u32 %v1696, 4294901760
        %1698 = vmatmul.f32.gmra.mxu0 %v1697
        %v1699 = vpop.f32.mrf.mxu0
        %v1700 = vadd.f32 %v1571, %v1699
        %1701 = vdwg.mxu0
        %v1702 = vand.u32 %v1117, 4294901760
        %v1703 = vsub.f32 %v1117, %v1702
        %v1704 = vand.u32 %v1703, 4294901760
        %1705 = vmatpush.msra.mxu0 %v1704
        %v1706 = vand.u32 %v1116, 4294901760
        %v1707 = vsub.f32 %v1116, %v1706
        %v1708 = vand.u32 %v1707, 4294901760
        %1709 = vmatpush.msra.mxu0 %v1708
        %v1710 = vand.u32 %v1115, 4294901760
        %v1711 = vsub.f32 %v1115, %v1710
        %v1712 = vand.u32 %v1711, 4294901760
        %1713 = vmatpush.msra.mxu0 %v1712
        %v1714 = vand.u32 %v1114, 4294901760
        %v1715 = vsub.f32 %v1114, %v1714
        %v1716 = vand.u32 %v1715, 4294901760
        %1717 = vmatpush.msra.mxu0 %v1716
        %v1718 = vand.u32 %v1113, 4294901760
        %v1719 = vsub.f32 %v1113, %v1718
        %v1720 = vand.u32 %v1719, 4294901760
        %1721 = vmatpush.msra.mxu0 %v1720
        %v1722 = vand.u32 %v1112, 4294901760
        %v1723 = vsub.f32 %v1112, %v1722
        %v1724 = vand.u32 %v1723, 4294901760
        %1725 = vmatpush.msra.mxu0 %v1724
        %v1726 = vand.u32 %v1111, 4294901760
        %v1727 = vsub.f32 %v1111, %v1726
        %v1728 = vand.u32 %v1727, 4294901760
        %1729 = vmatpush.msra.mxu0 %v1728
        %v1730 = vand.u32 %v1110, 4294901760
        %v1731 = vsub.f32 %v1110, %v1730
        %v1732 = vand.u32 %v1731, 4294901760
        %1733 = vmatpush.msra.mxu0 %v1732
        %v1734 = vand.u32 %v1109, 4294901760
        %v1735 = vsub.f32 %v1109, %v1734
        %v1736 = vand.u32 %v1735, 4294901760
        %1737 = vmatpush.msra.mxu0 %v1736
        %v1738 = vand.u32 %v1108, 4294901760
        %v1739 = vsub.f32 %v1108, %v1738
        %v1740 = vand.u32 %v1739, 4294901760
        %1741 = vmatpush.msra.mxu0 %v1740
        %v1742 = vand.u32 %v1107, 4294901760
        %v1743 = vsub.f32 %v1107, %v1742
        %v1744 = vand.u32 %v1743, 4294901760
        %1745 = vmatpush.msra.mxu0 %v1744
        %v1746 = vand.u32 %v1106, 4294901760
        %v1747 = vsub.f32 %v1106, %v1746
        %v1748 = vand.u32 %v1747, 4294901760
        %1749 = vmatpush.msra.mxu0 %v1748
        %v1750 = vand.u32 %v1105, 4294901760
        %v1751 = vsub.f32 %v1105, %v1750
        %v1752 = vand.u32 %v1751, 4294901760
        %1753 = vmatpush.msra.mxu0 %v1752
        %v1754 = vand.u32 %v1104, 4294901760
        %v1755 = vsub.f32 %v1104, %v1754
        %v1756 = vand.u32 %v1755, 4294901760
        %1757 = vmatpush.msra.mxu0 %v1756
        %v1758 = vand.u32 %v1103, 4294901760
        %v1759 = vsub.f32 %v1103, %v1758
        %v1760 = vand.u32 %v1759, 4294901760
        %1761 = vmatpush.msra.mxu0 %v1760
        %v1762 = vand.u32 %v1102, 4294901760
        %v1763 = vsub.f32 %v1102, %v1762
        %v1764 = vand.u32 %v1763, 4294901760
        %1765 = vmatpush.msra.mxu0 %v1764
        %v1766 = vand.u32 %v672, 4294901760
        %1767 = vmatmul.f32.gmra.mxu0 %v1766
        %v1768 = vpop.f32.mrf.mxu0
        %v1769 = vadd.f32 %v1610, %v1768
        %v1770 = vand.u32 %v673, 4294901760
        %1771 = vmatmul.f32.gmra.mxu0 %v1770
        %v1772 = vpop.f32.mrf.mxu0
        %v1773 = vadd.f32 %v1616, %v1772
        %v1774 = vand.u32 %v674, 4294901760
        %1775 = vmatmul.f32.gmra.mxu0 %v1774
        %v1776 = vpop.f32.mrf.mxu0
        %v1777 = vadd.f32 %v1622, %v1776
        %v1778 = vand.u32 %v675, 4294901760
        %1779 = vmatmul.f32.gmra.mxu0 %v1778
        %v1780 = vpop.f32.mrf.mxu0
        %v1781 = vadd.f32 %v1628, %v1780
        %v1782 = vand.u32 %v676, 4294901760
        %1783 = vmatmul.f32.gmra.mxu0 %v1782
        %v1784 = vpop.f32.mrf.mxu0
        %v1785 = vadd.f32 %v1634, %v1784
        %v1786 = vand.u32 %v677, 4294901760
        %1787 = vmatmul.f32.gmra.mxu0 %v1786
        %v1788 = vpop.f32.mrf.mxu0
        %v1789 = vadd.f32 %v1640, %v1788
        %v1790 = vand.u32 %v678, 4294901760
        %1791 = vmatmul.f32.gmra.mxu0 %v1790
        %v1792 = vpop.f32.mrf.mxu0
        %v1793 = vadd.f32 %v1646, %v1792
        %v1794 = vand.u32 %v679, 4294901760
        %1795 = vmatmul.f32.gmra.mxu0 %v1794
        %v1796 = vpop.f32.mrf.mxu0
        %v1797 = vadd.f32 %v1652, %v1796
        %v1798 = vand.u32 %v680, 4294901760
        %1799 = vmatmul.f32.gmra.mxu0 %v1798
        %v1800 = vpop.f32.mrf.mxu0
        %v1801 = vadd.f32 %v1658, %v1800
        %v1802 = vand.u32 %v681, 4294901760
        %1803 = vmatmul.f32.gmra.mxu0 %v1802
        %v1804 = vpop.f32.mrf.mxu0
        %v1805 = vadd.f32 %v1664, %v1804
        %v1806 = vand.u32 %v682, 4294901760
        %1807 = vmatmul.f32.gmra.mxu0 %v1806
        %v1808 = vpop.f32.mrf.mxu0
        %v1809 = vadd.f32 %v1670, %v1808
        %v1810 = vand.u32 %v683, 4294901760
        %1811 = vmatmul.f32.gmra.mxu0 %v1810
        %v1812 = vpop.f32.mrf.mxu0
        %v1813 = vadd.f32 %v1676, %v1812
        %v1814 = vand.u32 %v684, 4294901760
        %1815 = vmatmul.f32.gmra.mxu0 %v1814
        %v1816 = vpop.f32.mrf.mxu0
        %v1817 = vadd.f32 %v1682, %v1816
        %v1818 = vand.u32 %v685, 4294901760
        %1819 = vmatmul.f32.gmra.mxu0 %v1818
        %v1820 = vpop.f32.mrf.mxu0
        %v1821 = vadd.f32 %v1688, %v1820
        %v1822 = vand.u32 %v686, 4294901760
        %1823 = vmatmul.f32.gmra.mxu0 %v1822
        %v1824 = vpop.f32.mrf.mxu0
        %v1825 = vadd.f32 %v1694, %v1824
        %v1826 = vand.u32 %v687, 4294901760
        %1827 = vmatmul.f32.gmra.mxu0 %v1826
        %v1828 = vpop.f32.mrf.mxu0
        %v1829 = vadd.f32 %v1700, %v1828
        %1830 = vdwg.mxu0
        %v1831 = vand.u32 %v1117, 4294901760
        %1832 = vmatpush.msra.mxu0 %v1831
        %v1833 = vand.u32 %v1116, 4294901760
        %1834 = vmatpush.msra.mxu0 %v1833
        %v1835 = vand.u32 %v1115, 4294901760
        %1836 = vmatpush.msra.mxu0 %v1835
        %v1837 = vand.u32 %v1114, 4294901760
        %1838 = vmatpush.msra.mxu0 %v1837
        %v1839 = vand.u32 %v1113, 4294901760
        %1840 = vmatpush.msra.mxu0 %v1839
        %v1841 = vand.u32 %v1112, 4294901760
        %1842 = vmatpush.msra.mxu0 %v1841
        %v1843 = vand.u32 %v1111, 4294901760
        %1844 = vmatpush.msra.mxu0 %v1843
        %v1845 = vand.u32 %v1110, 4294901760
        %1846 = vmatpush.msra.mxu0 %v1845
        %v1847 = vand.u32 %v1109, 4294901760
        %1848 = vmatpush.msra.mxu0 %v1847
        %v1849 = vand.u32 %v1108, 4294901760
        %1850 = vmatpush.msra.mxu0 %v1849
        %v1851 = vand.u32 %v1107, 4294901760
        %1852 = vmatpush.msra.mxu0 %v1851
        %v1853 = vand.u32 %v1106, 4294901760
        %1854 = vmatpush.msra.mxu0 %v1853
        %v1855 = vand.u32 %v1105, 4294901760
        %1856 = vmatpush.msra.mxu0 %v1855
        %v1857 = vand.u32 %v1104, 4294901760
        %1858 = vmatpush.msra.mxu0 %v1857
        %v1859 = vand.u32 %v1103, 4294901760
        %1860 = vmatpush.msra.mxu0 %v1859
        %v1861 = vand.u32 %v1102, 4294901760
        %1862 = vmatpush.msra.mxu0 %v1861
        %v1863 = vand.u32 %v672, 4294901760
        %1864 = vmatmul.f32.gmra.mxu0 %v1863
        %v1865 = vpop.f32.mrf.mxu0
        %v1866 = vadd.f32 %v1769, %v1865
        %v1867 = vand.u32 %v673, 4294901760
        %1868 = vmatmul.f32.gmra.mxu0 %v1867
        %v1869 = vpop.f32.mrf.mxu0
        %v1870 = vadd.f32 %v1773, %v1869
        %v1871 = vand.u32 %v674, 4294901760
        %1872 = vmatmul.f32.gmra.mxu0 %v1871
        %v1873 = vpop.f32.mrf.mxu0
        %v1874 = vadd.f32 %v1777, %v1873
        %v1875 = vand.u32 %v675, 4294901760
        %1876 = vmatmul.f32.gmra.mxu0 %v1875
        %v1877 = vpop.f32.mrf.mxu0
        %v1878 = vadd.f32 %v1781, %v1877
        %v1879 = vand.u32 %v676, 4294901760
        %1880 = vmatmul.f32.gmra.mxu0 %v1879
        %v1881 = vpop.f32.mrf.mxu0
        %v1882 = vadd.f32 %v1785, %v1881
        %v1883 = vand.u32 %v677, 4294901760
        %1884 = vmatmul.f32.gmra.mxu0 %v1883
        %v1885 = vpop.f32.mrf.mxu0
        %v1886 = vadd.f32 %v1789, %v1885
        %v1887 = vand.u32 %v678, 4294901760
        %1888 = vmatmul.f32.gmra.mxu0 %v1887
        %v1889 = vpop.f32.mrf.mxu0
        %v1890 = vadd.f32 %v1793, %v1889
        %v1891 = vand.u32 %v679, 4294901760
        %1892 = vmatmul.f32.gmra.mxu0 %v1891
        %v1893 = vpop.f32.mrf.mxu0
        %v1894 = vadd.f32 %v1797, %v1893
        %v1895 = vand.u32 %v680, 4294901760
        %1896 = vmatmul.f32.gmra.mxu0 %v1895
        %v1897 = vpop.f32.mrf.mxu0
        %v1898 = vadd.f32 %v1801, %v1897
        %v1899 = vand.u32 %v681, 4294901760
        %1900 = vmatmul.f32.gmra.mxu0 %v1899
        %v1901 = vpop.f32.mrf.mxu0
        %v1902 = vadd.f32 %v1805, %v1901
        %v1903 = vand.u32 %v682, 4294901760
        %1904 = vmatmul.f32.gmra.mxu0 %v1903
        %v1905 = vpop.f32.mrf.mxu0
        %v1906 = vadd.f32 %v1809, %v1905
        %v1907 = vand.u32 %v683, 4294901760
        %1908 = vmatmul.f32.gmra.mxu0 %v1907
        %v1909 = vpop.f32.mrf.mxu0
        %v1910 = vadd.f32 %v1813, %v1909
        %v1911 = vand.u32 %v684, 4294901760
        %1912 = vmatmul.f32.gmra.mxu0 %v1911
        %v1913 = vpop.f32.mrf.mxu0
        %v1914 = vadd.f32 %v1817, %v1913
        %v1915 = vand.u32 %v685, 4294901760
        %1916 = vmatmul.f32.gmra.mxu0 %v1915
        %v1917 = vpop.f32.mrf.mxu0
        %v1918 = vadd.f32 %v1821, %v1917
        %v1919 = vand.u32 %v686, 4294901760
        %1920 = vmatmul.f32.gmra.mxu0 %v1919
        %v1921 = vpop.f32.mrf.mxu0
        %v1922 = vadd.f32 %v1825, %v1921
        %v1923 = vand.u32 %v687, 4294901760
        %1924 = vmatmul.f32.gmra.mxu0 %v1923
        %v1925 = vpop.f32.mrf.mxu0
        %v1926 = vadd.f32 %v1829, %v1925
        %1927 = vdwg.mxu0
        %vm1928 = vcmp.ge.f32.partialorder %v1866, 0.0
        %vm1929 = vcmp.ge.f32.partialorder %v1870, 0.0
        %vm1930 = vcmp.ge.f32.partialorder %v1874, 0.0
        %vm1931 = vcmp.ge.f32.partialorder %v1878, 0.0
        %vm1932 = vcmp.ge.f32.partialorder %v1882, 0.0
        %vm1933 = vcmp.ge.f32.partialorder %v1886, 0.0
        %vm1934 = vcmp.ge.f32.partialorder %v1890, 0.0
        %vm1935 = vcmp.ge.f32.partialorder %v1894, 0.0
        %vm1936 = vcmp.ge.f32.partialorder %v1898, 0.0
        %vm1937 = vcmp.ge.f32.partialorder %v1902, 0.0
        %vm1938 = vcmp.ge.f32.partialorder %v1906, 0.0
        %vm1939 = vcmp.ge.f32.partialorder %v1910, 0.0
        %vm1940 = vcmp.ge.f32.partialorder %v1914, 0.0
        %vm1941 = vcmp.ge.f32.partialorder %v1918, 0.0
        %vm1942 = vcmp.ge.f32.partialorder %v1922, 0.0
        %vm1943 = vcmp.ge.f32.partialorder %v1926, 0.0
        %v1944 = vmul.f32 %v1866, 0.01
        %v1945 = vmul.f32 %v1870, 0.01
        %v1946 = vmul.f32 %v1874, 0.01
        %v1947 = vmul.f32 %v1878, 0.01
        %v1948 = vmul.f32 %v1882, 0.01
        %v1949 = vmul.f32 %v1886, 0.01
        %v1950 = vmul.f32 %v1890, 0.01
        %v1951 = vmul.f32 %v1894, 0.01
        %v1952 = vmul.f32 %v1898, 0.01
        %v1953 = vmul.f32 %v1902, 0.01
        %v1954 = vmul.f32 %v1906, 0.01
        %v1955 = vmul.f32 %v1910, 0.01
        %v1956 = vmul.f32 %v1914, 0.01
        %v1957 = vmul.f32 %v1918, 0.01
        %v1958 = vmul.f32 %v1922, 0.01
        %v1959 = vmul.f32 %v1926, 0.01
        %v1960 = vsel %vm1928, %v1866, %v1944
        %v1961 = vsel %vm1929, %v1870, %v1945
        %v1962 = vsel %vm1930, %v1874, %v1946
        %v1963 = vsel %vm1931, %v1878, %v1947
        %v1964 = vsel %vm1932, %v1882, %v1948
        %v1965 = vsel %vm1933, %v1886, %v1949
        %v1966 = vsel %vm1934, %v1890, %v1950
        %v1967 = vsel %vm1935, %v1894, %v1951
        %v1968 = vsel %vm1936, %v1898, %v1952
        %v1969 = vsel %vm1937, %v1902, %v1953
        %v1970 = vsel %vm1938, %v1906, %v1954
        %v1971 = vsel %vm1939, %v1910, %v1955
        %v1972 = vsel %vm1940, %v1914, %v1956
        %v1973 = vsel %vm1941, %v1918, %v1957
        %v1974 = vsel %vm1942, %v1922, %v1958
        %v1975 = vsel %vm1943, %v1926, %v1959
        %v1976 = vld [vmem:[%s590] sm:$0xff]
        %v1977 = vld [vmem:[%s590 + $0x8] sm:$0xff]
        %v1978 = vld [vmem:[%s590 + $0x10] sm:$0xff]
        %v1979 = vld [vmem:[%s590 + $0x18] sm:$0xff]
        %v1980 = vld [vmem:[%s590 + $0x20] sm:$0xff]
        %v1981 = vld [vmem:[%s590 + $0x28] sm:$0xff]
        %v1982 = vld [vmem:[%s590 + $0x30] sm:$0xff]
        %v1983 = vld [vmem:[%s590 + $0x38] sm:$0xff]
        %v1984 = vld [vmem:[%s590 + $0x40] sm:$0xff]
        %v1985 = vld [vmem:[%s590 + $0x48] sm:$0xff]
        %v1986 = vld [vmem:[%s590 + $0x50] sm:$0xff]
        %v1987 = vld [vmem:[%s590 + $0x58] sm:$0xff]
        %v1988 = vld [vmem:[%s590 + $0x60] sm:$0xff]
        %v1989 = vld [vmem:[%s590 + $0x68] sm:$0xff]
        %v1990 = vld [vmem:[%s590 + $0x70] sm:$0xff]
        %v1991 = vld [vmem:[%s590 + $0x78] sm:$0xff]
        %v1992 = vld [vmem:[%s662] sm:$0x1]
        %v1994 = vperm.slane %v1992, 0
        %v1996 = vand.u32 %v1991, 4294901760
        %1997 = vmatpush.msra.mxu0 %v1996
        %v1998 = vand.u32 %v1990, 4294901760
        %1999 = vmatpush.msra.mxu0 %v1998
        %v2000 = vand.u32 %v1989, 4294901760
        %2001 = vmatpush.msra.mxu0 %v2000
        %v2002 = vand.u32 %v1988, 4294901760
        %2003 = vmatpush.msra.mxu0 %v2002
        %v2004 = vand.u32 %v1987, 4294901760
        %2005 = vmatpush.msra.mxu0 %v2004
        %v2006 = vand.u32 %v1986, 4294901760
        %2007 = vmatpush.msra.mxu0 %v2006
        %v2008 = vand.u32 %v1985, 4294901760
        %2009 = vmatpush.msra.mxu0 %v2008
        %v2010 = vand.u32 %v1984, 4294901760
        %2011 = vmatpush.msra.mxu0 %v2010
        %v2012 = vand.u32 %v1983, 4294901760
        %2013 = vmatpush.msra.mxu0 %v2012
        %v2014 = vand.u32 %v1982, 4294901760
        %2015 = vmatpush.msra.mxu0 %v2014
        %v2016 = vand.u32 %v1981, 4294901760
        %2017 = vmatpush.msra.mxu0 %v2016
        %v2018 = vand.u32 %v1980, 4294901760
        %2019 = vmatpush.msra.mxu0 %v2018
        %v2020 = vand.u32 %v1979, 4294901760
        %2021 = vmatpush.msra.mxu0 %v2020
        %v2022 = vand.u32 %v1978, 4294901760
        %2023 = vmatpush.msra.mxu0 %v2022
        %v2024 = vand.u32 %v1977, 4294901760
        %2025 = vmatpush.msra.mxu0 %v2024
        %v2026 = vand.u32 %v1976, 4294901760
        %2027 = vmatpush.msra.mxu0 %v2026
        %v2028 = vand.u32 %v688, 4294901760
        %v2029 = vsub.f32 %v688, %v2028
        %v2030 = vand.u32 %v2029, 4294901760
        %v2031 = vsub.f32 %v2029, %v2030
        %v2032 = vand.u32 %v2031, 4294901760
        %2033 = vmatmul.f32.gmra.mxu0 %v2032
        %v2034 = vpop.f32.mrf.mxu0
        %v2035 = vadd.f32 %v1994, %v2034
        %v2036 = vand.u32 %v689, 4294901760
        %v2037 = vsub.f32 %v689, %v2036
        %v2038 = vand.u32 %v2037, 4294901760
        %v2039 = vsub.f32 %v2037, %v2038
        %v2040 = vand.u32 %v2039, 4294901760
        %2041 = vmatmul.f32.gmra.mxu0 %v2040
        %v2042 = vpop.f32.mrf.mxu0
        %v2043 = vadd.f32 %v1994, %v2042
        %v2044 = vand.u32 %v690, 4294901760
        %v2045 = vsub.f32 %v690, %v2044
        %v2046 = vand.u32 %v2045, 4294901760
        %v2047 = vsub.f32 %v2045, %v2046
        %v2048 = vand.u32 %v2047, 4294901760
        %2049 = vmatmul.f32.gmra.mxu0 %v2048
        %v2050 = vpop.f32.mrf.mxu0
        %v2051 = vadd.f32 %v1994, %v2050
        %v2052 = vand.u32 %v691, 4294901760
        %v2053 = vsub.f32 %v691, %v2052
        %v2054 = vand.u32 %v2053, 4294901760
        %v2055 = vsub.f32 %v2053, %v2054
        %v2056 = vand.u32 %v2055, 4294901760
        %2057 = vmatmul.f32.gmra.mxu0 %v2056
        %v2058 = vpop.f32.mrf.mxu0
        %v2059 = vadd.f32 %v1994, %v2058
        %v2060 = vand.u32 %v692, 4294901760
        %v2061 = vsub.f32 %v692, %v2060
        %v2062 = vand.u32 %v2061, 4294901760
        %v2063 = vsub.f32 %v2061, %v2062
        %v2064 = vand.u32 %v2063, 4294901760
        %2065 = vmatmul.f32.gmra.mxu0 %v2064
        %v2066 = vpop.f32.mrf.mxu0
        %v2067 = vadd.f32 %v1994, %v2066
        %v2068 = vand.u32 %v693, 4294901760
        %v2069 = vsub.f32 %v693, %v2068
        %v2070 = vand.u32 %v2069, 4294901760
        %v2071 = vsub.f32 %v2069, %v2070
        %v2072 = vand.u32 %v2071, 4294901760
        %2073 = vmatmul.f32.gmra.mxu0 %v2072
        %v2074 = vpop.f32.mrf.mxu0
        %v2075 = vadd.f32 %v1994, %v2074
        %v2076 = vand.u32 %v694, 4294901760
        %v2077 = vsub.f32 %v694, %v2076
        %v2078 = vand.u32 %v2077, 4294901760
        %v2079 = vsub.f32 %v2077, %v2078
        %v2080 = vand.u32 %v2079, 4294901760
        %2081 = vmatmul.f32.gmra.mxu0 %v2080
        %v2082 = vpop.f32.mrf.mxu0
        %v2083 = vadd.f32 %v1994, %v2082
        %v2084 = vand.u32 %v695, 4294901760
        %v2085 = vsub.f32 %v695, %v2084
        %v2086 = vand.u32 %v2085, 4294901760
        %v2087 = vsub.f32 %v2085, %v2086
        %v2088 = vand.u32 %v2087, 4294901760
        %2089 = vmatmul.f32.gmra.mxu0 %v2088
        %v2090 = vpop.f32.mrf.mxu0
        %v2091 = vadd.f32 %v1994, %v2090
        %v2092 = vand.u32 %v696, 4294901760
        %v2093 = vsub.f32 %v696, %v2092
        %v2094 = vand.u32 %v2093, 4294901760
        %v2095 = vsub.f32 %v2093, %v2094
        %v2096 = vand.u32 %v2095, 4294901760
        %2097 = vmatmul.f32.gmra.mxu0 %v2096
        %v2098 = vpop.f32.mrf.mxu0
        %v2099 = vadd.f32 %v1994, %v2098
        %v2100 = vand.u32 %v697, 4294901760
        %v2101 = vsub.f32 %v697, %v2100
        %v2102 = vand.u32 %v2101, 4294901760
        %v2103 = vsub.f32 %v2101, %v2102
        %v2104 = vand.u32 %v2103, 4294901760
        %2105 = vmatmul.f32.gmra.mxu0 %v2104
        %v2106 = vpop.f32.mrf.mxu0
        %v2107 = vadd.f32 %v1994, %v2106
        %v2108 = vand.u32 %v698, 4294901760
        %v2109 = vsub.f32 %v698, %v2108
        %v2110 = vand.u32 %v2109, 4294901760
        %v2111 = vsub.f32 %v2109, %v2110
        %v2112 = vand.u32 %v2111, 4294901760
        %2113 = vmatmul.f32.gmra.mxu0 %v2112
        %v2114 = vpop.f32.mrf.mxu0
        %v2115 = vadd.f32 %v1994, %v2114
        %v2116 = vand.u32 %v699, 4294901760
        %v2117 = vsub.f32 %v699, %v2116
        %v2118 = vand.u32 %v2117, 4294901760
        %v2119 = vsub.f32 %v2117, %v2118
        %v2120 = vand.u32 %v2119, 4294901760
        %2121 = vmatmul.f32.gmra.mxu0 %v2120
        %v2122 = vpop.f32.mrf.mxu0
        %v2123 = vadd.f32 %v1994, %v2122
        %v2124 = vand.u32 %v700, 4294901760
        %v2125 = vsub.f32 %v700, %v2124
        %v2126 = vand.u32 %v2125, 4294901760
        %v2127 = vsub.f32 %v2125, %v2126
        %v2128 = vand.u32 %v2127, 4294901760
        %2129 = vmatmul.f32.gmra.mxu0 %v2128
        %v2130 = vpop.f32.mrf.mxu0
        %v2131 = vadd.f32 %v1994, %v2130
        %v2132 = vand.u32 %v701, 4294901760
        %v2133 = vsub.f32 %v701, %v2132
        %v2134 = vand.u32 %v2133, 4294901760
        %v2135 = vsub.f32 %v2133, %v2134
        %v2136 = vand.u32 %v2135, 4294901760
        %2137 = vmatmul.f32.gmra.mxu0 %v2136
        %v2138 = vpop.f32.mrf.mxu0
        %v2139 = vadd.f32 %v1994, %v2138
        %v2140 = vand.u32 %v702, 4294901760
        %v2141 = vsub.f32 %v702, %v2140
        %v2142 = vand.u32 %v2141, 4294901760
        %v2143 = vsub.f32 %v2141, %v2142
        %v2144 = vand.u32 %v2143, 4294901760
        %2145 = vmatmul.f32.gmra.mxu0 %v2144
        %v2146 = vpop.f32.mrf.mxu0
        %v2147 = vadd.f32 %v1994, %v2146
        %v2148 = vand.u32 %v703, 4294901760
        %v2149 = vsub.f32 %v703, %v2148
        %v2150 = vand.u32 %v2149, 4294901760
        %v2151 = vsub.f32 %v2149, %v2150
        %v2152 = vand.u32 %v2151, 4294901760
        %2153 = vmatmul.f32.gmra.mxu0 %v2152
        %v2154 = vpop.f32.mrf.mxu0
        %v2155 = vadd.f32 %v1994, %v2154
        %2156 = vdwg.mxu0
        %v2157 = vand.u32 %v1991, 4294901760
        %v2158 = vsub.f32 %v1991, %v2157
        %v2159 = vand.u32 %v2158, 4294901760
        %v2160 = vsub.f32 %v2158, %v2159
        %v2161 = vand.u32 %v2160, 4294901760
        %2162 = vmatpush.msra.mxu0 %v2161
        %v2163 = vand.u32 %v1990, 4294901760
        %v2164 = vsub.f32 %v1990, %v2163
        %v2165 = vand.u32 %v2164, 4294901760
        %v2166 = vsub.f32 %v2164, %v2165
        %v2167 = vand.u32 %v2166, 4294901760
        %2168 = vmatpush.msra.mxu0 %v2167
        %v2169 = vand.u32 %v1989, 4294901760
        %v2170 = vsub.f32 %v1989, %v2169
        %v2171 = vand.u32 %v2170, 4294901760
        %v2172 = vsub.f32 %v2170, %v2171
        %v2173 = vand.u32 %v2172, 4294901760
        %2174 = vmatpush.msra.mxu0 %v2173
        %v2175 = vand.u32 %v1988, 4294901760
        %v2176 = vsub.f32 %v1988, %v2175
        %v2177 = vand.u32 %v2176, 4294901760
        %v2178 = vsub.f32 %v2176, %v2177
        %v2179 = vand.u32 %v2178, 4294901760
        %2180 = vmatpush.msra.mxu0 %v2179
        %v2181 = vand.u32 %v1987, 4294901760
        %v2182 = vsub.f32 %v1987, %v2181
        %v2183 = vand.u32 %v2182, 4294901760
        %v2184 = vsub.f32 %v2182, %v2183
        %v2185 = vand.u32 %v2184, 4294901760
        %2186 = vmatpush.msra.mxu0 %v2185
        %v2187 = vand.u32 %v1986, 4294901760
        %v2188 = vsub.f32 %v1986, %v2187
        %v2189 = vand.u32 %v2188, 4294901760
        %v2190 = vsub.f32 %v2188, %v2189
        %v2191 = vand.u32 %v2190, 4294901760
        %2192 = vmatpush.msra.mxu0 %v2191
        %v2193 = vand.u32 %v1985, 4294901760
        %v2194 = vsub.f32 %v1985, %v2193
        %v2195 = vand.u32 %v2194, 4294901760
        %v2196 = vsub.f32 %v2194, %v2195
        %v2197 = vand.u32 %v2196, 4294901760
        %2198 = vmatpush.msra.mxu0 %v2197
        %v2199 = vand.u32 %v1984, 4294901760
        %v2200 = vsub.f32 %v1984, %v2199
        %v2201 = vand.u32 %v2200, 4294901760
        %v2202 = vsub.f32 %v2200, %v2201
        %v2203 = vand.u32 %v2202, 4294901760
        %2204 = vmatpush.msra.mxu0 %v2203
        %v2205 = vand.u32 %v1983, 4294901760
        %v2206 = vsub.f32 %v1983, %v2205
        %v2207 = vand.u32 %v2206, 4294901760
        %v2208 = vsub.f32 %v2206, %v2207
        %v2209 = vand.u32 %v2208, 4294901760
        %2210 = vmatpush.msra.mxu0 %v2209
        %v2211 = vand.u32 %v1982, 4294901760
        %v2212 = vsub.f32 %v1982, %v2211
        %v2213 = vand.u32 %v2212, 4294901760
        %v2214 = vsub.f32 %v2212, %v2213
        %v2215 = vand.u32 %v2214, 4294901760
        %2216 = vmatpush.msra.mxu0 %v2215
        %v2217 = vand.u32 %v1981, 4294901760
        %v2218 = vsub.f32 %v1981, %v2217
        %v2219 = vand.u32 %v2218, 4294901760
        %v2220 = vsub.f32 %v2218, %v2219
        %v2221 = vand.u32 %v2220, 4294901760
        %2222 = vmatpush.msra.mxu0 %v2221
        %v2223 = vand.u32 %v1980, 4294901760
        %v2224 = vsub.f32 %v1980, %v2223
        %v2225 = vand.u32 %v2224, 4294901760
        %v2226 = vsub.f32 %v2224, %v2225
        %v2227 = vand.u32 %v2226, 4294901760
        %2228 = vmatpush.msra.mxu0 %v2227
        %v2229 = vand.u32 %v1979, 4294901760
        %v2230 = vsub.f32 %v1979, %v2229
        %v2231 = vand.u32 %v2230, 4294901760
        %v2232 = vsub.f32 %v2230, %v2231
        %v2233 = vand.u32 %v2232, 4294901760
        %2234 = vmatpush.msra.mxu0 %v2233
        %v2235 = vand.u32 %v1978, 4294901760
        %v2236 = vsub.f32 %v1978, %v2235
        %v2237 = vand.u32 %v2236, 4294901760
        %v2238 = vsub.f32 %v2236, %v2237
        %v2239 = vand.u32 %v2238, 4294901760
        %2240 = vmatpush.msra.mxu0 %v2239
        %v2241 = vand.u32 %v1977, 4294901760
        %v2242 = vsub.f32 %v1977, %v2241
        %v2243 = vand.u32 %v2242, 4294901760
        %v2244 = vsub.f32 %v2242, %v2243
        %v2245 = vand.u32 %v2244, 4294901760
        %2246 = vmatpush.msra.mxu0 %v2245
        %v2247 = vand.u32 %v1976, 4294901760
        %v2248 = vsub.f32 %v1976, %v2247
        %v2249 = vand.u32 %v2248, 4294901760
        %v2250 = vsub.f32 %v2248, %v2249
        %v2251 = vand.u32 %v2250, 4294901760
        %2252 = vmatpush.msra.mxu0 %v2251
        %v2253 = vand.u32 %v688, 4294901760
        %2254 = vmatmul.f32.gmra.mxu0 %v2253
        %v2255 = vpop.f32.mrf.mxu0
        %v2256 = vadd.f32 %v2035, %v2255
        %v2257 = vand.u32 %v689, 4294901760
        %2258 = vmatmul.f32.gmra.mxu0 %v2257
        %v2259 = vpop.f32.mrf.mxu0
        %v2260 = vadd.f32 %v2043, %v2259
        %v2261 = vand.u32 %v690, 4294901760
        %2262 = vmatmul.f32.gmra.mxu0 %v2261
        %v2263 = vpop.f32.mrf.mxu0
        %v2264 = vadd.f32 %v2051, %v2263
        %v2265 = vand.u32 %v691, 4294901760
        %2266 = vmatmul.f32.gmra.mxu0 %v2265
        %v2267 = vpop.f32.mrf.mxu0
        %v2268 = vadd.f32 %v2059, %v2267
        %v2269 = vand.u32 %v692, 4294901760
        %2270 = vmatmul.f32.gmra.mxu0 %v2269
        %v2271 = vpop.f32.mrf.mxu0
        %v2272 = vadd.f32 %v2067, %v2271
        %v2273 = vand.u32 %v693, 4294901760
        %2274 = vmatmul.f32.gmra.mxu0 %v2273
        %v2275 = vpop.f32.mrf.mxu0
        %v2276 = vadd.f32 %v2075, %v2275
        %v2277 = vand.u32 %v694, 4294901760
        %2278 = vmatmul.f32.gmra.mxu0 %v2277
        %v2279 = vpop.f32.mrf.mxu0
        %v2280 = vadd.f32 %v2083, %v2279
        %v2281 = vand.u32 %v695, 4294901760
        %2282 = vmatmul.f32.gmra.mxu0 %v2281
        %v2283 = vpop.f32.mrf.mxu0
        %v2284 = vadd.f32 %v2091, %v2283
        %v2285 = vand.u32 %v696, 4294901760
        %2286 = vmatmul.f32.gmra.mxu0 %v2285
        %v2287 = vpop.f32.mrf.mxu0
        %v2288 = vadd.f32 %v2099, %v2287
        %v2289 = vand.u32 %v697, 4294901760
        %2290 = vmatmul.f32.gmra.mxu0 %v2289
        %v2291 = vpop.f32.mrf.mxu0
        %v2292 = vadd.f32 %v2107, %v2291
        %v2293 = vand.u32 %v698, 4294901760
        %2294 = vmatmul.f32.gmra.mxu0 %v2293
        %v2295 = vpop.f32.mrf.mxu0
        %v2296 = vadd.f32 %v2115, %v2295
        %v2297 = vand.u32 %v699, 4294901760
        %2298 = vmatmul.f32.gmra.mxu0 %v2297
        %v2299 = vpop.f32.mrf.mxu0
        %v2300 = vadd.f32 %v2123, %v2299
        %v2301 = vand.u32 %v700, 4294901760
        %2302 = vmatmul.f32.gmra.mxu0 %v2301
        %v2303 = vpop.f32.mrf.mxu0
        %v2304 = vadd.f32 %v2131, %v2303
        %v2305 = vand.u32 %v701, 4294901760
        %2306 = vmatmul.f32.gmra.mxu0 %v2305
        %v2307 = vpop.f32.mrf.mxu0
        %v2308 = vadd.f32 %v2139, %v2307
        %v2309 = vand.u32 %v702, 4294901760
        %2310 = vmatmul.f32.gmra.mxu0 %v2309
        %v2311 = vpop.f32.mrf.mxu0
        %v2312 = vadd.f32 %v2147, %v2311
        %v2313 = vand.u32 %v703, 4294901760
        %2314 = vmatmul.f32.gmra.mxu0 %v2313
        %v2315 = vpop.f32.mrf.mxu0
        %v2316 = vadd.f32 %v2155, %v2315
        %2317 = vdwg.mxu0
        %v2318 = vand.u32 %v1991, 4294901760
        %v2319 = vsub.f32 %v1991, %v2318
        %2320 = vmatpush.msra.mxu0 %v2319
        %v2321 = vand.u32 %v1990, 4294901760
        %v2322 = vsub.f32 %v1990, %v2321
        %2323 = vmatpush.msra.mxu0 %v2322
        %v2324 = vand.u32 %v1989, 4294901760
        %v2325 = vsub.f32 %v1989, %v2324
        %2326 = vmatpush.msra.mxu0 %v2325
        %v2327 = vand.u32 %v1988, 4294901760
        %v2328 = vsub.f32 %v1988, %v2327
        %2329 = vmatpush.msra.mxu0 %v2328
        %v2330 = vand.u32 %v1987, 4294901760
        %v2331 = vsub.f32 %v1987, %v2330
        %2332 = vmatpush.msra.mxu0 %v2331
        %v2333 = vand.u32 %v1986, 4294901760
        %v2334 = vsub.f32 %v1986, %v2333
        %2335 = vmatpush.msra.mxu0 %v2334
        %v2336 = vand.u32 %v1985, 4294901760
        %v2337 = vsub.f32 %v1985, %v2336
        %2338 = vmatpush.msra.mxu0 %v2337
        %v2339 = vand.u32 %v1984, 4294901760
        %v2340 = vsub.f32 %v1984, %v2339
        %2341 = vmatpush.msra.mxu0 %v2340
        %v2342 = vand.u32 %v1983, 4294901760
        %v2343 = vsub.f32 %v1983, %v2342
        %2344 = vmatpush.msra.mxu0 %v2343
        %v2345 = vand.u32 %v1982, 4294901760
        %v2346 = vsub.f32 %v1982, %v2345
        %2347 = vmatpush.msra.mxu0 %v2346
        %v2348 = vand.u32 %v1981, 4294901760
        %v2349 = vsub.f32 %v1981, %v2348
        %2350 = vmatpush.msra.mxu0 %v2349
        %v2351 = vand.u32 %v1980, 4294901760
        %v2352 = vsub.f32 %v1980, %v2351
        %2353 = vmatpush.msra.mxu0 %v2352
        %v2354 = vand.u32 %v1979, 4294901760
        %v2355 = vsub.f32 %v1979, %v2354
        %2356 = vmatpush.msra.mxu0 %v2355
        %v2357 = vand.u32 %v1978, 4294901760
        %v2358 = vsub.f32 %v1978, %v2357
        %2359 = vmatpush.msra.mxu0 %v2358
        %v2360 = vand.u32 %v1977, 4294901760
        %v2361 = vsub.f32 %v1977, %v2360
        %2362 = vmatpush.msra.mxu0 %v2361
        %v2363 = vand.u32 %v1976, 4294901760
        %v2364 = vsub.f32 %v1976, %v2363
        %2365 = vmatpush.msra.mxu0 %v2364
        %v2366 = vand.u32 %v688, 4294901760
        %v2367 = vsub.f32 %v688, %v2366
        %2368 = vmatmul.f32.gmra.mxu0 %v2367
        %v2369 = vpop.f32.mrf.mxu0
        %v2370 = vadd.f32 %v2256, %v2369
        %v2371 = vand.u32 %v689, 4294901760
        %v2372 = vsub.f32 %v689, %v2371
        %2373 = vmatmul.f32.gmra.mxu0 %v2372
        %v2374 = vpop.f32.mrf.mxu0
        %v2375 = vadd.f32 %v2260, %v2374
        %v2376 = vand.u32 %v690, 4294901760
        %v2377 = vsub.f32 %v690, %v2376
        %2378 = vmatmul.f32.gmra.mxu0 %v2377
        %v2379 = vpop.f32.mrf.mxu0
        %v2380 = vadd.f32 %v2264, %v2379
        %v2381 = vand.u32 %v691, 4294901760
        %v2382 = vsub.f32 %v691, %v2381
        %2383 = vmatmul.f32.gmra.mxu0 %v2382
        %v2384 = vpop.f32.mrf.mxu0
        %v2385 = vadd.f32 %v2268, %v2384
        %v2386 = vand.u32 %v692, 4294901760
        %v2387 = vsub.f32 %v692, %v2386
        %2388 = vmatmul.f32.gmra.mxu0 %v2387
        %v2389 = vpop.f32.mrf.mxu0
        %v2390 = vadd.f32 %v2272, %v2389
        %v2391 = vand.u32 %v693, 4294901760
        %v2392 = vsub.f32 %v693, %v2391
        %2393 = vmatmul.f32.gmra.mxu0 %v2392
        %v2394 = vpop.f32.mrf.mxu0
        %v2395 = vadd.f32 %v2276, %v2394
        %v2396 = vand.u32 %v694, 4294901760
        %v2397 = vsub.f32 %v694, %v2396
        %2398 = vmatmul.f32.gmra.mxu0 %v2397
        %v2399 = vpop.f32.mrf.mxu0
        %v2400 = vadd.f32 %v2280, %v2399
        %v2401 = vand.u32 %v695, 4294901760
        %v2402 = vsub.f32 %v695, %v2401
        %2403 = vmatmul.f32.gmra.mxu0 %v2402
        %v2404 = vpop.f32.mrf.mxu0
        %v2405 = vadd.f32 %v2284, %v2404
        %v2406 = vand.u32 %v696, 4294901760
        %v2407 = vsub.f32 %v696, %v2406
        %2408 = vmatmul.f32.gmra.mxu0 %v2407
        %v2409 = vpop.f32.mrf.mxu0
        %v2410 = vadd.f32 %v2288, %v2409
        %v2411 = vand.u32 %v697, 4294901760
        %v2412 = vsub.f32 %v697, %v2411
        %2413 = vmatmul.f32.gmra.mxu0 %v2412
        %v2414 = vpop.f32.mrf.mxu0
        %v2415 = vadd.f32 %v2292, %v2414
        %v2416 = vand.u32 %v698, 4294901760
        %v2417 = vsub.f32 %v698, %v2416
        %2418 = vmatmul.f32.gmra.mxu0 %v2417
        %v2419 = vpop.f32.mrf.mxu0
        %v2420 = vadd.f32 %v2296, %v2419
        %v2421 = vand.u32 %v699, 4294901760
        %v2422 = vsub.f32 %v699, %v2421
        %2423 = vmatmul.f32.gmra.mxu0 %v2422
        %v2424 = vpop.f32.mrf.mxu0
        %v2425 = vadd.f32 %v2300, %v2424
        %v2426 = vand.u32 %v700, 4294901760
        %v2427 = vsub.f32 %v700, %v2426
        %2428 = vmatmul.f32.gmra.mxu0 %v2427
        %v2429 = vpop.f32.mrf.mxu0
        %v2430 = vadd.f32 %v2304, %v2429
        %v2431 = vand.u32 %v701, 4294901760
        %v2432 = vsub.f32 %v701, %v2431
        %2433 = vmatmul.f32.gmra.mxu0 %v2432
        %v2434 = vpop.f32.mrf.mxu0
        %v2435 = vadd.f32 %v2308, %v2434
        %v2436 = vand.u32 %v702, 4294901760
        %v2437 = vsub.f32 %v702, %v2436
        %2438 = vmatmul.f32.gmra.mxu0 %v2437
        %v2439 = vpop.f32.mrf.mxu0
        %v2440 = vadd.f32 %v2312, %v2439
        %v2441 = vand.u32 %v703, 4294901760
        %v2442 = vsub.f32 %v703, %v2441
        %2443 = vmatmul.f32.gmra.mxu0 %v2442
        %v2444 = vpop.f32.mrf.mxu0
        %v2445 = vadd.f32 %v2316, %v2444
        %2446 = vdwg.mxu0
        %v2447 = vand.u32 %v1991, 4294901760
        %2448 = vmatpush.msra.mxu0 %v2447
        %v2449 = vand.u32 %v1990, 4294901760
        %2450 = vmatpush.msra.mxu0 %v2449
        %v2451 = vand.u32 %v1989, 4294901760
        %2452 = vmatpush.msra.mxu0 %v2451
        %v2453 = vand.u32 %v1988, 4294901760
        %2454 = vmatpush.msra.mxu0 %v2453
        %v2455 = vand.u32 %v1987, 4294901760
        %2456 = vmatpush.msra.mxu0 %v2455
        %v2457 = vand.u32 %v1986, 4294901760
        %2458 = vmatpush.msra.mxu0 %v2457
        %v2459 = vand.u32 %v1985, 4294901760
        %2460 = vmatpush.msra.mxu0 %v2459
        %v2461 = vand.u32 %v1984, 4294901760
        %2462 = vmatpush.msra.mxu0 %v2461
        %v2463 = vand.u32 %v1983, 4294901760
        %2464 = vmatpush.msra.mxu0 %v2463
        %v2465 = vand.u32 %v1982, 4294901760
        %2466 = vmatpush.msra.mxu0 %v2465
        %v2467 = vand.u32 %v1981, 4294901760
        %2468 = vmatpush.msra.mxu0 %v2467
        %v2469 = vand.u32 %v1980, 4294901760
        %2470 = vmatpush.msra.mxu0 %v2469
        %v2471 = vand.u32 %v1979, 4294901760
        %2472 = vmatpush.msra.mxu0 %v2471
        %v2473 = vand.u32 %v1978, 4294901760
        %2474 = vmatpush.msra.mxu0 %v2473
        %v2475 = vand.u32 %v1977, 4294901760
        %2476 = vmatpush.msra.mxu0 %v2475
        %v2477 = vand.u32 %v1976, 4294901760
        %2478 = vmatpush.msra.mxu0 %v2477
        %v2479 = vand.u32 %v688, 4294901760
        %v2480 = vsub.f32 %v688, %v2479
        %v2481 = vand.u32 %v2480, 4294901760
        %2482 = vmatmul.f32.gmra.mxu0 %v2481
        %v2483 = vpop.f32.mrf.mxu0
        %v2484 = vadd.f32 %v2370, %v2483
        %v2485 = vand.u32 %v689, 4294901760
        %v2486 = vsub.f32 %v689, %v2485
        %v2487 = vand.u32 %v2486, 4294901760
        %2488 = vmatmul.f32.gmra.mxu0 %v2487
        %v2489 = vpop.f32.mrf.mxu0
        %v2490 = vadd.f32 %v2375, %v2489
        %v2491 = vand.u32 %v690, 4294901760
        %v2492 = vsub.f32 %v690, %v2491
        %v2493 = vand.u32 %v2492, 4294901760
        %2494 = vmatmul.f32.gmra.mxu0 %v2493
        %v2495 = vpop.f32.mrf.mxu0
        %v2496 = vadd.f32 %v2380, %v2495
        %v2497 = vand.u32 %v691, 4294901760
        %v2498 = vsub.f32 %v691, %v2497
        %v2499 = vand.u32 %v2498, 4294901760
        %2500 = vmatmul.f32.gmra.mxu0 %v2499
        %v2501 = vpop.f32.mrf.mxu0
        %v2502 = vadd.f32 %v2385, %v2501
        %v2503 = vand.u32 %v692, 4294901760
        %v2504 = vsub.f32 %v692, %v2503
        %v2505 = vand.u32 %v2504, 4294901760
        %2506 = vmatmul.f32.gmra.mxu0 %v2505
        %v2507 = vpop.f32.mrf.mxu0
        %v2508 = vadd.f32 %v2390, %v2507
        %v2509 = vand.u32 %v693, 4294901760
        %v2510 = vsub.f32 %v693, %v2509
        %v2511 = vand.u32 %v2510, 4294901760
        %2512 = vmatmul.f32.gmra.mxu0 %v2511
        %v2513 = vpop.f32.mrf.mxu0
        %v2514 = vadd.f32 %v2395, %v2513
        %v2515 = vand.u32 %v694, 4294901760
        %v2516 = vsub.f32 %v694, %v2515
        %v2517 = vand.u32 %v2516, 4294901760
        %2518 = vmatmul.f32.gmra.mxu0 %v2517
        %v2519 = vpop.f32.mrf.mxu0
        %v2520 = vadd.f32 %v2400, %v2519
        %v2521 = vand.u32 %v695, 4294901760
        %v2522 = vsub.f32 %v695, %v2521
        %v2523 = vand.u32 %v2522, 4294901760
        %2524 = vmatmul.f32.gmra.mxu0 %v2523
        %v2525 = vpop.f32.mrf.mxu0
        %v2526 = vadd.f32 %v2405, %v2525
        %v2527 = vand.u32 %v696, 4294901760
        %v2528 = vsub.f32 %v696, %v2527
        %v2529 = vand.u32 %v2528, 4294901760
        %2530 = vmatmul.f32.gmra.mxu0 %v2529
        %v2531 = vpop.f32.mrf.mxu0
        %v2532 = vadd.f32 %v2410, %v2531
        %v2533 = vand.u32 %v697, 4294901760
        %v2534 = vsub.f32 %v697, %v2533
        %v2535 = vand.u32 %v2534, 4294901760
        %2536 = vmatmul.f32.gmra.mxu0 %v2535
        %v2537 = vpop.f32.mrf.mxu0
        %v2538 = vadd.f32 %v2415, %v2537
        %v2539 = vand.u32 %v698, 4294901760
        %v2540 = vsub.f32 %v698, %v2539
        %v2541 = vand.u32 %v2540, 4294901760
        %2542 = vmatmul.f32.gmra.mxu0 %v2541
        %v2543 = vpop.f32.mrf.mxu0
        %v2544 = vadd.f32 %v2420, %v2543
        %v2545 = vand.u32 %v699, 4294901760
        %v2546 = vsub.f32 %v699, %v2545
        %v2547 = vand.u32 %v2546, 4294901760
        %2548 = vmatmul.f32.gmra.mxu0 %v2547
        %v2549 = vpop.f32.mrf.mxu0
        %v2550 = vadd.f32 %v2425, %v2549
        %v2551 = vand.u32 %v700, 4294901760
        %v2552 = vsub.f32 %v700, %v2551
        %v2553 = vand.u32 %v2552, 4294901760
        %2554 = vmatmul.f32.gmra.mxu0 %v2553
        %v2555 = vpop.f32.mrf.mxu0
        %v2556 = vadd.f32 %v2430, %v2555
        %v2557 = vand.u32 %v701, 4294901760
        %v2558 = vsub.f32 %v701, %v2557
        %v2559 = vand.u32 %v2558, 4294901760
        %2560 = vmatmul.f32.gmra.mxu0 %v2559
        %v2561 = vpop.f32.mrf.mxu0
        %v2562 = vadd.f32 %v2435, %v2561
        %v2563 = vand.u32 %v702, 4294901760
        %v2564 = vsub.f32 %v702, %v2563
        %v2565 = vand.u32 %v2564, 4294901760
        %2566 = vmatmul.f32.gmra.mxu0 %v2565
        %v2567 = vpop.f32.mrf.mxu0
        %v2568 = vadd.f32 %v2440, %v2567
        %v2569 = vand.u32 %v703, 4294901760
        %v2570 = vsub.f32 %v703, %v2569
        %v2571 = vand.u32 %v2570, 4294901760
        %2572 = vmatmul.f32.gmra.mxu0 %v2571
        %v2573 = vpop.f32.mrf.mxu0
        %v2574 = vadd.f32 %v2445, %v2573
        %2575 = vdwg.mxu0
        %v2576 = vand.u32 %v1991, 4294901760
        %v2577 = vsub.f32 %v1991, %v2576
        %v2578 = vand.u32 %v2577, 4294901760
        %2579 = vmatpush.msra.mxu0 %v2578
        %v2580 = vand.u32 %v1990, 4294901760
        %v2581 = vsub.f32 %v1990, %v2580
        %v2582 = vand.u32 %v2581, 4294901760
        %2583 = vmatpush.msra.mxu0 %v2582
        %v2584 = vand.u32 %v1989, 4294901760
        %v2585 = vsub.f32 %v1989, %v2584
        %v2586 = vand.u32 %v2585, 4294901760
        %2587 = vmatpush.msra.mxu0 %v2586
        %v2588 = vand.u32 %v1988, 4294901760
        %v2589 = vsub.f32 %v1988, %v2588
        %v2590 = vand.u32 %v2589, 4294901760
        %2591 = vmatpush.msra.mxu0 %v2590
        %v2592 = vand.u32 %v1987, 4294901760
        %v2593 = vsub.f32 %v1987, %v2592
        %v2594 = vand.u32 %v2593, 4294901760
        %2595 = vmatpush.msra.mxu0 %v2594
        %v2596 = vand.u32 %v1986, 4294901760
        %v2597 = vsub.f32 %v1986, %v2596
        %v2598 = vand.u32 %v2597, 4294901760
        %2599 = vmatpush.msra.mxu0 %v2598
        %v2600 = vand.u32 %v1985, 4294901760
        %v2601 = vsub.f32 %v1985, %v2600
        %v2602 = vand.u32 %v2601, 4294901760
        %2603 = vmatpush.msra.mxu0 %v2602
        %v2604 = vand.u32 %v1984, 4294901760
        %v2605 = vsub.f32 %v1984, %v2604
        %v2606 = vand.u32 %v2605, 4294901760
        %2607 = vmatpush.msra.mxu0 %v2606
        %v2608 = vand.u32 %v1983, 4294901760
        %v2609 = vsub.f32 %v1983, %v2608
        %v2610 = vand.u32 %v2609, 4294901760
        %2611 = vmatpush.msra.mxu0 %v2610
        %v2612 = vand.u32 %v1982, 4294901760
        %v2613 = vsub.f32 %v1982, %v2612
        %v2614 = vand.u32 %v2613, 4294901760
        %2615 = vmatpush.msra.mxu0 %v2614
        %v2616 = vand.u32 %v1981, 4294901760
        %v2617 = vsub.f32 %v1981, %v2616
        %v2618 = vand.u32 %v2617, 4294901760
        %2619 = vmatpush.msra.mxu0 %v2618
        %v2620 = vand.u32 %v1980, 4294901760
        %v2621 = vsub.f32 %v1980, %v2620
        %v2622 = vand.u32 %v2621, 4294901760
        %2623 = vmatpush.msra.mxu0 %v2622
        %v2624 = vand.u32 %v1979, 4294901760
        %v2625 = vsub.f32 %v1979, %v2624
        %v2626 = vand.u32 %v2625, 4294901760
        %2627 = vmatpush.msra.mxu0 %v2626
        %v2628 = vand.u32 %v1978, 4294901760
        %v2629 = vsub.f32 %v1978, %v2628
        %v2630 = vand.u32 %v2629, 4294901760
        %2631 = vmatpush.msra.mxu0 %v2630
        %v2632 = vand.u32 %v1977, 4294901760
        %v2633 = vsub.f32 %v1977, %v2632
        %v2634 = vand.u32 %v2633, 4294901760
        %2635 = vmatpush.msra.mxu0 %v2634
        %v2636 = vand.u32 %v1976, 4294901760
        %v2637 = vsub.f32 %v1976, %v2636
        %v2638 = vand.u32 %v2637, 4294901760
        %2639 = vmatpush.msra.mxu0 %v2638
        %v2640 = vand.u32 %v688, 4294901760
        %2641 = vmatmul.f32.gmra.mxu0 %v2640
        %v2642 = vpop.f32.mrf.mxu0
        %v2643 = vadd.f32 %v2484, %v2642
        %v2644 = vand.u32 %v689, 4294901760
        %2645 = vmatmul.f32.gmra.mxu0 %v2644
        %v2646 = vpop.f32.mrf.mxu0
        %v2647 = vadd.f32 %v2490, %v2646
        %v2648 = vand.u32 %v690, 4294901760
        %2649 = vmatmul.f32.gmra.mxu0 %v2648
        %v2650 = vpop.f32.mrf.mxu0
        %v2651 = vadd.f32 %v2496, %v2650
        %v2652 = vand.u32 %v691, 4294901760
        %2653 = vmatmul.f32.gmra.mxu0 %v2652
        %v2654 = vpop.f32.mrf.mxu0
        %v2655 = vadd.f32 %v2502, %v2654
        %v2656 = vand.u32 %v692, 4294901760
        %2657 = vmatmul.f32.gmra.mxu0 %v2656
        %v2658 = vpop.f32.mrf.mxu0
        %v2659 = vadd.f32 %v2508, %v2658
        %v2660 = vand.u32 %v693, 4294901760
        %2661 = vmatmul.f32.gmra.mxu0 %v2660
        %v2662 = vpop.f32.mrf.mxu0
        %v2663 = vadd.f32 %v2514, %v2662
        %v2664 = vand.u32 %v694, 4294901760
        %2665 = vmatmul.f32.gmra.mxu0 %v2664
        %v2666 = vpop.f32.mrf.mxu0
        %v2667 = vadd.f32 %v2520, %v2666
        %v2668 = vand.u32 %v695, 4294901760
        %2669 = vmatmul.f32.gmra.mxu0 %v2668
        %v2670 = vpop.f32.mrf.mxu0
        %v2671 = vadd.f32 %v2526, %v2670
        %v2672 = vand.u32 %v696, 4294901760
        %2673 = vmatmul.f32.gmra.mxu0 %v2672
        %v2674 = vpop.f32.mrf.mxu0
        %v2675 = vadd.f32 %v2532, %v2674
        %v2676 = vand.u32 %v697, 4294901760
        %2677 = vmatmul.f32.gmra.mxu0 %v2676
        %v2678 = vpop.f32.mrf.mxu0
        %v2679 = vadd.f32 %v2538, %v2678
        %v2680 = vand.u32 %v698, 4294901760
        %2681 = vmatmul.f32.gmra.mxu0 %v2680
        %v2682 = vpop.f32.mrf.mxu0
        %v2683 = vadd.f32 %v2544, %v2682
        %v2684 = vand.u32 %v699, 4294901760
        %2685 = vmatmul.f32.gmra.mxu0 %v2684
        %v2686 = vpop.f32.mrf.mxu0
        %v2687 = vadd.f32 %v2550, %v2686
        %v2688 = vand.u32 %v700, 4294901760
        %2689 = vmatmul.f32.gmra.mxu0 %v2688
        %v2690 = vpop.f32.mrf.mxu0
        %v2691 = vadd.f32 %v2556, %v2690
        %v2692 = vand.u32 %v701, 4294901760
        %2693 = vmatmul.f32.gmra.mxu0 %v2692
        %v2694 = vpop.f32.mrf.mxu0
        %v2695 = vadd.f32 %v2562, %v2694
        %v2696 = vand.u32 %v702, 4294901760
        %2697 = vmatmul.f32.gmra.mxu0 %v2696
        %v2698 = vpop.f32.mrf.mxu0
        %v2699 = vadd.f32 %v2568, %v2698
        %v2700 = vand.u32 %v703, 4294901760
        %2701 = vmatmul.f32.gmra.mxu0 %v2700
        %v2702 = vpop.f32.mrf.mxu0
        %v2703 = vadd.f32 %v2574, %v2702
        %2704 = vdwg.mxu0
        %v2705 = vand.u32 %v1991, 4294901760
        %2706 = vmatpush.msra.mxu0 %v2705
        %v2707 = vand.u32 %v1990, 4294901760
        %2708 = vmatpush.msra.mxu0 %v2707
        %v2709 = vand.u32 %v1989, 4294901760
        %2710 = vmatpush.msra.mxu0 %v2709
        %v2711 = vand.u32 %v1988, 4294901760
        %2712 = vmatpush.msra.mxu0 %v2711
        %v2713 = vand.u32 %v1987, 4294901760
        %2714 = vmatpush.msra.mxu0 %v2713
        %v2715 = vand.u32 %v1986, 4294901760
        %2716 = vmatpush.msra.mxu0 %v2715
        %v2717 = vand.u32 %v1985, 4294901760
        %2718 = vmatpush.msra.mxu0 %v2717
        %v2719 = vand.u32 %v1984, 4294901760
        %2720 = vmatpush.msra.mxu0 %v2719
        %v2721 = vand.u32 %v1983, 4294901760
        %2722 = vmatpush.msra.mxu0 %v2721
        %v2723 = vand.u32 %v1982, 4294901760
        %2724 = vmatpush.msra.mxu0 %v2723
        %v2725 = vand.u32 %v1981, 4294901760
        %2726 = vmatpush.msra.mxu0 %v2725
        %v2727 = vand.u32 %v1980, 4294901760
        %2728 = vmatpush.msra.mxu0 %v2727
        %v2729 = vand.u32 %v1979, 4294901760
        %2730 = vmatpush.msra.mxu0 %v2729
        %v2731 = vand.u32 %v1978, 4294901760
        %2732 = vmatpush.msra.mxu0 %v2731
        %v2733 = vand.u32 %v1977, 4294901760
        %2734 = vmatpush.msra.mxu0 %v2733
        %v2735 = vand.u32 %v1976, 4294901760
        %2736 = vmatpush.msra.mxu0 %v2735
        %v2737 = vand.u32 %v688, 4294901760
        %2738 = vmatmul.f32.gmra.mxu0 %v2737
        %v2739 = vpop.f32.mrf.mxu0
        %v2740 = vadd.f32 %v2643, %v2739
        %v2741 = vand.u32 %v689, 4294901760
        %2742 = vmatmul.f32.gmra.mxu0 %v2741
        %v2743 = vpop.f32.mrf.mxu0
        %v2744 = vadd.f32 %v2647, %v2743
        %v2745 = vand.u32 %v690, 4294901760
        %2746 = vmatmul.f32.gmra.mxu0 %v2745
        %v2747 = vpop.f32.mrf.mxu0
        %v2748 = vadd.f32 %v2651, %v2747
        %v2749 = vand.u32 %v691, 4294901760
        %2750 = vmatmul.f32.gmra.mxu0 %v2749
        %v2751 = vpop.f32.mrf.mxu0
        %v2752 = vadd.f32 %v2655, %v2751
        %v2753 = vand.u32 %v692, 4294901760
        %2754 = vmatmul.f32.gmra.mxu0 %v2753
        %v2755 = vpop.f32.mrf.mxu0
        %v2756 = vadd.f32 %v2659, %v2755
        %v2757 = vand.u32 %v693, 4294901760
        %2758 = vmatmul.f32.gmra.mxu0 %v2757
        %v2759 = vpop.f32.mrf.mxu0
        %v2760 = vadd.f32 %v2663, %v2759
        %v2761 = vand.u32 %v694, 4294901760
        %2762 = vmatmul.f32.gmra.mxu0 %v2761
        %v2763 = vpop.f32.mrf.mxu0
        %v2764 = vadd.f32 %v2667, %v2763
        %v2765 = vand.u32 %v695, 4294901760
        %2766 = vmatmul.f32.gmra.mxu0 %v2765
        %v2767 = vpop.f32.mrf.mxu0
        %v2768 = vadd.f32 %v2671, %v2767
        %v2769 = vand.u32 %v696, 4294901760
        %2770 = vmatmul.f32.gmra.mxu0 %v2769
        %v2771 = vpop.f32.mrf.mxu0
        %v2772 = vadd.f32 %v2675, %v2771
        %v2773 = vand.u32 %v697, 4294901760
        %2774 = vmatmul.f32.gmra.mxu0 %v2773
        %v2775 = vpop.f32.mrf.mxu0
        %v2776 = vadd.f32 %v2679, %v2775
        %v2777 = vand.u32 %v698, 4294901760
        %2778 = vmatmul.f32.gmra.mxu0 %v2777
        %v2779 = vpop.f32.mrf.mxu0
        %v2780 = vadd.f32 %v2683, %v2779
        %v2781 = vand.u32 %v699, 4294901760
        %2782 = vmatmul.f32.gmra.mxu0 %v2781
        %v2783 = vpop.f32.mrf.mxu0
        %v2784 = vadd.f32 %v2687, %v2783
        %v2785 = vand.u32 %v700, 4294901760
        %2786 = vmatmul.f32.gmra.mxu0 %v2785
        %v2787 = vpop.f32.mrf.mxu0
        %v2788 = vadd.f32 %v2691, %v2787
        %v2789 = vand.u32 %v701, 4294901760
        %2790 = vmatmul.f32.gmra.mxu0 %v2789
        %v2791 = vpop.f32.mrf.mxu0
        %v2792 = vadd.f32 %v2695, %v2791
        %v2793 = vand.u32 %v702, 4294901760
        %2794 = vmatmul.f32.gmra.mxu0 %v2793
        %v2795 = vpop.f32.mrf.mxu0
        %v2796 = vadd.f32 %v2699, %v2795
        %v2797 = vand.u32 %v703, 4294901760
        %2798 = vmatmul.f32.gmra.mxu0 %v2797
        %v2799 = vpop.f32.mrf.mxu0
        %v2800 = vadd.f32 %v2703, %v2799
        %2801 = vdwg.mxu0
        %vm2802 = vcmp.ge.f32.partialorder %v2740, 0.0
        %vm2803 = vcmp.ge.f32.partialorder %v2744, 0.0
        %vm2804 = vcmp.ge.f32.partialorder %v2748, 0.0
        %vm2805 = vcmp.ge.f32.partialorder %v2752, 0.0
        %vm2806 = vcmp.ge.f32.partialorder %v2756, 0.0
        %vm2807 = vcmp.ge.f32.partialorder %v2760, 0.0
        %vm2808 = vcmp.ge.f32.partialorder %v2764, 0.0
        %vm2809 = vcmp.ge.f32.partialorder %v2768, 0.0
        %vm2810 = vcmp.ge.f32.partialorder %v2772, 0.0
        %vm2811 = vcmp.ge.f32.partialorder %v2776, 0.0
        %vm2812 = vcmp.ge.f32.partialorder %v2780, 0.0
        %vm2813 = vcmp.ge.f32.partialorder %v2784, 0.0
        %vm2814 = vcmp.ge.f32.partialorder %v2788, 0.0
        %vm2815 = vcmp.ge.f32.partialorder %v2792, 0.0
        %vm2816 = vcmp.ge.f32.partialorder %v2796, 0.0
        %vm2817 = vcmp.ge.f32.partialorder %v2800, 0.0
        %v2818 = vmul.f32 %v2740, 0.01
        %v2819 = vmul.f32 %v2744, 0.01
        %v2820 = vmul.f32 %v2748, 0.01
        %v2821 = vmul.f32 %v2752, 0.01
        %v2822 = vmul.f32 %v2756, 0.01
        %v2823 = vmul.f32 %v2760, 0.01
        %v2824 = vmul.f32 %v2764, 0.01
        %v2825 = vmul.f32 %v2768, 0.01
        %v2826 = vmul.f32 %v2772, 0.01
        %v2827 = vmul.f32 %v2776, 0.01
        %v2828 = vmul.f32 %v2780, 0.01
        %v2829 = vmul.f32 %v2784, 0.01
        %v2830 = vmul.f32 %v2788, 0.01
        %v2831 = vmul.f32 %v2792, 0.01
        %v2832 = vmul.f32 %v2796, 0.01
        %v2833 = vmul.f32 %v2800, 0.01
        %v2834 = vsel %vm2802, %v2740, %v2818
        %v2835 = vsel %vm2803, %v2744, %v2819
        %v2836 = vsel %vm2804, %v2748, %v2820
        %v2837 = vsel %vm2805, %v2752, %v2821
        %v2838 = vsel %vm2806, %v2756, %v2822
        %v2839 = vsel %vm2807, %v2760, %v2823
        %v2840 = vsel %vm2808, %v2764, %v2824
        %v2841 = vsel %vm2809, %v2768, %v2825
        %v2842 = vsel %vm2810, %v2772, %v2826
        %v2843 = vsel %vm2811, %v2776, %v2827
        %v2844 = vsel %vm2812, %v2780, %v2828
        %v2845 = vsel %vm2813, %v2784, %v2829
        %v2846 = vsel %vm2814, %v2788, %v2830
        %v2847 = vsel %vm2815, %v2792, %v2831
        %v2848 = vsel %vm2816, %v2796, %v2832
        %v2849 = vsel %vm2817, %v2800, %v2833
        %v2850 = vand.u32 %v1975, 4294901760
        %2851 = vmatpush.xpose.msra.mxu0 %v2850
        %v2852 = vand.u32 %v1974, 4294901760
        %2853 = vmatpush.xpose.msra.mxu0 %v2852
        %v2854 = vand.u32 %v1973, 4294901760
        %2855 = vmatpush.xpose.msra.mxu0 %v2854
        %v2856 = vand.u32 %v1972, 4294901760
        %2857 = vmatpush.xpose.msra.mxu0 %v2856
        %v2858 = vand.u32 %v1971, 4294901760
        %2859 = vmatpush.xpose.msra.mxu0 %v2858
        %v2860 = vand.u32 %v1970, 4294901760
        %2861 = vmatpush.xpose.msra.mxu0 %v2860
        %v2862 = vand.u32 %v1969, 4294901760
        %2863 = vmatpush.xpose.msra.mxu0 %v2862
        %v2864 = vand.u32 %v1968, 4294901760
        %2865 = vmatpush.xpose.msra.mxu0 %v2864
        %v2866 = vand.u32 %v1967, 4294901760
        %2867 = vmatpush.xpose.msra.mxu0 %v2866
        %v2868 = vand.u32 %v1966, 4294901760
        %2869 = vmatpush.xpose.msra.mxu0 %v2868
        %v2870 = vand.u32 %v1965, 4294901760
        %2871 = vmatpush.xpose.msra.mxu0 %v2870
        %v2872 = vand.u32 %v1964, 4294901760
        %2873 = vmatpush.xpose.msra.mxu0 %v2872
        %v2874 = vand.u32 %v1963, 4294901760
        %2875 = vmatpush.xpose.msra.mxu0 %v2874
        %v2876 = vand.u32 %v1962, 4294901760
        %2877 = vmatpush.xpose.msra.mxu0 %v2876
        %v2878 = vand.u32 %v1961, 4294901760
        %2879 = vmatpush.xpose.msra.mxu0 %v2878
        %v2880 = vand.u32 %v1960, 4294901760
        %2881 = vmatpush.xpose.msra.mxu0 %v2880
        %v2882 = vand.u32 %v1100, 4294901760
        %v2883 = vsub.f32 %v1100, %v2882
        %v2884 = vand.u32 %v2883, 4294901760
        %v2885 = vsub.f32 %v2883, %v2884
        %v2886 = vand.u32 %v2885, 4294901760
        %2887 = vmatmul.f32.gmra.mxu0 %v2886
        %v2888 = vpop.f32.mrf.mxu0
        %v2889 = vadd.f32 0.0, %v2888
        %v2890 = vand.u32 %v1101, 4294901760
        %v2891 = vsub.f32 %v1101, %v2890
        %v2892 = vand.u32 %v2891, 4294901760
        %v2893 = vsub.f32 %v2891, %v2892
        %v2894 = vand.u32 %v2893, 4294901760
        %2895 = vmatmul.f32.gmra.mxu0 %v2894
        %v2896 = vpop.f32.mrf.mxu0
        %v2897 = vadd.f32 0.0, %v2896
        %2898 = vdwg.mxu0
        %v2899 = vand.u32 %v1975, 4294901760
        %v2900 = vsub.f32 %v1975, %v2899
        %v2901 = vand.u32 %v2900, 4294901760
        %v2902 = vsub.f32 %v2900, %v2901
        %v2903 = vand.u32 %v2902, 4294901760
        %2904 = vmatpush.xpose.msra.mxu0 %v2903
        %v2905 = vand.u32 %v1974, 4294901760
        %v2906 = vsub.f32 %v1974, %v2905
        %v2907 = vand.u32 %v2906, 4294901760
        %v2908 = vsub.f32 %v2906, %v2907
        %v2909 = vand.u32 %v2908, 4294901760
        %2910 = vmatpush.xpose.msra.mxu0 %v2909
        %v2911 = vand.u32 %v1973, 4294901760
        %v2912 = vsub.f32 %v1973, %v2911
        %v2913 = vand.u32 %v2912, 4294901760
        %v2914 = vsub.f32 %v2912, %v2913
        %v2915 = vand.u32 %v2914, 4294901760
        %2916 = vmatpush.xpose.msra.mxu0 %v2915
        %v2917 = vand.u32 %v1972, 4294901760
        %v2918 = vsub.f32 %v1972, %v2917
        %v2919 = vand.u32 %v2918, 4294901760
        %v2920 = vsub.f32 %v2918, %v2919
        %v2921 = vand.u32 %v2920, 4294901760
        %2922 = vmatpush.xpose.msra.mxu0 %v2921
        %v2923 = vand.u32 %v1971, 4294901760
        %v2924 = vsub.f32 %v1971, %v2923
        %v2925 = vand.u32 %v2924, 4294901760
        %v2926 = vsub.f32 %v2924, %v2925
        %v2927 = vand.u32 %v2926, 4294901760
        %2928 = vmatpush.xpose.msra.mxu0 %v2927
        %v2929 = vand.u32 %v1970, 4294901760
        %v2930 = vsub.f32 %v1970, %v2929
        %v2931 = vand.u32 %v2930, 4294901760
        %v2932 = vsub.f32 %v2930, %v2931
        %v2933 = vand.u32 %v2932, 4294901760
        %2934 = vmatpush.xpose.msra.mxu0 %v2933
        %v2935 = vand.u32 %v1969, 4294901760
        %v2936 = vsub.f32 %v1969, %v2935
        %v2937 = vand.u32 %v2936, 4294901760
        %v2938 = vsub.f32 %v2936, %v2937
        %v2939 = vand.u32 %v2938, 4294901760
        %2940 = vmatpush.xpose.msra.mxu0 %v2939
        %v2941 = vand.u32 %v1968, 4294901760
        %v2942 = vsub.f32 %v1968, %v2941
        %v2943 = vand.u32 %v2942, 4294901760
        %v2944 = vsub.f32 %v2942, %v2943
        %v2945 = vand.u32 %v2944, 4294901760
        %2946 = vmatpush.xpose.msra.mxu0 %v2945
        %v2947 = vand.u32 %v1967, 4294901760
        %v2948 = vsub.f32 %v1967, %v2947
        %v2949 = vand.u32 %v2948, 4294901760
        %v2950 = vsub.f32 %v2948, %v2949
        %v2951 = vand.u32 %v2950, 4294901760
        %2952 = vmatpush.xpose.msra.mxu0 %v2951
        %v2953 = vand.u32 %v1966, 4294901760
        %v2954 = vsub.f32 %v1966, %v2953
        %v2955 = vand.u32 %v2954, 4294901760
        %v2956 = vsub.f32 %v2954, %v2955
        %v2957 = vand.u32 %v2956, 4294901760
        %2958 = vmatpush.xpose.msra.mxu0 %v2957
        %v2959 = vand.u32 %v1965, 4294901760
        %v2960 = vsub.f32 %v1965, %v2959
        %v2961 = vand.u32 %v2960, 4294901760
        %v2962 = vsub.f32 %v2960, %v2961
        %v2963 = vand.u32 %v2962, 4294901760
        %2964 = vmatpush.xpose.msra.mxu0 %v2963
        %v2965 = vand.u32 %v1964, 4294901760
        %v2966 = vsub.f32 %v1964, %v2965
        %v2967 = vand.u32 %v2966, 4294901760
        %v2968 = vsub.f32 %v2966, %v2967
        %v2969 = vand.u32 %v2968, 4294901760
        %2970 = vmatpush.xpose.msra.mxu0 %v2969
        %v2971 = vand.u32 %v1963, 4294901760
        %v2972 = vsub.f32 %v1963, %v2971
        %v2973 = vand.u32 %v2972, 4294901760
        %v2974 = vsub.f32 %v2972, %v2973
        %v2975 = vand.u32 %v2974, 4294901760
        %2976 = vmatpush.xpose.msra.mxu0 %v2975
        %v2977 = vand.u32 %v1962, 4294901760
        %v2978 = vsub.f32 %v1962, %v2977
        %v2979 = vand.u32 %v2978, 4294901760
        %v2980 = vsub.f32 %v2978, %v2979
        %v2981 = vand.u32 %v2980, 4294901760
        %2982 = vmatpush.xpose.msra.mxu0 %v2981
        %v2983 = vand.u32 %v1961, 4294901760
        %v2984 = vsub.f32 %v1961, %v2983
        %v2985 = vand.u32 %v2984, 4294901760
        %v2986 = vsub.f32 %v2984, %v2985
        %v2987 = vand.u32 %v2986, 4294901760
        %2988 = vmatpush.xpose.msra.mxu0 %v2987
        %v2989 = vand.u32 %v1960, 4294901760
        %v2990 = vsub.f32 %v1960, %v2989
        %v2991 = vand.u32 %v2990, 4294901760
        %v2992 = vsub.f32 %v2990, %v2991
        %v2993 = vand.u32 %v2992, 4294901760
        %2994 = vmatpush.xpose.msra.mxu0 %v2993
        %v2995 = vand.u32 %v1100, 4294901760
        %2996 = vmatmul.f32.gmra.mxu0 %v2995
        %v2997 = vpop.f32.mrf.mxu0
        %v2998 = vadd.f32 %v2889, %v2997
        %v2999 = vand.u32 %v1101, 4294901760
        %3000 = vmatmul.f32.gmra.mxu0 %v2999
        %v3001 = vpop.f32.mrf.mxu0
        %v3002 = vadd.f32 %v2897, %v3001
        %3003 = vdwg.mxu0
        %v3004 = vand.u32 %v1975, 4294901760
        %v3005 = vsub.f32 %v1975, %v3004
        %3006 = vmatpush.xpose.msra.mxu0 %v3005
        %v3007 = vand.u32 %v1974, 4294901760
        %v3008 = vsub.f32 %v1974, %v3007
        %3009 = vmatpush.xpose.msra.mxu0 %v3008
        %v3010 = vand.u32 %v1973, 4294901760
        %v3011 = vsub.f32 %v1973, %v3010
        %3012 = vmatpush.xpose.msra.mxu0 %v3011
        %v3013 = vand.u32 %v1972, 4294901760
        %v3014 = vsub.f32 %v1972, %v3013
        %3015 = vmatpush.xpose.msra.mxu0 %v3014
        %v3016 = vand.u32 %v1971, 4294901760
        %v3017 = vsub.f32 %v1971, %v3016
        %3018 = vmatpush.xpose.msra.mxu0 %v3017
        %v3019 = vand.u32 %v1970, 4294901760
        %v3020 = vsub.f32 %v1970, %v3019
        %3021 = vmatpush.xpose.msra.mxu0 %v3020
        %v3022 = vand.u32 %v1969, 4294901760
        %v3023 = vsub.f32 %v1969, %v3022
        %3024 = vmatpush.xpose.msra.mxu0 %v3023
        %v3025 = vand.u32 %v1968, 4294901760
        %v3026 = vsub.f32 %v1968, %v3025
        %3027 = vmatpush.xpose.msra.mxu0 %v3026
        %v3028 = vand.u32 %v1967, 4294901760
        %v3029 = vsub.f32 %v1967, %v3028
        %3030 = vmatpush.xpose.msra.mxu0 %v3029
        %v3031 = vand.u32 %v1966, 4294901760
        %v3032 = vsub.f32 %v1966, %v3031
        %3033 = vmatpush.xpose.msra.mxu0 %v3032
        %v3034 = vand.u32 %v1965, 4294901760
        %v3035 = vsub.f32 %v1965, %v3034
        %3036 = vmatpush.xpose.msra.mxu0 %v3035
        %v3037 = vand.u32 %v1964, 4294901760
        %v3038 = vsub.f32 %v1964, %v3037
        %3039 = vmatpush.xpose.msra.mxu0 %v3038
        %v3040 = vand.u32 %v1963, 4294901760
        %v3041 = vsub.f32 %v1963, %v3040
        %3042 = vmatpush.xpose.msra.mxu0 %v3041
        %v3043 = vand.u32 %v1962, 4294901760
        %v3044 = vsub.f32 %v1962, %v3043
        %3045 = vmatpush.xpose.msra.mxu0 %v3044
        %v3046 = vand.u32 %v1961, 4294901760
        %v3047 = vsub.f32 %v1961, %v3046
        %3048 = vmatpush.xpose.msra.mxu0 %v3047
        %v3049 = vand.u32 %v1960, 4294901760
        %v3050 = vsub.f32 %v1960, %v3049
        %3051 = vmatpush.xpose.msra.mxu0 %v3050
        %v3052 = vand.u32 %v1100, 4294901760
        %v3053 = vsub.f32 %v1100, %v3052
        %3054 = vmatmul.f32.gmra.mxu0 %v3053
        %v3055 = vpop.f32.mrf.mxu0
        %v3056 = vadd.f32 %v2998, %v3055
        %v3057 = vand.u32 %v1101, 4294901760
        %v3058 = vsub.f32 %v1101, %v3057
        %3059 = vmatmul.f32.gmra.mxu0 %v3058
        %v3060 = vpop.f32.mrf.mxu0
        %v3061 = vadd.f32 %v3002, %v3060
        %3062 = vdwg.mxu0
        %v3063 = vand.u32 %v1975, 4294901760
        %3064 = vmatpush.xpose.msra.mxu0 %v3063
        %v3065 = vand.u32 %v1974, 4294901760
        %3066 = vmatpush.xpose.msra.mxu0 %v3065
        %v3067 = vand.u32 %v1973, 4294901760
        %3068 = vmatpush.xpose.msra.mxu0 %v3067
        %v3069 = vand.u32 %v1972, 4294901760
        %3070 = vmatpush.xpose.msra.mxu0 %v3069
        %v3071 = vand.u32 %v1971, 4294901760
        %3072 = vmatpush.xpose.msra.mxu0 %v3071
        %v3073 = vand.u32 %v1970, 4294901760
        %3074 = vmatpush.xpose.msra.mxu0 %v3073
        %v3075 = vand.u32 %v1969, 4294901760
        %3076 = vmatpush.xpose.msra.mxu0 %v3075
        %v3077 = vand.u32 %v1968, 4294901760
        %3078 = vmatpush.xpose.msra.mxu0 %v3077
        %v3079 = vand.u32 %v1967, 4294901760
        %3080 = vmatpush.xpose.msra.mxu0 %v3079
        %v3081 = vand.u32 %v1966, 4294901760
        %3082 = vmatpush.xpose.msra.mxu0 %v3081
        %v3083 = vand.u32 %v1965, 4294901760
        %3084 = vmatpush.xpose.msra.mxu0 %v3083
        %v3085 = vand.u32 %v1964, 4294901760
        %3086 = vmatpush.xpose.msra.mxu0 %v3085
        %v3087 = vand.u32 %v1963, 4294901760
        %3088 = vmatpush.xpose.msra.mxu0 %v3087
        %v3089 = vand.u32 %v1962, 4294901760
        %3090 = vmatpush.xpose.msra.mxu0 %v3089
        %v3091 = vand.u32 %v1961, 4294901760
        %3092 = vmatpush.xpose.msra.mxu0 %v3091
        %v3093 = vand.u32 %v1960, 4294901760
        %3094 = vmatpush.xpose.msra.mxu0 %v3093
        %v3095 = vand.u32 %v1100, 4294901760
        %v3096 = vsub.f32 %v1100, %v3095
        %v3097 = vand.u32 %v3096, 4294901760
        %3098 = vmatmul.f32.gmra.mxu0 %v3097
        %v3099 = vpop.f32.mrf.mxu0
        %v3100 = vadd.f32 %v3056, %v3099
        %v3101 = vand.u32 %v1101, 4294901760
        %v3102 = vsub.f32 %v1101, %v3101
        %v3103 = vand.u32 %v3102, 4294901760
        %3104 = vmatmul.f32.gmra.mxu0 %v3103
        %v3105 = vpop.f32.mrf.mxu0
        %v3106 = vadd.f32 %v3061, %v3105
        %3107 = vdwg.mxu0
        %v3108 = vand.u32 %v1975, 4294901760
        %v3109 = vsub.f32 %v1975, %v3108
        %v3110 = vand.u32 %v3109, 4294901760
        %3111 = vmatpush.xpose.msra.mxu0 %v3110
        %v3112 = vand.u32 %v1974, 4294901760
        %v3113 = vsub.f32 %v1974, %v3112
        %v3114 = vand.u32 %v3113, 4294901760
        %3115 = vmatpush.xpose.msra.mxu0 %v3114
        %v3116 = vand.u32 %v1973, 4294901760
        %v3117 = vsub.f32 %v1973, %v3116
        %v3118 = vand.u32 %v3117, 4294901760
        %3119 = vmatpush.xpose.msra.mxu0 %v3118
        %v3120 = vand.u32 %v1972, 4294901760
        %v3121 = vsub.f32 %v1972, %v3120
        %v3122 = vand.u32 %v3121, 4294901760
        %3123 = vmatpush.xpose.msra.mxu0 %v3122
        %v3124 = vand.u32 %v1971, 4294901760
        %v3125 = vsub.f32 %v1971, %v3124
        %v3126 = vand.u32 %v3125, 4294901760
        %3127 = vmatpush.xpose.msra.mxu0 %v3126
        %v3128 = vand.u32 %v1970, 4294901760
        %v3129 = vsub.f32 %v1970, %v3128
        %v3130 = vand.u32 %v3129, 4294901760
        %3131 = vmatpush.xpose.msra.mxu0 %v3130
        %v3132 = vand.u32 %v1969, 4294901760
        %v3133 = vsub.f32 %v1969, %v3132
        %v3134 = vand.u32 %v3133, 4294901760
        %3135 = vmatpush.xpose.msra.mxu0 %v3134
        %v3136 = vand.u32 %v1968, 4294901760
        %v3137 = vsub.f32 %v1968, %v3136
        %v3138 = vand.u32 %v3137, 4294901760
        %3139 = vmatpush.xpose.msra.mxu0 %v3138
        %v3140 = vand.u32 %v1967, 4294901760
        %v3141 = vsub.f32 %v1967, %v3140
        %v3142 = vand.u32 %v3141, 4294901760
        %3143 = vmatpush.xpose.msra.mxu0 %v3142
        %v3144 = vand.u32 %v1966, 4294901760
        %v3145 = vsub.f32 %v1966, %v3144
        %v3146 = vand.u32 %v3145, 4294901760
        %3147 = vmatpush.xpose.msra.mxu0 %v3146
        %v3148 = vand.u32 %v1965, 4294901760
        %v3149 = vsub.f32 %v1965, %v3148
        %v3150 = vand.u32 %v3149, 4294901760
        %3151 = vmatpush.xpose.msra.mxu0 %v3150
        %v3152 = vand.u32 %v1964, 4294901760
        %v3153 = vsub.f32 %v1964, %v3152
        %v3154 = vand.u32 %v3153, 4294901760
        %3155 = vmatpush.xpose.msra.mxu0 %v3154
        %v3156 = vand.u32 %v1963, 4294901760
        %v3157 = vsub.f32 %v1963, %v3156
        %v3158 = vand.u32 %v3157, 4294901760
        %3159 = vmatpush.xpose.msra.mxu0 %v3158
        %v3160 = vand.u32 %v1962, 4294901760
        %v3161 = vsub.f32 %v1962, %v3160
        %v3162 = vand.u32 %v3161, 4294901760
        %3163 = vmatpush.xpose.msra.mxu0 %v3162
        %v3164 = vand.u32 %v1961, 4294901760
        %v3165 = vsub.f32 %v1961, %v3164
        %v3166 = vand.u32 %v3165, 4294901760
        %3167 = vmatpush.xpose.msra.mxu0 %v3166
        %v3168 = vand.u32 %v1960, 4294901760
        %v3169 = vsub.f32 %v1960, %v3168
        %v3170 = vand.u32 %v3169, 4294901760
        %3171 = vmatpush.xpose.msra.mxu0 %v3170
        %v3172 = vand.u32 %v1100, 4294901760
        %3173 = vmatmul.f32.gmra.mxu0 %v3172
        %v3174 = vpop.f32.mrf.mxu0
        %v3175 = vadd.f32 %v3100, %v3174
        %v3176 = vand.u32 %v1101, 4294901760
        %3177 = vmatmul.f32.gmra.mxu0 %v3176
        %v3178 = vpop.f32.mrf.mxu0
        %v3179 = vadd.f32 %v3106, %v3178
        %3180 = vdwg.mxu0
        %v3181 = vand.u32 %v1975, 4294901760
        %3182 = vmatpush.xpose.msra.mxu0 %v3181
        %v3183 = vand.u32 %v1974, 4294901760
        %3184 = vmatpush.xpose.msra.mxu0 %v3183
        %v3185 = vand.u32 %v1973, 4294901760
        %3186 = vmatpush.xpose.msra.mxu0 %v3185
        %v3187 = vand.u32 %v1972, 4294901760
        %3188 = vmatpush.xpose.msra.mxu0 %v3187
        %v3189 = vand.u32 %v1971, 4294901760
        %3190 = vmatpush.xpose.msra.mxu0 %v3189
        %v3191 = vand.u32 %v1970, 4294901760
        %3192 = vmatpush.xpose.msra.mxu0 %v3191
        %v3193 = vand.u32 %v1969, 4294901760
        %3194 = vmatpush.xpose.msra.mxu0 %v3193
        %v3195 = vand.u32 %v1968, 4294901760
        %3196 = vmatpush.xpose.msra.mxu0 %v3195
        %v3197 = vand.u32 %v1967, 4294901760
        %3198 = vmatpush.xpose.msra.mxu0 %v3197
        %v3199 = vand.u32 %v1966, 4294901760
        %3200 = vmatpush.xpose.msra.mxu0 %v3199
        %v3201 = vand.u32 %v1965, 4294901760
        %3202 = vmatpush.xpose.msra.mxu0 %v3201
        %v3203 = vand.u32 %v1964, 4294901760
        %3204 = vmatpush.xpose.msra.mxu0 %v3203
        %v3205 = vand.u32 %v1963, 4294901760
        %3206 = vmatpush.xpose.msra.mxu0 %v3205
        %v3207 = vand.u32 %v1962, 4294901760
        %3208 = vmatpush.xpose.msra.mxu0 %v3207
        %v3209 = vand.u32 %v1961, 4294901760
        %3210 = vmatpush.xpose.msra.mxu0 %v3209
        %v3211 = vand.u32 %v1960, 4294901760
        %3212 = vmatpush.xpose.msra.mxu0 %v3211
        %v3213 = vand.u32 %v1100, 4294901760
        %3214 = vmatmul.f32.gmra.mxu0 %v3213
        %v3215 = vpop.f32.mrf.mxu0
        %v3216 = vadd.f32 %v3175, %v3215
        %v3217 = vand.u32 %v1101, 4294901760
        %3218 = vmatmul.f32.gmra.mxu0 %v3217
        %v3219 = vpop.f32.mrf.mxu0
        %v3220 = vadd.f32 %v3179, %v3219
        %3221 = vdwg.mxu0
        %v3222 = vmul.f32 %v3216, 0.17677669
        %v3223 = vmul.f32 %v3220, 0.17677669
        %v3224 = vld [vmem:[#allocation8] sm:$0xff]
        %v3225 = vld [vmem:[#allocation8 + $0x8] sm:$0xff]
        %vm3226 = vcmp.gt.f32.partialorder %v3224, 0.0
        %vm3227 = vcmp.gt.f32.partialorder %v3225, 0.0
        %v3228 = vsel %vm3226, %v3222, -1e+30
        %v3229 = vsel %vm3227, %v3223, -1e+30
        %3230 = vmax.xlane.f32.xlu0 %v3228
        %v3231 = vpop.xlane.xlu0 %3230
        %3232 = vmax.xlane.f32.xlu0 %v3229
        %v3233 = vpop.xlane.xlu0 %3232
        %v3234 = vsub.f32 %v3228, %v3231
        %v3235 = vsub.f32 %v3229, %v3233
        %v3236 = vmul.f32 %v3234, 1.442695
        %v3237 = vpow.pop %v3236
        %v3238 = vmul.f32 %v3235, 1.442695
        %v3239 = vpow.pop %v3238
        %3240 = vadd.xlane.f32.xlu0 %v3237
        %v3241 = vpop.xlane.xlu0 %3240
        %3242 = vadd.xlane.f32.xlu0 %v3239
        %v3243 = vpop.xlane.xlu0 %3242
        %v3244 = vrcp.pop %v3241
        %v3245 = vmul.f32 %v3241, %v3244
        %v3246 = vsub.f32 1.0, %v3245
        %v3247 = vmul.f32 %v3244, %v3246
        %v3248 = vadd.f32 %v3244, %v3247
        %vm3249 = vweird.f32 %v3241
        %vm3250 = vweird.f32 %v3244
        %vm3251 = vmor %vm3249, %vm3250
        %v3252 = vsel %vm3251, %v3244, %v3248
        %v3253 = vand.u32 2147483647, %v3241
        %vm3254 = vcmp.eq.f32.partialorder %v3253, 8.507059e+37
        %v3255 = vand.u32 %v3241, 2147483648
        %v3256 = vor.u32 1.1754944e-38, %v3255
        %v3257 = vsel %vm3254, %v3256, %v3252
        %v3258 = vmul.f32 %v3237, %v3257
        %v3259 = vrcp.pop %v3243
        %v3260 = vmul.f32 %v3243, %v3259
        %v3261 = vsub.f32 1.0, %v3260
        %v3262 = vmul.f32 %v3259, %v3261
        %v3263 = vadd.f32 %v3259, %v3262
        %vm3264 = vweird.f32 %v3243
        %vm3265 = vweird.f32 %v3259
        %vm3266 = vmor %vm3264, %vm3265
        %v3267 = vsel %vm3266, %v3259, %v3263
        %v3268 = vand.u32 2147483647, %v3243
        %vm3269 = vcmp.eq.f32.partialorder %v3268, 8.507059e+37
        %v3270 = vand.u32 %v3243, 2147483648
        %v3271 = vor.u32 1.1754944e-38, %v3270
        %v3272 = vsel %vm3269, %v3271, %v3267
        %v3273 = vmul.f32 %v3239, %v3272
        %v3274 = vand.u32 %v2849, 4294901760
        %3275 = vmatpush.msra.mxu0 %v3274
        %v3276 = vand.u32 %v2848, 4294901760
        %3277 = vmatpush.msra.mxu0 %v3276
        %v3278 = vand.u32 %v2847, 4294901760
        %3279 = vmatpush.msra.mxu0 %v3278
        %v3280 = vand.u32 %v2846, 4294901760
        %3281 = vmatpush.msra.mxu0 %v3280
        %v3282 = vand.u32 %v2845, 4294901760
        %3283 = vmatpush.msra.mxu0 %v3282
        %v3284 = vand.u32 %v2844, 4294901760
        %3285 = vmatpush.msra.mxu0 %v3284
        %v3286 = vand.u32 %v2843, 4294901760
        %3287 = vmatpush.msra.mxu0 %v3286
        %v3288 = vand.u32 %v2842, 4294901760
        %3289 = vmatpush.msra.mxu0 %v3288
        %v3290 = vand.u32 %v2841, 4294901760
        %3291 = vmatpush.msra.mxu0 %v3290
        %v3292 = vand.u32 %v2840, 4294901760
        %3293 = vmatpush.msra.mxu0 %v3292
        %v3294 = vand.u32 %v2839, 4294901760
        %3295 = vmatpush.msra.mxu0 %v3294
        %v3296 = vand.u32 %v2838, 4294901760
        %3297 = vmatpush.msra.mxu0 %v3296
        %v3298 = vand.u32 %v2837, 4294901760
        %3299 = vmatpush.msra.mxu0 %v3298
        %v3300 = vand.u32 %v2836, 4294901760
        %3301 = vmatpush.msra.mxu0 %v3300
        %v3302 = vand.u32 %v2835, 4294901760
        %3303 = vmatpush.msra.mxu0 %v3302
        %v3304 = vand.u32 %v2834, 4294901760
        %3305 = vmatpush.msra.mxu0 %v3304
        %v3306 = vand.u32 %v3258, 4294901760
        %v3307 = vsub.f32 %v3258, %v3306
        %v3308 = vand.u32 %v3307, 4294901760
        %v3309 = vsub.f32 %v3307, %v3308
        %v3310 = vand.u32 %v3309, 4294901760
        %3311 = vmatmul.f32.gmra.mxu0 %v3310
        %v3312 = vpop.f32.mrf.mxu0
        %v3313 = vadd.f32 0.0, %v3312
        %v3314 = vand.u32 %v3273, 4294901760
        %v3315 = vsub.f32 %v3273, %v3314
        %v3316 = vand.u32 %v3315, 4294901760
        %v3317 = vsub.f32 %v3315, %v3316
        %v3318 = vand.u32 %v3317, 4294901760
        %3319 = vmatmul.f32.gmra.mxu0 %v3318
        %v3320 = vpop.f32.mrf.mxu0
        %v3321 = vadd.f32 0.0, %v3320
        %3322 = vdwg.mxu0
        %v3323 = vand.u32 %v2849, 4294901760
        %v3324 = vsub.f32 %v2849, %v3323
        %v3325 = vand.u32 %v3324, 4294901760
        %v3326 = vsub.f32 %v3324, %v3325
        %v3327 = vand.u32 %v3326, 4294901760
        %3328 = vmatpush.msra.mxu0 %v3327
        %v3329 = vand.u32 %v2848, 4294901760
        %v3330 = vsub.f32 %v2848, %v3329
        %v3331 = vand.u32 %v3330, 4294901760
        %v3332 = vsub.f32 %v3330, %v3331
        %v3333 = vand.u32 %v3332, 4294901760
        %3334 = vmatpush.msra.mxu0 %v3333
        %v3335 = vand.u32 %v2847, 4294901760
        %v3336 = vsub.f32 %v2847, %v3335
        %v3337 = vand.u32 %v3336, 4294901760
        %v3338 = vsub.f32 %v3336, %v3337
        %v3339 = vand.u32 %v3338, 4294901760
        %3340 = vmatpush.msra.mxu0 %v3339
        %v3341 = vand.u32 %v2846, 4294901760
        %v3342 = vsub.f32 %v2846, %v3341
        %v3343 = vand.u32 %v3342, 4294901760
        %v3344 = vsub.f32 %v3342, %v3343
        %v3345 = vand.u32 %v3344, 4294901760
        %3346 = vmatpush.msra.mxu0 %v3345
        %v3347 = vand.u32 %v2845, 4294901760
        %v3348 = vsub.f32 %v2845, %v3347
        %v3349 = vand.u32 %v3348, 4294901760
        %v3350 = vsub.f32 %v3348, %v3349
        %v3351 = vand.u32 %v3350, 4294901760
        %3352 = vmatpush.msra.mxu0 %v3351
        %v3353 = vand.u32 %v2844, 4294901760
        %v3354 = vsub.f32 %v2844, %v3353
        %v3355 = vand.u32 %v3354, 4294901760
        %v3356 = vsub.f32 %v3354, %v3355
        %v3357 = vand.u32 %v3356, 4294901760
        %3358 = vmatpush.msra.mxu0 %v3357
        %v3359 = vand.u32 %v2843, 4294901760
        %v3360 = vsub.f32 %v2843, %v3359
        %v3361 = vand.u32 %v3360, 4294901760
        %v3362 = vsub.f32 %v3360, %v3361
        %v3363 = vand.u32 %v3362, 4294901760
        %3364 = vmatpush.msra.mxu0 %v3363
        %v3365 = vand.u32 %v2842, 4294901760
        %v3366 = vsub.f32 %v2842, %v3365
        %v3367 = vand.u32 %v3366, 4294901760
        %v3368 = vsub.f32 %v3366, %v3367
        %v3369 = vand.u32 %v3368, 4294901760
        %3370 = vmatpush.msra.mxu0 %v3369
        %v3371 = vand.u32 %v2841, 4294901760
        %v3372 = vsub.f32 %v2841, %v3371
        %v3373 = vand.u32 %v3372, 4294901760
        %v3374 = vsub.f32 %v3372, %v3373
        %v3375 = vand.u32 %v3374, 4294901760
        %3376 = vmatpush.msra.mxu0 %v3375
        %v3377 = vand.u32 %v2840, 4294901760
        %v3378 = vsub.f32 %v2840, %v3377
        %v3379 = vand.u32 %v3378, 4294901760
        %v3380 = vsub.f32 %v3378, %v3379
        %v3381 = vand.u32 %v3380, 4294901760
        %3382 = vmatpush.msra.mxu0 %v3381
        %v3383 = vand.u32 %v2839, 4294901760
        %v3384 = vsub.f32 %v2839, %v3383
        %v3385 = vand.u32 %v3384, 4294901760
        %v3386 = vsub.f32 %v3384, %v3385
        %v3387 = vand.u32 %v3386, 4294901760
        %3388 = vmatpush.msra.mxu0 %v3387
        %v3389 = vand.u32 %v2838, 4294901760
        %v3390 = vsub.f32 %v2838, %v3389
        %v3391 = vand.u32 %v3390, 4294901760
        %v3392 = vsub.f32 %v3390, %v3391
        %v3393 = vand.u32 %v3392, 4294901760
        %3394 = vmatpush.msra.mxu0 %v3393
        %v3395 = vand.u32 %v2837, 4294901760
        %v3396 = vsub.f32 %v2837, %v3395
        %v3397 = vand.u32 %v3396, 4294901760
        %v3398 = vsub.f32 %v3396, %v3397
        %v3399 = vand.u32 %v3398, 4294901760
        %3400 = vmatpush.msra.mxu0 %v3399
        %v3401 = vand.u32 %v2836, 4294901760
        %v3402 = vsub.f32 %v2836, %v3401
        %v3403 = vand.u32 %v3402, 4294901760
        %v3404 = vsub.f32 %v3402, %v3403
        %v3405 = vand.u32 %v3404, 4294901760
        %3406 = vmatpush.msra.mxu0 %v3405
        %v3407 = vand.u32 %v2835, 4294901760
        %v3408 = vsub.f32 %v2835, %v3407
        %v3409 = vand.u32 %v3408, 4294901760
        %v3410 = vsub.f32 %v3408, %v3409
        %v3411 = vand.u32 %v3410, 4294901760
        %3412 = vmatpush.msra.mxu0 %v3411
        %v3413 = vand.u32 %v2834, 4294901760
        %v3414 = vsub.f32 %v2834, %v3413
        %v3415 = vand.u32 %v3414, 4294901760
        %v3416 = vsub.f32 %v3414, %v3415
        %v3417 = vand.u32 %v3416, 4294901760
        %3418 = vmatpush.msra.mxu0 %v3417
        %v3419 = vand.u32 %v3258, 4294901760
        %3420 = vmatmul.f32.gmra.mxu0 %v3419
        %v3421 = vpop.f32.mrf.mxu0
        %v3422 = vadd.f32 %v3313, %v3421
        %v3423 = vand.u32 %v3273, 4294901760
        %3424 = vmatmul.f32.gmra.mxu0 %v3423
        %v3425 = vpop.f32.mrf.mxu0
        %v3426 = vadd.f32 %v3321, %v3425
        %3427 = vdwg.mxu0
        %v3428 = vand.u32 %v2849, 4294901760
        %v3429 = vsub.f32 %v2849, %v3428
        %3430 = vmatpush.msra.mxu0 %v3429
        %v3431 = vand.u32 %v2848, 4294901760
        %v3432 = vsub.f32 %v2848, %v3431
        %3433 = vmatpush.msra.mxu0 %v3432
        %v3434 = vand.u32 %v2847, 4294901760
        %v3435 = vsub.f32 %v2847, %v3434
        %3436 = vmatpush.msra.mxu0 %v3435
        %v3437 = vand.u32 %v2846, 4294901760
        %v3438 = vsub.f32 %v2846, %v3437
        %3439 = vmatpush.msra.mxu0 %v3438
        %v3440 = vand.u32 %v2845, 4294901760
        %v3441 = vsub.f32 %v2845, %v3440
        %3442 = vmatpush.msra.mxu0 %v3441
        %v3443 = vand.u32 %v2844, 4294901760
        %v3444 = vsub.f32 %v2844, %v3443
        %3445 = vmatpush.msra.mxu0 %v3444
        %v3446 = vand.u32 %v2843, 4294901760
        %v3447 = vsub.f32 %v2843, %v3446
        %3448 = vmatpush.msra.mxu0 %v3447
        %v3449 = vand.u32 %v2842, 4294901760
        %v3450 = vsub.f32 %v2842, %v3449
        %3451 = vmatpush.msra.mxu0 %v3450
        %v3452 = vand.u32 %v2841, 4294901760
        %v3453 = vsub.f32 %v2841, %v3452
        %3454 = vmatpush.msra.mxu0 %v3453
        %v3455 = vand.u32 %v2840, 4294901760
        %v3456 = vsub.f32 %v2840, %v3455
        %3457 = vmatpush.msra.mxu0 %v3456
        %v3458 = vand.u32 %v2839, 4294901760
        %v3459 = vsub.f32 %v2839, %v3458
        %3460 = vmatpush.msra.mxu0 %v3459
        %v3461 = vand.u32 %v2838, 4294901760
        %v3462 = vsub.f32 %v2838, %v3461
        %3463 = vmatpush.msra.mxu0 %v3462
        %v3464 = vand.u32 %v2837, 4294901760
        %v3465 = vsub.f32 %v2837, %v3464
        %3466 = vmatpush.msra.mxu0 %v3465
        %v3467 = vand.u32 %v2836, 4294901760
        %v3468 = vsub.f32 %v2836, %v3467
        %3469 = vmatpush.msra.mxu0 %v3468
        %v3470 = vand.u32 %v2835, 4294901760
        %v3471 = vsub.f32 %v2835, %v3470
        %3472 = vmatpush.msra.mxu0 %v3471
        %v3473 = vand.u32 %v2834, 4294901760
        %v3474 = vsub.f32 %v2834, %v3473
        %3475 = vmatpush.msra.mxu0 %v3474
        %v3476 = vand.u32 %v3258, 4294901760
        %v3477 = vsub.f32 %v3258, %v3476
        %3478 = vmatmul.f32.gmra.mxu0 %v3477
        %v3479 = vpop.f32.mrf.mxu0
        %v3480 = vadd.f32 %v3422, %v3479
        %v3481 = vand.u32 %v3273, 4294901760
        %v3482 = vsub.f32 %v3273, %v3481
        %3483 = vmatmul.f32.gmra.mxu0 %v3482
        %v3484 = vpop.f32.mrf.mxu0
        %v3485 = vadd.f32 %v3426, %v3484
        %3486 = vdwg.mxu0
        %v3487 = vand.u32 %v2849, 4294901760
        %3488 = vmatpush.msra.mxu0 %v3487
        %v3489 = vand.u32 %v2848, 4294901760
        %3490 = vmatpush.msra.mxu0 %v3489
        %v3491 = vand.u32 %v2847, 4294901760
        %3492 = vmatpush.msra.mxu0 %v3491
        %v3493 = vand.u32 %v2846, 4294901760
        %3494 = vmatpush.msra.mxu0 %v3493
        %v3495 = vand.u32 %v2845, 4294901760
        %3496 = vmatpush.msra.mxu0 %v3495
        %v3497 = vand.u32 %v2844, 4294901760
        %3498 = vmatpush.msra.mxu0 %v3497
        %v3499 = vand.u32 %v2843, 4294901760
        %3500 = vmatpush.msra.mxu0 %v3499
        %v3501 = vand.u32 %v2842, 4294901760
        %3502 = vmatpush.msra.mxu0 %v3501
        %v3503 = vand.u32 %v2841, 4294901760
        %3504 = vmatpush.msra.mxu0 %v3503
        %v3505 = vand.u32 %v2840, 4294901760
        %3506 = vmatpush.msra.mxu0 %v3505
        %v3507 = vand.u32 %v2839, 4294901760
        %3508 = vmatpush.msra.mxu0 %v3507
        %v3509 = vand.u32 %v2838, 4294901760
        %3510 = vmatpush.msra.mxu0 %v3509
        %v3511 = vand.u32 %v2837, 4294901760
        %3512 = vmatpush.msra.mxu0 %v3511
        %v3513 = vand.u32 %v2836, 4294901760
        %3514 = vmatpush.msra.mxu0 %v3513
        %v3515 = vand.u32 %v2835, 4294901760
        %3516 = vmatpush.msra.mxu0 %v3515
        %v3517 = vand.u32 %v2834, 4294901760
        %3518 = vmatpush.msra.mxu0 %v3517
        %v3519 = vand.u32 %v3258, 4294901760
        %v3520 = vsub.f32 %v3258, %v3519
        %v3521 = vand.u32 %v3520, 4294901760
        %3522 = vmatmul.f32.gmra.mxu0 %v3521
        %v3523 = vpop.f32.mrf.mxu0
        %v3524 = vadd.f32 %v3480, %v3523
        %v3525 = vand.u32 %v3273, 4294901760
        %v3526 = vsub.f32 %v3273, %v3525
        %v3527 = vand.u32 %v3526, 4294901760
        %3528 = vmatmul.f32.gmra.mxu0 %v3527
        %v3529 = vpop.f32.mrf.mxu0
        %v3530 = vadd.f32 %v3485, %v3529
        %3531 = vdwg.mxu0
        %v3532 = vand.u32 %v2849, 4294901760
        %v3533 = vsub.f32 %v2849, %v3532
        %v3534 = vand.u32 %v3533, 4294901760
        %3535 = vmatpush.msra.mxu0 %v3534
        %v3536 = vand.u32 %v2848, 4294901760
        %v3537 = vsub.f32 %v2848, %v3536
        %v3538 = vand.u32 %v3537, 4294901760
        %3539 = vmatpush.msra.mxu0 %v3538
        %v3540 = vand.u32 %v2847, 4294901760
        %v3541 = vsub.f32 %v2847, %v3540
        %v3542 = vand.u32 %v3541, 4294901760
        %3543 = vmatpush.msra.mxu0 %v3542
        %v3544 = vand.u32 %v2846, 4294901760
        %v3545 = vsub.f32 %v2846, %v3544
        %v3546 = vand.u32 %v3545, 4294901760
        %3547 = vmatpush.msra.mxu0 %v3546
        %v3548 = vand.u32 %v2845, 4294901760
        %v3549 = vsub.f32 %v2845, %v3548
        %v3550 = vand.u32 %v3549, 4294901760
        %3551 = vmatpush.msra.mxu0 %v3550
        %v3552 = vand.u32 %v2844, 4294901760
        %v3553 = vsub.f32 %v2844, %v3552
        %v3554 = vand.u32 %v3553, 4294901760
        %3555 = vmatpush.msra.mxu0 %v3554
        %v3556 = vand.u32 %v2843, 4294901760
        %v3557 = vsub.f32 %v2843, %v3556
        %v3558 = vand.u32 %v3557, 4294901760
        %3559 = vmatpush.msra.mxu0 %v3558
        %v3560 = vand.u32 %v2842, 4294901760
        %v3561 = vsub.f32 %v2842, %v3560
        %v3562 = vand.u32 %v3561, 4294901760
        %3563 = vmatpush.msra.mxu0 %v3562
        %v3564 = vand.u32 %v2841, 4294901760
        %v3565 = vsub.f32 %v2841, %v3564
        %v3566 = vand.u32 %v3565, 4294901760
        %3567 = vmatpush.msra.mxu0 %v3566
        %v3568 = vand.u32 %v2840, 4294901760
        %v3569 = vsub.f32 %v2840, %v3568
        %v3570 = vand.u32 %v3569, 4294901760
        %3571 = vmatpush.msra.mxu0 %v3570
        %v3572 = vand.u32 %v2839, 4294901760
        %v3573 = vsub.f32 %v2839, %v3572
        %v3574 = vand.u32 %v3573, 4294901760
        %3575 = vmatpush.msra.mxu0 %v3574
        %v3576 = vand.u32 %v2838, 4294901760
        %v3577 = vsub.f32 %v2838, %v3576
        %v3578 = vand.u32 %v3577, 4294901760
        %3579 = vmatpush.msra.mxu0 %v3578
        %v3580 = vand.u32 %v2837, 4294901760
        %v3581 = vsub.f32 %v2837, %v3580
        %v3582 = vand.u32 %v3581, 4294901760
        %3583 = vmatpush.msra.mxu0 %v3582
        %v3584 = vand.u32 %v2836, 4294901760
        %v3585 = vsub.f32 %v2836, %v3584
        %v3586 = vand.u32 %v3585, 4294901760
        %3587 = vmatpush.msra.mxu0 %v3586
        %v3588 = vand.u32 %v2835, 4294901760
        %v3589 = vsub.f32 %v2835, %v3588
        %v3590 = vand.u32 %v3589, 4294901760
        %3591 = vmatpush.msra.mxu0 %v3590
        %v3592 = vand.u32 %v2834, 4294901760
        %v3593 = vsub.f32 %v2834, %v3592
        %v3594 = vand.u32 %v3593, 4294901760
        %3595 = vmatpush.msra.mxu0 %v3594
        %v3596 = vand.u32 %v3258, 4294901760
        %3597 = vmatmul.f32.gmra.mxu0 %v3596
        %v3598 = vpop.f32.mrf.mxu0
        %v3599 = vadd.f32 %v3524, %v3598
        %v3600 = vand.u32 %v3273, 4294901760
        %3601 = vmatmul.f32.gmra.mxu0 %v3600
        %v3602 = vpop.f32.mrf.mxu0
        %v3603 = vadd.f32 %v3530, %v3602
        %3604 = vdwg.mxu0
        %v3605 = vand.u32 %v2849, 4294901760
        %3606 = vmatpush.msra.mxu0 %v3605
        %v3607 = vand.u32 %v2848, 4294901760
        %3608 = vmatpush.msra.mxu0 %v3607
        %v3609 = vand.u32 %v2847, 4294901760
        %3610 = vmatpush.msra.mxu0 %v3609
        %v3611 = vand.u32 %v2846, 4294901760
        %3612 = vmatpush.msra.mxu0 %v3611
        %v3613 = vand.u32 %v2845, 4294901760
        %3614 = vmatpush.msra.mxu0 %v3613
        %v3615 = vand.u32 %v2844, 4294901760
        %3616 = vmatpush.msra.mxu0 %v3615
        %v3617 = vand.u32 %v2843, 4294901760
        %3618 = vmatpush.msra.mxu0 %v3617
        %v3619 = vand.u32 %v2842, 4294901760
        %3620 = vmatpush.msra.mxu0 %v3619
        %v3621 = vand.u32 %v2841, 4294901760
        %3622 = vmatpush.msra.mxu0 %v3621
        %v3623 = vand.u32 %v2840, 4294901760
        %3624 = vmatpush.msra.mxu0 %v3623
        %v3625 = vand.u32 %v2839, 4294901760
        %3626 = vmatpush.msra.mxu0 %v3625
        %v3627 = vand.u32 %v2838, 4294901760
        %3628 = vmatpush.msra.mxu0 %v3627
        %v3629 = vand.u32 %v2837, 4294901760
        %3630 = vmatpush.msra.mxu0 %v3629
        %v3631 = vand.u32 %v2836, 4294901760
        %3632 = vmatpush.msra.mxu0 %v3631
        %v3633 = vand.u32 %v2835, 4294901760
        %3634 = vmatpush.msra.mxu0 %v3633
        %v3635 = vand.u32 %v2834, 4294901760
        %3636 = vmatpush.msra.mxu0 %v3635
        %v3637 = vand.u32 %v3258, 4294901760
        %3638 = vmatmul.f32.gmra.mxu0 %v3637
        %v3639 = vpop.f32.mrf.mxu0
        %v3640 = vadd.f32 %v3599, %v3639
        %v3641 = vand.u32 %v3273, 4294901760
        %3642 = vmatmul.f32.gmra.mxu0 %v3641
        %v3643 = vpop.f32.mrf.mxu0
        %v3644 = vadd.f32 %v3603, %v3643
        %3645 = vdwg.mxu0
        %v3646 = vld [vmem:[%s665] sm:$0x1]
        %v3648 = vperm.slane %v3646, 0
        %v3650 = vmul.f32 %v670, %v3648
        %v3651 = vmul.f32 %v671, %v3648
        %3652 = vadd.xlane.f32.xlu0 %v3650
        %v3653 = vpop.xlane.xlu0 %3652
        %3654 = vadd.xlane.f32.xlu0 %v3651
        %v3655 = vpop.xlane.xlu0 %3654
        %v3656 = vld [vmem:[%s668] sm:$0x1]
        %v3658 = vperm.slane %v3656, 0
        %v3660 = vadd.f32 %v3653, %v3658
        %v3661 = vadd.f32 %v3655, %v3658
        %vm3662 = vcmp.ge.f32.partialorder %v3660, 0.0
        %vm3663 = vcmp.ge.f32.partialorder %v3661, 0.0
        %v3664 = vmul.f32 %v3660, 0.01
        %v3665 = vmul.f32 %v3661, 0.01
        %v3666 = vsel %vm3662, %v3660, %v3664
        %v3667 = vsel %vm3663, %v3661, %v3665
        %p3668 = scmp.eq.s32.totalorder %s32, 0
        // Predicated region
        $region97: #{tpu_custom_call.1} parent=67 // pred_check
          %p3669 = pneg %p3668
        $region98: #{tpu_custom_call.1} parent=67 // pred_check_branch
          %3671 = sbr.rel (%p3669) target = $region100
        $region99: #{tpu_custom_call.1} parent=67 // pred_region
          %3672 = vst [vmem:[#allocation13] sm:$0xff] 0.0
          %3673 = vst [vmem:[#allocation13 + $0x8] sm:$0xff] 0.0
        $region100: #{tpu_custom_call.1} parent=67 // pred_fallthru
          _
        %v3674 = vld [vmem:[#allocation13] sm:$0xff]
        %v3675 = vld [vmem:[#allocation13 + $0x8] sm:$0xff]
        %3677 = vset.pattern.permute.xlu0 0
        %3678 = vperm.xlu0 %3677, %v3666
        %v3679 = vpop.permute.xlu0 %3678
        %3682 = vset.pattern.permute.xlu0 0
        %3683 = vperm.xlu0 %3682, %v3667
        %v3684 = vpop.permute.xlu0 %3683
        %v3686 = vmul.f32 %v3640, %v3679
        %v3687 = vmul.f32 %v3644, %v3684
        %v3688 = vadd.f32 %v3674, %v3686
        %v3689 = vadd.f32 %v3675, %v3687
        %3690 = vst [vmem:[#allocation13] sm:$0xff] %v3688
        %3691 = vst [vmem:[#allocation13 + $0x8] sm:$0xff] %v3689
        // Predicated region
        $region101: #{tpu_custom_call.1} parent=67 // pred_check
          %p3692 = pneg %p359
        $region102: #{tpu_custom_call.1} parent=67 // pred_check_branch
          %3694 = sbr.rel (%p3692) target = $region104
        $region103: #{tpu_custom_call.1} parent=67 // pred_region
          %s3695 = smul.u32 2, %s31
          %3697 = vsyncadd [#allocation4], 0
          %s3698 = smul.addr %s3695, 8
          %s3699 = scalar_lea.hbm %s12, %s3698
          %s3700 = sshll.u32 [#allocation13], 4
          %s3701 = int_to_ptr.vmem [resolvable:$true] %s3700
          %s3702 = sshll.u32 %s3699, 4
          %s3703 = int_to_ptr.hbm [resolvable:$true] %s3702
          %3708 = dma.vmem_to_hbm [thread:$0]  %s3701, 256, %s3703, [#allocation4], 128, 128, 8
        $region104: #{tpu_custom_call.1} parent=67 // pred_fallthru
          _
        // Predicated region
        $region105: #{tpu_custom_call.1} parent=67 // pred_check
          %p3709 = pneg %p359
        $region106: #{tpu_custom_call.1} parent=67 // pred_check_branch
          %3711 = sbr.rel (%p3709) target = $region108
        $region107: #{tpu_custom_call.1} parent=67 // pred_region
          %3713 = dma.done [#allocation4], 256
        $region108: #{tpu_custom_call.1} parent=67 // pred_fallthru
          _
      $region68: #{tpu_custom_call.1} parent=5 // pred_fallthru
        _
      %p3714 = scmp.le.s32.totalorder 2, %s22
      // Predicated region
      $region109: #{tpu_custom_call.1} parent=5 // pred_check
        %p3715 = pneg %p3714
      $region110: #{tpu_custom_call.1} parent=5 // pred_check_branch
        %3717 = sbr.rel (%p3715) target = $region112
      $region111: #{tpu_custom_call.1} parent=5 // pred_region
        %s3718 = ssub.s32 %s22, 2
      $region112: #{tpu_custom_call.1} parent=5 // pred_fallthru
        _
    $region6: #{tpu_custom_call.1} parent=1 // loop_footer
      %s26 = sadd.s32 1, %s22
    $region7: #{tpu_custom_call.1} parent=1 // loop_footer_branch
      %21 = sbr.rel target = $region3
    $region8: #{tpu_custom_call.1} parent=1 // loop_exit
      _
    %3719 = vsyncpa [#allocation3], 1
    %s3720 = scalar_lea.sflag [#allocation3], 1
    %3721 = vsyncpa %s3720, 1
    %3722 = vsyncpa [#allocation6], 1
    %3723 = vsyncpa [#allocation9], 1
    %3724 = vsyncpa [#allocation4], 1
    %s3725 = scalar_lea.sflag [#allocation4], 1
    %3726 = vsyncpa %s3725, 1

</llo_original>
